<compile_context>
chip_gen: v6e
topology: v6e:2x2x1
jax: 0.10.0
libtpu: 0.0.40
codegen_flags: <defaults>
</compile_context>

<pallas_src>
import functools

import jax
import jax.numpy as jnp
from jax import lax
from jax.experimental import pallas as pl
from jax.experimental.pallas import tpu as pltpu

EMBEDDING_DIM = 384
UNITS = 128
VOCAB_SIZE = 100      # synthetic stand-in for tokenizer.vocab_size
MAX_T_BLOCK = 64      # timesteps handled per grid step (bounds VMEM independent of T)


# ----------------------------- Pallas kernel --------------------------------
def _gru_bidir_kernel(gi_f_ref, gi_b_ref, whh_f_ref, whh_b_ref, bhn_ref,
                      out_f_ref, out_b_ref, h_f_ref, h_b_ref, *, unroll):
    """One sequence tile of the fused forward/backward GRU recurrence.

    gi_*_ref : [t_blk, B, 3H] f32  precomputed input-gate activations (biases folded)
    whh_*_ref: [H, 3H]        bf16 recurrent weights
    bhn_ref  : [1, 2H]        f32  recurrent bias of the n gate (fwd | bwd)
    out_*_ref: [t_blk, B, H]  f32  per-direction hidden states
    h_*_ref  : [B, H]         f32  hidden state carried across grid steps (scratch)
    """
    t_blk, B, _ = gi_f_ref.shape
    H = out_f_ref.shape[2]

    @pl.when(pl.program_id(0) == 0)
    def _init():
        h_f_ref[...] = jnp.zeros_like(h_f_ref)
        h_b_ref[...] = jnp.zeros_like(h_b_ref)

    # n-gate recurrent biases: broadcast hoisted once per grid step (1 vreg each).
    bhn_f = jnp.broadcast_to(bhn_ref[0:1, 0:H], (B, H))
    bhn_b = jnp.broadcast_to(bhn_ref[0:1, H:2 * H], (B, H))

    def cell(gi_t, h_prev, whh_ref, bhn):
        # gi_t already folds b_ih (+ b_hh for r/z).  Read W_hh from the VMEM ref
        # each step (vld is cheap & pipelined; pinning 2x24 vregs would spill gates).
        gh = jnp.dot(h_prev.astype(jnp.bfloat16), whh_ref[...],
                     preferred_element_type=jnp.float32)            # [B, 3H] f32
        r = jax.nn.sigmoid(gi_t[:, 0:H] + gh[:, 0:H])
        z = jax.nn.sigmoid(gi_t[:, H:2 * H] + gh[:, H:2 * H])
        n = jnp.tanh(gi_t[:, 2 * H:3 * H] + r * (gh[:, 2 * H:3 * H] + bhn))
        return (1.0 - z) * n + z * h_prev

    def step(i, carry):
        h_f, h_b = carry
        tb = t_blk - 1 - i
        h_f = cell(gi_f_ref[i], h_f, whh_f_ref, bhn_f)
        h_b = cell(gi_b_ref[tb], h_b, whh_b_ref, bhn_b)
        out_f_ref[i] = h_f                                           # [8,128] dense store
        out_b_ref[tb] = h_b
        return (h_f, h_b)

    h_f, h_b = lax.fori_loop(0, t_blk, step, (h_f_ref[...], h_b_ref[...]),
                             unroll=unroll)
    h_f_ref[...] = h_f
    h_b_ref[...] = h_b


# ------------------------------ host wrappers --------------------------------
def gru_bidir_pallas(gi_f, gi_b, w_hh_f, w_hh_b, b_hn, t_blk):
    """gi_*: [T_pad, B_pad, 3H] f32 -> (fwd, bwd) hidden states [T_pad, B_pad, H] f32."""
    T_pad, B, H3 = gi_f.shape
    H = H3 // 3
    nb = T_pad // t_blk
    unroll = True if t_blk <= 8 else 4   # bounded unroll; full only for tiny tiles

    kernel = functools.partial(_gru_bidir_kernel, unroll=unroll)
    return pl.pallas_call(
        kernel,
        out_shape=(jax.ShapeDtypeStruct((T_pad, B, H), jnp.float32),
                   jax.ShapeDtypeStruct((T_pad, B, H), jnp.float32)),
        grid_spec=pltpu.PrefetchScalarGridSpec(
            num_scalar_prefetch=0,
            grid=(nb,),
            in_specs=[
                pl.BlockSpec((t_blk, B, 3 * H), lambda t: (t, 0, 0)),           # gi_f
                pl.BlockSpec((t_blk, B, 3 * H), lambda t: (nb - 1 - t, 0, 0)),  # gi_b (reversed)
                pl.BlockSpec((H, 3 * H), lambda t: (0, 0)),                     # W_hh_f (resident)
                pl.BlockSpec((H, 3 * H), lambda t: (0, 0)),                     # W_hh_b (resident)
                pl.BlockSpec((1, 2 * H), lambda t: (0, 0)),                     # b_hn   (resident)
            ],
            out_specs=[
                pl.BlockSpec((t_blk, B, H), lambda t: (t, 0, 0)),               # fwd hidden
                pl.BlockSpec((t_blk, B, H), lambda t: (nb - 1 - t, 0, 0)),      # bwd hidden
            ],
            scratch_shapes=[
                pltpu.VMEM((B, H), jnp.float32),   # h_f carried across grid steps
                pltpu.VMEM((B, H), jnp.float32),   # h_b carried across grid steps
            ],
        ),
        compiler_params=pltpu.CompilerParams(
            dimension_semantics=("arbitrary",),          # loop-carried sequence axis
            vmem_limit_bytes=32 * 1024 * 1024,
        ),
    )(gi_f, gi_b, w_hh_f, w_hh_b, b_hn)


def prepare_encoder(params):
    """Fold embedding @ W_ih (+ biases) into per-direction [V, 3H] gi lookup tables."""
    H = UNITS
    emb_bf = params["embedding"].astype(jnp.bfloat16)            # cast once

    def gi_table(w_ih, b_ih, b_hh):
        # fold b_hh for the r/z gates into the table; keep b_hh_n out (must stay
        # inside r * (gh_n + b_hh_n)).
        bias = b_ih + jnp.concatenate([b_hh[:2 * H], jnp.zeros((H,), jnp.float32)])
        return jnp.dot(emb_bf, w_ih.T.astype(jnp.bfloat16),
                       preferred_element_type=jnp.float32) + bias[None, :]   # [V, 3H] f32

    return {
        "gi_table_f": gi_table(params["w_ih_f"], params["b_ih_f"], params["b_hh_f"]),
        "gi_table_b": gi_table(params["w_ih_b"], params["b_ih_b"], params["b_hh_b"]),
        "w_hh_f": params["w_hh_f"].T.astype(jnp.bfloat16),        # [H, 3H]
        "w_hh_b": params["w_hh_b"].T.astype(jnp.bfloat16),        # [H, 3H]
        "b_hn": jnp.concatenate([params["b_hh_f"][2 * H:],
                                 params["b_hh_b"][2 * H:]])[None, :],         # [1, 2H]
    }


def encoder_forward(input_ids, enc):
    """input_ids: [B, T] int32 -> [B, T, UNITS] f32, matching the PyTorch module."""
    B, T = input_ids.shape
    H = UNITS
    B_pad = ((B + 7) // 8) * 8                           # sublane multiple
    ids = input_ids
    if B_pad != B:
        ids = jnp.pad(ids, ((0, B_pad - B), (0, 0)))     # padded rows gather token 0 (discarded)
    ids_tm = jnp.transpose(ids, (1, 0))                  # [T, B_pad] time-major (cheap, int32)

    # Embedding + input projection = pure table gather (no in-kernel matmul, no [T,B,E] x).
    gi_f = jnp.take(enc["gi_table_f"], ids_tm, axis=0)   # [T, B_pad, 3H] f32
    gi_b = jnp.take(enc["gi_table_b"], ids_tm, axis=0)

    # Sequence tiling: nb grid steps of t_blk timesteps (VMEM bounded for any T).
    nb = max(1, -(-T // MAX_T_BLOCK))
    t_blk = -(-T // nb)
    T_pad = nb * t_blk
    if T_pad != T:
        pad = T_pad - T
        gi_f = jnp.pad(gi_f, ((0, pad), (0, 0), (0, 0)))
        # The backward chain consumes padded steps FIRST -> make them identity:
        # z-gate pre-activation = +30  =>  z ~= 1  =>  h_b stays ~0 through padding.
        pad_b = jnp.zeros((pad, B_pad, 3 * H), jnp.float32).at[:, :, H:2 * H].set(30.0)
        gi_b = jnp.concatenate([gi_b, pad_b], axis=0)

    out_f, out_b = gru_bidir_pallas(gi_f, gi_b, enc["w_hh_f"], enc["w_hh_b"],
                                    enc["b_hn"], t_blk)
    out_tm = out_f[:T, :B] + out_b[:T, :B]               # fwd + bwd, lane-aligned add
    return jnp.transpose(out_tm, (1, 0, 2))              # [B, T, H]


# ---------------- pure-JAX reference (for correctness check) ----------------
def _gru_dir_ref(x, w_ih, w_hh, b_ih, b_hh, reverse, matmul_dtype):
    B = x.shape[0]
    H = UNITS
    w_ih_m = w_ih.astype(matmul_dtype)
    w_hh_m = w_hh.astype(matmul_dtype)

    def step(h, x_t):
        gi = jnp.dot(x_t.astype(matmul_dtype), w_ih_m.T,
                     preferred_element_type=jnp.float32) + b_ih
        gh = jnp.dot(h.astype(matmul_dtype), w_hh_m.T,
                     preferred_element_type=jnp.float32) + b_hh
        r = jax.nn.sigmoid(gi[:, :H] + gh[:, :H])
        z = jax.nn.sigmoid(gi[:, H:2 * H] + gh[:, H:2 * H])
        n = jnp.tanh(gi[:, 2 * H:] + r * gh[:, 2 * H:])
        h_new = (1.0 - z) * n + z * h
        return h_new, h_new

    xs = jnp.transpose(x, (1, 0, 2))
    if reverse:
        xs = xs[::-1]
    h0 = jnp.zeros((B, H), jnp.float32)
    _, ys = lax.scan(step, h0, xs)
    if reverse:
        ys = ys[::-1]
    return jnp.transpose(ys, (1, 0, 2))


def encoder_forward_ref(input_ids, params, matmul_dtype=jnp.float32):
    emb = jnp.take(params["embedding"], input_ids, axis=0).astype(jnp.float32)
    fwd = _gru_dir_ref(emb, params["w_ih_f"], params["w_hh_f"],
                       params["b_ih_f"], params["b_hh_f"], False, matmul_dtype)
    bwd = _gru_dir_ref(emb, params["w_ih_b"], params["w_hh_b"],
                       params["b_ih_b"], params["b_hh_b"], True, matmul_dtype)
    return fwd + bwd   # x[:, :, units:] + x[:, :, :units]


def init_params(key):
    H, E, V = UNITS, EMBEDDING_DIM, VOCAB_SIZE
    ks = jax.random.split(key, 9)
    k = 1.0 / jnp.sqrt(H)

    def uni(kk, shape):
        return jax.random.uniform(kk, shape, jnp.float32, -k, k)

    return {
        "embedding": jax.random.normal(ks[0], (V, E), jnp.float32),
        "w_ih_f": uni(ks[1], (3 * H, E)),
        "w_hh_f": uni(ks[2], (3 * H, H)),
        "b_ih_f": uni(ks[3], (3 * H,)),
        "b_hh_f": uni(ks[4], (3 * H,)),
        "w_ih_b": uni(ks[5], (3 * H, E)),
        "w_hh_b": uni(ks[6], (3 * H, H)),
        "b_ih_b": uni(ks[7], (3 * H,)),
        "b_hh_b": uni(ks[8], (3 * H,)),
    }


if __name__ == "__main__":
    key = jax.random.PRNGKey(0)
    pkey, ikey, ikey2 = jax.random.split(key, 3)
    params = init_params(pkey)
    enc = prepare_encoder(params)   # one-time gi-table / weight prep

    # --- small test (single grid step) ---
    B, T = 2, 8
    input_ids = jax.random.randint(ikey, (B, T), 0, VOCAB_SIZE, dtype=jnp.int32)
    out = jax.block_until_ready(encoder_forward(input_ids, enc))
    ref_bf16 = encoder_forward_ref(input_ids, params, jnp.bfloat16)   # matching bf16 operands
    ref_f32 = encoder_forward_ref(input_ids, params, jnp.float32)     # full-f32 reference
    assert out.shape == (B, T, UNITS), out.shape
    assert jnp.allclose(out, ref_bf16, atol=5e-3, rtol=5e-3), "mismatch vs bf16 reference"
    assert jnp.allclose(out, ref_f32, atol=5e-2, rtol=5e-2), "mismatch vs f32 reference"

    # --- longer sequence: exercises the multi-block grid / reversed backward stream ---
    B2, T2 = 3, 70
    ids2 = jax.random.randint(ikey2, (B2, T2), 0, VOCAB_SIZE, dtype=jnp.int32)
    out2 = jax.block_until_ready(encoder_forward(ids2, enc))
    ref2 = encoder_forward_ref(ids2, params, jnp.bfloat16)
    assert out2.shape == (B2, T2, UNITS), out2.shape
    assert jnp.allclose(out2, ref2, atol=2e-2, rtol=2e-2), "mismatch vs bf16 reference (long T)"

    print("KERNEL_OK")
</pallas_src>

<mosaic_0001>
module attributes {stable_mosaic.version = 11 : i64} {
  func.func @_gru_bidir_kernel(%arg0: i32, %arg1: memref<8x8x384xf32, #tpu.memory_space<vmem>>, %arg2: memref<8x8x384xf32, #tpu.memory_space<vmem>>, %arg3: memref<128x384xbf16, #tpu.memory_space<vmem>>, %arg4: memref<128x384xbf16, #tpu.memory_space<vmem>>, %arg5: memref<1x256xf32, #tpu.memory_space<vmem>>, %arg6: memref<8x8x128xf32, #tpu.memory_space<vmem>>, %arg7: memref<8x8x128xf32, #tpu.memory_space<vmem>>, %arg8: memref<8x128xf32, #tpu.memory_space<vmem>>, %arg9: memref<8x128xf32, #tpu.memory_space<vmem>>) attributes {dimension_semantics = [#tpu.dimension_semantics<arbitrary>], iteration_bounds = array<i64: 1>, scalar_prefetch = 0 : i64, scratch_operands = 2 : i64, tpu.core_type = #tpu.core_type<tc>, window_params = [{transform_indices = @transform_0, window_bounds = array<i64: 8, 8, 384>}, {transform_indices = @transform_1, window_bounds = array<i64: 8, 8, 384>}, {pipeline_mode = #tpu.pipeline_mode<synchronous>, transform_indices = @transform_2, window_bounds = array<i64: 128, 384>}, {pipeline_mode = #tpu.pipeline_mode<synchronous>, transform_indices = @transform_3, window_bounds = array<i64: 128, 384>}, {pipeline_mode = #tpu.pipeline_mode<synchronous>, transform_indices = @transform_4, window_bounds = array<i64: 1, 256>}, {transform_indices = @transform_5, window_bounds = array<i64: 8, 8, 128>}, {transform_indices = @transform_6, window_bounds = array<i64: 8, 8, 128>}]} {
    %c0_i32 = arith.constant 0 : i32
    %0 = arith.cmpi eq, %arg0, %c0_i32 : i32
    %1 = arith.extui %0 : i1 to i32
    %c0_i32_0 = arith.constant 0 : i32
    %2 = arith.cmpi ne, %1, %c0_i32_0 : i32
    scf.if %2 {
      %cst_179 = arith.constant 0.000000e+00 : f32
      %613 = vector.broadcast %cst_179 : f32 to vector<8x128xf32>
      %c0_180 = arith.constant 0 : index
      %c0_181 = arith.constant 0 : index
      %614 = vector.load %arg8[%c0_180, %c0_181] : memref<8x128xf32, #tpu.memory_space<vmem>>, vector<8x128xf32>
      tpu.vector_store %arg8[%c0_180, %c0_181], %613 {strides = array<i32>} : memref<8x128xf32, #tpu.memory_space<vmem>>, vector<8x128xf32>,
      %cst_182 = arith.constant 0.000000e+00 : f32
      %615 = vector.broadcast %cst_182 : f32 to vector<8x128xf32>
      %c0_183 = arith.constant 0 : index
      %c0_184 = arith.constant 0 : index
      %616 = vector.load %arg9[%c0_183, %c0_184] : memref<8x128xf32, #tpu.memory_space<vmem>>, vector<8x128xf32>
      tpu.vector_store %arg9[%c0_183, %c0_184], %615 {strides = array<i32>} : memref<8x128xf32, #tpu.memory_space<vmem>>, vector<8x128xf32>,
    } else {
    }
    %c0 = arith.constant 0 : index
    %c0_1 = arith.constant 0 : index
    %3 = vector.load %arg5[%c0, %c0_1] : memref<1x256xf32, #tpu.memory_space<vmem>>, vector<1x128xf32>
    %4 = vector.shape_cast %3 : vector<1x128xf32> to vector<1x128xf32>
    %5 = vector.broadcast %4 : vector<1x128xf32> to vector<8x128xf32>
    %c0_2 = arith.constant 0 : index
    %c128 = arith.constant 128 : index
    %6 = vector.load %arg5[%c0_2, %c128] : memref<1x256xf32, #tpu.memory_space<vmem>>, vector<1x128xf32>
    %7 = vector.shape_cast %6 : vector<1x128xf32> to vector<1x128xf32>
    %8 = vector.broadcast %7 : vector<1x128xf32> to vector<8x128xf32>
    %c0_3 = arith.constant 0 : index
    %c0_4 = arith.constant 0 : index
    %9 = vector.load %arg8[%c0_3, %c0_4] : memref<8x128xf32, #tpu.memory_space<vmem>>, vector<8x128xf32>
    %c0_5 = arith.constant 0 : index
    %c0_6 = arith.constant 0 : index
    %10 = vector.load %arg9[%c0_5, %c0_6] : memref<8x128xf32, #tpu.memory_space<vmem>>, vector<8x128xf32>
    %c0_i32_7 = arith.constant 0 : i32
    %c7_i32 = arith.constant 7 : i32
    %11 = arith.subi %c7_i32, %c0_i32_7 : i32
    %12 = arith.index_cast %c0_i32_7 : i32 to index
    %c0_8 = arith.constant 0 : index
    %c0_9 = arith.constant 0 : index
    %13 = vector.load %arg1[%12, %c0_8, %c0_9] : memref<8x8x384xf32, #tpu.memory_space<vmem>>, vector<1x8x384xf32>
    %14 = vector.shape_cast %13 : vector<1x8x384xf32> to vector<8x384xf32>
    %15 = arith.truncf %9 : vector<8x128xf32> to vector<8x128xbf16>
    %c0_10 = arith.constant 0 : index
    %c0_11 = arith.constant 0 : index
    %16 = vector.load %arg3[%c0_10, %c0_11] : memref<128x384xbf16, #tpu.memory_space<vmem>>, vector<128x384xbf16>
    %cst = arith.constant dense<0.000000e+00> : vector<8x384xf32>
    %17 = tpu.matmul %15, %16, %cst {dimension_numbers = #tpu.dot_dimension_numbers<[1], [0], [0], [1], [0, 0, 1, 1], [], []>} : vector<8x128xbf16>, vector<128x384xbf16>, vector<8x384xf32> -> vector<8x384xf32>
    %18 = vector.extract_strided_slice %14 {offsets = [0, 0], sizes = [8, 128], strides = [1, 1]} : vector<8x384xf32> to vector<8x128xf32>
    %19 = vector.extract_strided_slice %17 {offsets = [0, 0], sizes = [8, 128], strides = [1, 1]} : vector<8x384xf32> to vector<8x128xf32>
    %20 = arith.addf %18, %19 : vector<8x128xf32>
    %21 = arith.negf %20 : vector<8x128xf32>
    %22 = math.exp %21 : vector<8x128xf32>
    %cst_12 = arith.constant 1.000000e+00 : f32
    %23 = vector.broadcast %cst_12 : f32 to vector<8x128xf32>
    %24 = arith.addf %23, %22 : vector<8x128xf32>
    %25 = arith.divf %23, %24 : vector<8x128xf32>
    %26 = vector.extract_strided_slice %14 {offsets = [0, 128], sizes = [8, 128], strides = [1, 1]} : vector<8x384xf32> to vector<8x128xf32>
    %27 = vector.extract_strided_slice %17 {offsets = [0, 128], sizes = [8, 128], strides = [1, 1]} : vector<8x384xf32> to vector<8x128xf32>
    %28 = arith.addf %26, %27 : vector<8x128xf32>
    %29 = arith.negf %28 : vector<8x128xf32>
    %30 = math.exp %29 : vector<8x128xf32>
    %cst_13 = arith.constant 1.000000e+00 : f32
    %31 = vector.broadcast %cst_13 : f32 to vector<8x128xf32>
    %32 = arith.addf %31, %30 : vector<8x128xf32>
    %33 = arith.divf %31, %32 : vector<8x128xf32>
    %34 = vector.extract_strided_slice %14 {offsets = [0, 256], sizes = [8, 128], strides = [1, 1]} : vector<8x384xf32> to vector<8x128xf32>
    %35 = vector.extract_strided_slice %17 {offsets = [0, 256], sizes = [8, 128], strides = [1, 1]} : vector<8x384xf32> to vector<8x128xf32>
    %36 = arith.addf %35, %5 : vector<8x128xf32>
    %37 = arith.mulf %25, %36 : vector<8x128xf32>
    %38 = arith.addf %34, %37 : vector<8x128xf32>
    %39 = math.tanh %38 : vector<8x128xf32>
    %cst_14 = arith.constant 1.000000e+00 : f32
    %40 = vector.broadcast %cst_14 : f32 to vector<8x128xf32>
    %41 = arith.subf %40, %33 : vector<8x128xf32>
    %42 = arith.mulf %41, %39 : vector<8x128xf32>
    %43 = arith.mulf %33, %9 : vector<8x128xf32>
    %44 = arith.addf %42, %43 : vector<8x128xf32>
    %45 = arith.index_cast %11 : i32 to index
    %c0_15 = arith.constant 0 : index
    %c0_16 = arith.constant 0 : index
    %46 = vector.load %arg2[%45, %c0_15, %c0_16] : memref<8x8x384xf32, #tpu.memory_space<vmem>>, vector<1x8x384xf32>
    %47 = vector.shape_cast %46 : vector<1x8x384xf32> to vector<8x384xf32>
    %48 = arith.truncf %10 : vector<8x128xf32> to vector<8x128xbf16>
    %c0_17 = arith.constant 0 : index
    %c0_18 = arith.constant 0 : index
    %49 = vector.load %arg4[%c0_17, %c0_18] : memref<128x384xbf16, #tpu.memory_space<vmem>>, vector<128x384xbf16>
    %cst_19 = arith.constant dense<0.000000e+00> : vector<8x384xf32>
    %50 = tpu.matmul %48, %49, %cst_19 {dimension_numbers = #tpu.dot_dimension_numbers<[1], [0], [0], [1], [0, 0, 1, 1], [], []>} : vector<8x128xbf16>, vector<128x384xbf16>, vector<8x384xf32> -> vector<8x384xf32>
    %51 = vector.extract_strided_slice %47 {offsets = [0, 0], sizes = [8, 128], strides = [1, 1]} : vector<8x384xf32> to vector<8x128xf32>
    %52 = vector.extract_strided_slice %50 {offsets = [0, 0], sizes = [8, 128], strides = [1, 1]} : vector<8x384xf32> to vector<8x128xf32>
    %53 = arith.addf %51, %52 : vector<8x128xf32>
    %54 = arith.negf %53 : vector<8x128xf32>
    %55 = math.exp %54 : vector<8x128xf32>
    %cst_20 = arith.constant 1.000000e+00 : f32
    %56 = vector.broadcast %cst_20 : f32 to vector<8x128xf32>
    %57 = arith.addf %56, %55 : vector<8x128xf32>
    %58 = arith.divf %56, %57 : vector<8x128xf32>
    %59 = vector.extract_strided_slice %47 {offsets = [0, 128], sizes = [8, 128], strides = [1, 1]} : vector<8x384xf32> to vector<8x128xf32>
    %60 = vector.extract_strided_slice %50 {offsets = [0, 128], sizes = [8, 128], strides = [1, 1]} : vector<8x384xf32> to vector<8x128xf32>
    %61 = arith.addf %59, %60 : vector<8x128xf32>
    %62 = arith.negf %61 : vector<8x128xf32>
    %63 = math.exp %62 : vector<8x128xf32>
    %cst_21 = arith.constant 1.000000e+00 : f32
    %64 = vector.broadcast %cst_21 : f32 to vector<8x128xf32>
    %65 = arith.addf %64, %63 : vector<8x128xf32>
    %66 = arith.divf %64, %65 : vector<8x128xf32>
    %67 = vector.extract_strided_slice %47 {offsets = [0, 256], sizes = [8, 128], strides = [1, 1]} : vector<8x384xf32> to vector<8x128xf32>
    %68 = vector.extract_strided_slice %50 {offsets = [0, 256], sizes = [8, 128], strides = [1, 1]} : vector<8x384xf32> to vector<8x128xf32>
    %69 = arith.addf %68, %8 : vector<8x128xf32>
    %70 = arith.mulf %58, %69 : vector<8x128xf32>
    %71 = arith.addf %67, %70 : vector<8x128xf32>
    %72 = math.tanh %71 : vector<8x128xf32>
    %cst_22 = arith.constant 1.000000e+00 : f32
    %73 = vector.broadcast %cst_22 : f32 to vector<8x128xf32>
    %74 = arith.subf %73, %66 : vector<8x128xf32>
    %75 = arith.mulf %74, %72 : vector<8x128xf32>
    %76 = arith.mulf %66, %10 : vector<8x128xf32>
    %77 = arith.addf %75, %76 : vector<8x128xf32>
    %78 = arith.index_cast %c0_i32_7 : i32 to index
    %c0_23 = arith.constant 0 : index
    %c0_24 = arith.constant 0 : index
    %79 = vector.load %arg6[%78, %c0_23, %c0_24] : memref<8x8x128xf32, #tpu.memory_space<vmem>>, vector<1x8x128xf32>
    %80 = vector.shape_cast %79 : vector<1x8x128xf32> to vector<8x128xf32>
    %81 = vector.shape_cast %44 : vector<8x128xf32> to vector<1x8x128xf32>
    tpu.vector_store %arg6[%78, %c0_23, %c0_24], %81 {strides = array<i32>} : memref<8x8x128xf32, #tpu.memory_space<vmem>>, vector<1x8x128xf32>,
    %82 = arith.index_cast %11 : i32 to index
    %c0_25 = arith.constant 0 : index
    %c0_26 = arith.constant 0 : index
    %83 = vector.load %arg7[%82, %c0_25, %c0_26] : memref<8x8x128xf32, #tpu.memory_space<vmem>>, vector<1x8x128xf32>
    %84 = vector.shape_cast %83 : vector<1x8x128xf32> to vector<8x128xf32>
    %85 = vector.shape_cast %77 : vector<8x128xf32> to vector<1x8x128xf32>
    tpu.vector_store %arg7[%82, %c0_25, %c0_26], %85 {strides = array<i32>} : memref<8x8x128xf32, #tpu.memory_space<vmem>>, vector<1x8x128xf32>,
    %c1_i32 = arith.constant 1 : i32
    %c7_i32_27 = arith.constant 7 : i32
    %86 = arith.subi %c7_i32_27, %c1_i32 : i32
    %87 = arith.index_cast %c1_i32 : i32 to index
    %c0_28 = arith.constant 0 : index
    %c0_29 = arith.constant 0 : index
    %88 = vector.load %arg1[%87, %c0_28, %c0_29] : memref<8x8x384xf32, #tpu.memory_space<vmem>>, vector<1x8x384xf32>
    %89 = vector.shape_cast %88 : vector<1x8x384xf32> to vector<8x384xf32>
    %90 = arith.truncf %44 : vector<8x128xf32> to vector<8x128xbf16>
    %c0_30 = arith.constant 0 : index
    %c0_31 = arith.constant 0 : index
    %91 = vector.load %arg3[%c0_30, %c0_31] : memref<128x384xbf16, #tpu.memory_space<vmem>>, vector<128x384xbf16>
    %cst_32 = arith.constant dense<0.000000e+00> : vector<8x384xf32>
    %92 = tpu.matmul %90, %91, %cst_32 {dimension_numbers = #tpu.dot_dimension_numbers<[1], [0], [0], [1], [0, 0, 1, 1], [], []>} : vector<8x128xbf16>, vector<128x384xbf16>, vector<8x384xf32> -> vector<8x384xf32>
    %93 = vector.extract_strided_slice %89 {offsets = [0, 0], sizes = [8, 128], strides = [1, 1]} : vector<8x384xf32> to vector<8x128xf32>
    %94 = vector.extract_strided_slice %92 {offsets = [0, 0], sizes = [8, 128], strides = [1, 1]} : vector<8x384xf32> to vector<8x128xf32>
    %95 = arith.addf %93, %94 : vector<8x128xf32>
    %96 = arith.negf %95 : vector<8x128xf32>
    %97 = math.exp %96 : vector<8x128xf32>
    %cst_33 = arith.constant 1.000000e+00 : f32
    %98 = vector.broadcast %cst_33 : f32 to vector<8x128xf32>
    %99 = arith.addf %98, %97 : vector<8x128xf32>
    %100 = arith.divf %98, %99 : vector<8x128xf32>
    %101 = vector.extract_strided_slice %89 {offsets = [0, 128], sizes = [8, 128], strides = [1, 1]} : vector<8x384xf32> to vector<8x128xf32>
    %102 = vector.extract_strided_slice %92 {offsets = [0, 128], sizes = [8, 128], strides = [1, 1]} : vector<8x384xf32> to vector<8x128xf32>
    %103 = arith.addf %101, %102 : vector<8x128xf32>
    %104 = arith.negf %103 : vector<8x128xf32>
    %105 = math.exp %104 : vector<8x128xf32>
    %cst_34 = arith.constant 1.000000e+00 : f32
    %106 = vector.broadcast %cst_34 : f32 to vector<8x128xf32>
    %107 = arith.addf %106, %105 : vector<8x128xf32>
    %108 = arith.divf %106, %107 : vector<8x128xf32>
    %109 = vector.extract_strided_slice %89 {offsets = [0, 256], sizes = [8, 128], strides = [1, 1]} : vector<8x384xf32> to vector<8x128xf32>
    %110 = vector.extract_strided_slice %92 {offsets = [0, 256], sizes = [8, 128], strides = [1, 1]} : vector<8x384xf32> to vector<8x128xf32>
    %111 = arith.addf %110, %5 : vector<8x128xf32>
    %112 = arith.mulf %100, %111 : vector<8x128xf32>
    %113 = arith.addf %109, %112 : vector<8x128xf32>
    %114 = math.tanh %113 : vector<8x128xf32>
    %cst_35 = arith.constant 1.000000e+00 : f32
    %115 = vector.broadcast %cst_35 : f32 to vector<8x128xf32>
    %116 = arith.subf %115, %108 : vector<8x128xf32>
    %117 = arith.mulf %116, %114 : vector<8x128xf32>
    %118 = arith.mulf %108, %44 : vector<8x128xf32>
    %119 = arith.addf %117, %118 : vector<8x128xf32>
    %120 = arith.index_cast %86 : i32 to index
    %c0_36 = arith.constant 0 : index
    %c0_37 = arith.constant 0 : index
    %121 = vector.load %arg2[%120, %c0_36, %c0_37] : memref<8x8x384xf32, #tpu.memory_space<vmem>>, vector<1x8x384xf32>
    %122 = vector.shape_cast %121 : vector<1x8x384xf32> to vector<8x384xf32>
    %123 = arith.truncf %77 : vector<8x128xf32> to vector<8x128xbf16>
    %c0_38 = arith.constant 0 : index
    %c0_39 = arith.constant 0 : index
    %124 = vector.load %arg4[%c0_38, %c0_39] : memref<128x384xbf16, #tpu.memory_space<vmem>>, vector<128x384xbf16>
    %cst_40 = arith.constant dense<0.000000e+00> : vector<8x384xf32>
    %125 = tpu.matmul %123, %124, %cst_40 {dimension_numbers = #tpu.dot_dimension_numbers<[1], [0], [0], [1], [0, 0, 1, 1], [], []>} : vector<8x128xbf16>, vector<128x384xbf16>, vector<8x384xf32> -> vector<8x384xf32>
    %126 = vector.extract_strided_slice %122 {offsets = [0, 0], sizes = [8, 128], strides = [1, 1]} : vector<8x384xf32> to vector<8x128xf32>
    %127 = vector.extract_strided_slice %125 {offsets = [0, 0], sizes = [8, 128], strides = [1, 1]} : vector<8x384xf32> to vector<8x128xf32>
    %128 = arith.addf %126, %127 : vector<8x128xf32>
    %129 = arith.negf %128 : vector<8x128xf32>
    %130 = math.exp %129 : vector<8x128xf32>
    %cst_41 = arith.constant 1.000000e+00 : f32
    %131 = vector.broadcast %cst_41 : f32 to vector<8x128xf32>
    %132 = arith.addf %131, %130 : vector<8x128xf32>
    %133 = arith.divf %131, %132 : vector<8x128xf32>
    %134 = vector.extract_strided_slice %122 {offsets = [0, 128], sizes = [8, 128], strides = [1, 1]} : vector<8x384xf32> to vector<8x128xf32>
    %135 = vector.extract_strided_slice %125 {offsets = [0, 128], sizes = [8, 128], strides = [1, 1]} : vector<8x384xf32> to vector<8x128xf32>
    %136 = arith.addf %134, %135 : vector<8x128xf32>
    %137 = arith.negf %136 : vector<8x128xf32>
    %138 = math.exp %137 : vector<8x128xf32>
    %cst_42 = arith.constant 1.000000e+00 : f32
    %139 = vector.broadcast %cst_42 : f32 to vector<8x128xf32>
    %140 = arith.addf %139, %138 : vector<8x128xf32>
    %141 = arith.divf %139, %140 : vector<8x128xf32>
    %142 = vector.extract_strided_slice %122 {offsets = [0, 256], sizes = [8, 128], strides = [1, 1]} : vector<8x384xf32> to vector<8x128xf32>
    %143 = vector.extract_strided_slice %125 {offsets = [0, 256], sizes = [8, 128], strides = [1, 1]} : vector<8x384xf32> to vector<8x128xf32>
    %144 = arith.addf %143, %8 : vector<8x128xf32>
    %145 = arith.mulf %133, %144 : vector<8x128xf32>
    %146 = arith.addf %142, %145 : vector<8x128xf32>
    %147 = math.tanh %146 : vector<8x128xf32>
    %cst_43 = arith.constant 1.000000e+00 : f32
    %148 = vector.broadcast %cst_43 : f32 to vector<8x128xf32>
    %149 = arith.subf %148, %141 : vector<8x128xf32>
    %150 = arith.mulf %149, %147 : vector<8x128xf32>
    %151 = arith.mulf %141, %77 : vector<8x128xf32>
    %152 = arith.addf %150, %151 : vector<8x128xf32>
    %153 = arith.index_cast %c1_i32 : i32 to index
    %c0_44 = arith.constant 0 : index
    %c0_45 = arith.constant 0 : index
    %154 = vector.load %arg6[%153, %c0_44, %c0_45] : memref<8x8x128xf32, #tpu.memory_space<vmem>>, vector<1x8x128xf32>
    %155 = vector.shape_cast %154 : vector<1x8x128xf32> to vector<8x128xf32>
    %156 = vector.shape_cast %119 : vector<8x128xf32> to vector<1x8x128xf32>
    tpu.vector_store %arg6[%153, %c0_44, %c0_45], %156 {strides = array<i32>} : memref<8x8x128xf32, #tpu.memory_space<vmem>>, vector<1x8x128xf32>,
    %157 = arith.index_cast %86 : i32 to index
    %c0_46 = arith.constant 0 : index
    %c0_47 = arith.constant 0 : index
    %158 = vector.load %arg7[%157, %c0_46, %c0_47] : memref<8x8x128xf32, #tpu.memory_space<vmem>>, vector<1x8x128xf32>
    %159 = vector.shape_cast %158 : vector<1x8x128xf32> to vector<8x128xf32>
    %160 = vector.shape_cast %152 : vector<8x128xf32> to vector<1x8x128xf32>
    tpu.vector_store %arg7[%157, %c0_46, %c0_47], %160 {strides = array<i32>} : memref<8x8x128xf32, #tpu.memory_space<vmem>>, vector<1x8x128xf32>,
    %c2_i32 = arith.constant 2 : i32
    %c7_i32_48 = arith.constant 7 : i32
    %161 = arith.subi %c7_i32_48, %c2_i32 : i32
    %162 = arith.index_cast %c2_i32 : i32 to index
    %c0_49 = arith.constant 0 : index
    %c0_50 = arith.constant 0 : index
    %163 = vector.load %arg1[%162, %c0_49, %c0_50] : memref<8x8x384xf32, #tpu.memory_space<vmem>>, vector<1x8x384xf32>
    %164 = vector.shape_cast %163 : vector<1x8x384xf32> to vector<8x384xf32>
    %165 = arith.truncf %119 : vector<8x128xf32> to vector<8x128xbf16>
    %c0_51 = arith.constant 0 : index
    %c0_52 = arith.constant 0 : index
    %166 = vector.load %arg3[%c0_51, %c0_52] : memref<128x384xbf16, #tpu.memory_space<vmem>>, vector<128x384xbf16>
    %cst_53 = arith.constant dense<0.000000e+00> : vector<8x384xf32>
    %167 = tpu.matmul %165, %166, %cst_53 {dimension_numbers = #tpu.dot_dimension_numbers<[1], [0], [0], [1], [0, 0, 1, 1], [], []>} : vector<8x128xbf16>, vector<128x384xbf16>, vector<8x384xf32> -> vector<8x384xf32>
    %168 = vector.extract_strided_slice %164 {offsets = [0, 0], sizes = [8, 128], strides = [1, 1]} : vector<8x384xf32> to vector<8x128xf32>
    %169 = vector.extract_strided_slice %167 {offsets = [0, 0], sizes = [8, 128], strides = [1, 1]} : vector<8x384xf32> to vector<8x128xf32>
    %170 = arith.addf %168, %169 : vector<8x128xf32>
    %171 = arith.negf %170 : vector<8x128xf32>
    %172 = math.exp %171 : vector<8x128xf32>
    %cst_54 = arith.constant 1.000000e+00 : f32
    %173 = vector.broadcast %cst_54 : f32 to vector<8x128xf32>
    %174 = arith.addf %173, %172 : vector<8x128xf32>
    %175 = arith.divf %173, %174 : vector<8x128xf32>
    %176 = vector.extract_strided_slice %164 {offsets = [0, 128], sizes = [8, 128], strides = [1, 1]} : vector<8x384xf32> to vector<8x128xf32>
    %177 = vector.extract_strided_slice %167 {offsets = [0, 128], sizes = [8, 128], strides = [1, 1]} : vector<8x384xf32> to vector<8x128xf32>
    %178 = arith.addf %176, %177 : vector<8x128xf32>
    %179 = arith.negf %178 : vector<8x128xf32>
    %180 = math.exp %179 : vector<8x128xf32>
    %cst_55 = arith.constant 1.000000e+00 : f32
    %181 = vector.broadcast %cst_55 : f32 to vector<8x128xf32>
    %182 = arith.addf %181, %180 : vector<8x128xf32>
    %183 = arith.divf %181, %182 : vector<8x128xf32>
    %184 = vector.extract_strided_slice %164 {offsets = [0, 256], sizes = [8, 128], strides = [1, 1]} : vector<8x384xf32> to vector<8x128xf32>
    %185 = vector.extract_strided_slice %167 {offsets = [0, 256], sizes = [8, 128], strides = [1, 1]} : vector<8x384xf32> to vector<8x128xf32>
    %186 = arith.addf %185, %5 : vector<8x128xf32>
    %187 = arith.mulf %175, %186 : vector<8x128xf32>
    %188 = arith.addf %184, %187 : vector<8x128xf32>
    %189 = math.tanh %188 : vector<8x128xf32>
    %cst_56 = arith.constant 1.000000e+00 : f32
    %190 = vector.broadcast %cst_56 : f32 to vector<8x128xf32>
    %191 = arith.subf %190, %183 : vector<8x128xf32>
    %192 = arith.mulf %191, %189 : vector<8x128xf32>
    %193 = arith.mulf %183, %119 : vector<8x128xf32>
    %194 = arith.addf %192, %193 : vector<8x128xf32>
    %195 = arith.index_cast %161 : i32 to index
    %c0_57 = arith.constant 0 : index
    %c0_58 = arith.constant 0 : index
    %196 = vector.load %arg2[%195, %c0_57, %c0_58] : memref<8x8x384xf32, #tpu.memory_space<vmem>>, vector<1x8x384xf32>
    %197 = vector.shape_cast %196 : vector<1x8x384xf32> to vector<8x384xf32>
    %198 = arith.truncf %152 : vector<8x128xf32> to vector<8x128xbf16>
    %c0_59 = arith.constant 0 : index
    %c0_60 = arith.constant 0 : index
    %199 = vector.load %arg4[%c0_59, %c0_60] : memref<128x384xbf16, #tpu.memory_space<vmem>>, vector<128x384xbf16>
    %cst_61 = arith.constant dense<0.000000e+00> : vector<8x384xf32>
    %200 = tpu.matmul %198, %199, %cst_61 {dimension_numbers = #tpu.dot_dimension_numbers<[1], [0], [0], [1], [0, 0, 1, 1], [], []>} : vector<8x128xbf16>, vector<128x384xbf16>, vector<8x384xf32> -> vector<8x384xf32>
    %201 = vector.extract_strided_slice %197 {offsets = [0, 0], sizes = [8, 128], strides = [1, 1]} : vector<8x384xf32> to vector<8x128xf32>
    %202 = vector.extract_strided_slice %200 {offsets = [0, 0], sizes = [8, 128], strides = [1, 1]} : vector<8x384xf32> to vector<8x128xf32>
    %203 = arith.addf %201, %202 : vector<8x128xf32>
    %204 = arith.negf %203 : vector<8x128xf32>
    %205 = math.exp %204 : vector<8x128xf32>
    %cst_62 = arith.constant 1.000000e+00 : f32
    %206 = vector.broadcast %cst_62 : f32 to vector<8x128xf32>
    %207 = arith.addf %206, %205 : vector<8x128xf32>
    %208 = arith.divf %206, %207 : vector<8x128xf32>
    %209 = vector.extract_strided_slice %197 {offsets = [0, 128], sizes = [8, 128], strides = [1, 1]} : vector<8x384xf32> to vector<8x128xf32>
    %210 = vector.extract_strided_slice %200 {offsets = [0, 128], sizes = [8, 128], strides = [1, 1]} : vector<8x384xf32> to vector<8x128xf32>
    %211 = arith.addf %209, %210 : vector<8x128xf32>
    %212 = arith.negf %211 : vector<8x128xf32>
    %213 = math.exp %212 : vector<8x128xf32>
    %cst_63 = arith.constant 1.000000e+00 : f32
    %214 = vector.broadcast %cst_63 : f32 to vector<8x128xf32>
    %215 = arith.addf %214, %213 : vector<8x128xf32>
    %216 = arith.divf %214, %215 : vector<8x128xf32>
    %217 = vector.extract_strided_slice %197 {offsets = [0, 256], sizes = [8, 128], strides = [1, 1]} : vector<8x384xf32> to vector<8x128xf32>
    %218 = vector.extract_strided_slice %200 {offsets = [0, 256], sizes = [8, 128], strides = [1, 1]} : vector<8x384xf32> to vector<8x128xf32>
    %219 = arith.addf %218, %8 : vector<8x128xf32>
    %220 = arith.mulf %208, %219 : vector<8x128xf32>
    %221 = arith.addf %217, %220 : vector<8x128xf32>
    %222 = math.tanh %221 : vector<8x128xf32>
    %cst_64 = arith.constant 1.000000e+00 : f32
    %223 = vector.broadcast %cst_64 : f32 to vector<8x128xf32>
    %224 = arith.subf %223, %216 : vector<8x128xf32>
    %225 = arith.mulf %224, %222 : vector<8x128xf32>
    %226 = arith.mulf %216, %152 : vector<8x128xf32>
    %227 = arith.addf %225, %226 : vector<8x128xf32>
    %228 = arith.index_cast %c2_i32 : i32 to index
    %c0_65 = arith.constant 0 : index
    %c0_66 = arith.constant 0 : index
    %229 = vector.load %arg6[%228, %c0_65, %c0_66] : memref<8x8x128xf32, #tpu.memory_space<vmem>>, vector<1x8x128xf32>
    %230 = vector.shape_cast %229 : vector<1x8x128xf32> to vector<8x128xf32>
    %231 = vector.shape_cast %194 : vector<8x128xf32> to vector<1x8x128xf32>
    tpu.vector_store %arg6[%228, %c0_65, %c0_66], %231 {strides = array<i32>} : memref<8x8x128xf32, #tpu.memory_space<vmem>>, vector<1x8x128xf32>,
    %232 = arith.index_cast %161 : i32 to index
    %c0_67 = arith.constant 0 : index
    %c0_68 = arith.constant 0 : index
    %233 = vector.load %arg7[%232, %c0_67, %c0_68] : memref<8x8x128xf32, #tpu.memory_space<vmem>>, vector<1x8x128xf32>
    %234 = vector.shape_cast %233 : vector<1x8x128xf32> to vector<8x128xf32>
    %235 = vector.shape_cast %227 : vector<8x128xf32> to vector<1x8x128xf32>
    tpu.vector_store %arg7[%232, %c0_67, %c0_68], %235 {strides = array<i32>} : memref<8x8x128xf32, #tpu.memory_space<vmem>>, vector<1x8x128xf32>,
    %c3_i32 = arith.constant 3 : i32
    %c7_i32_69 = arith.constant 7 : i32
    %236 = arith.subi %c7_i32_69, %c3_i32 : i32
    %237 = arith.index_cast %c3_i32 : i32 to index
    %c0_70 = arith.constant 0 : index
    %c0_71 = arith.constant 0 : index
    %238 = vector.load %arg1[%237, %c0_70, %c0_71] : memref<8x8x384xf32, #tpu.memory_space<vmem>>, vector<1x8x384xf32>
    %239 = vector.shape_cast %238 : vector<1x8x384xf32> to vector<8x384xf32>
    %240 = arith.truncf %194 : vector<8x128xf32> to vector<8x128xbf16>
    %c0_72 = arith.constant 0 : index
    %c0_73 = arith.constant 0 : index
    %241 = vector.load %arg3[%c0_72, %c0_73] : memref<128x384xbf16, #tpu.memory_space<vmem>>, vector<128x384xbf16>
    %cst_74 = arith.constant dense<0.000000e+00> : vector<8x384xf32>
    %242 = tpu.matmul %240, %241, %cst_74 {dimension_numbers = #tpu.dot_dimension_numbers<[1], [0], [0], [1], [0, 0, 1, 1], [], []>} : vector<8x128xbf16>, vector<128x384xbf16>, vector<8x384xf32> -> vector<8x384xf32>
    %243 = vector.extract_strided_slice %239 {offsets = [0, 0], sizes = [8, 128], strides = [1, 1]} : vector<8x384xf32> to vector<8x128xf32>
    %244 = vector.extract_strided_slice %242 {offsets = [0, 0], sizes = [8, 128], strides = [1, 1]} : vector<8x384xf32> to vector<8x128xf32>
    %245 = arith.addf %243, %244 : vector<8x128xf32>
    %246 = arith.negf %245 : vector<8x128xf32>
    %247 = math.exp %246 : vector<8x128xf32>
    %cst_75 = arith.constant 1.000000e+00 : f32
    %248 = vector.broadcast %cst_75 : f32 to vector<8x128xf32>
    %249 = arith.addf %248, %247 : vector<8x128xf32>
    %250 = arith.divf %248, %249 : vector<8x128xf32>
    %251 = vector.extract_strided_slice %239 {offsets = [0, 128], sizes = [8, 128], strides = [1, 1]} : vector<8x384xf32> to vector<8x128xf32>
    %252 = vector.extract_strided_slice %242 {offsets = [0, 128], sizes = [8, 128], strides = [1, 1]} : vector<8x384xf32> to vector<8x128xf32>
    %253 = arith.addf %251, %252 : vector<8x128xf32>
    %254 = arith.negf %253 : vector<8x128xf32>
    %255 = math.exp %254 : vector<8x128xf32>
    %cst_76 = arith.constant 1.000000e+00 : f32
    %256 = vector.broadcast %cst_76 : f32 to vector<8x128xf32>
    %257 = arith.addf %256, %255 : vector<8x128xf32>
    %258 = arith.divf %256, %257 : vector<8x128xf32>
    %259 = vector.extract_strided_slice %239 {offsets = [0, 256], sizes = [8, 128], strides = [1, 1]} : vector<8x384xf32> to vector<8x128xf32>
    %260 = vector.extract_strided_slice %242 {offsets = [0, 256], sizes = [8, 128], strides = [1, 1]} : vector<8x384xf32> to vector<8x128xf32>
    %261 = arith.addf %260, %5 : vector<8x128xf32>
    %262 = arith.mulf %250, %261 : vector<8x128xf32>
    %263 = arith.addf %259, %262 : vector<8x128xf32>
    %264 = math.tanh %263 : vector<8x128xf32>
    %cst_77 = arith.constant 1.000000e+00 : f32
    %265 = vector.broadcast %cst_77 : f32 to vector<8x128xf32>
    %266 = arith.subf %265, %258 : vector<8x128xf32>
    %267 = arith.mulf %266, %264 : vector<8x128xf32>
    %268 = arith.mulf %258, %194 : vector<8x128xf32>
    %269 = arith.addf %267, %268 : vector<8x128xf32>
    %270 = arith.index_cast %236 : i32 to index
    %c0_78 = arith.constant 0 : index
    %c0_79 = arith.constant 0 : index
    %271 = vector.load %arg2[%270, %c0_78, %c0_79] : memref<8x8x384xf32, #tpu.memory_space<vmem>>, vector<1x8x384xf32>
    %272 = vector.shape_cast %271 : vector<1x8x384xf32> to vector<8x384xf32>
    %273 = arith.truncf %227 : vector<8x128xf32> to vector<8x128xbf16>
    %c0_80 = arith.constant 0 : index
    %c0_81 = arith.constant 0 : index
    %274 = vector.load %arg4[%c0_80, %c0_81] : memref<128x384xbf16, #tpu.memory_space<vmem>>, vector<128x384xbf16>
    %cst_82 = arith.constant dense<0.000000e+00> : vector<8x384xf32>
    %275 = tpu.matmul %273, %274, %cst_82 {dimension_numbers = #tpu.dot_dimension_numbers<[1], [0], [0], [1], [0, 0, 1, 1], [], []>} : vector<8x128xbf16>, vector<128x384xbf16>, vector<8x384xf32> -> vector<8x384xf32>
    %276 = vector.extract_strided_slice %272 {offsets = [0, 0], sizes = [8, 128], strides = [1, 1]} : vector<8x384xf32> to vector<8x128xf32>
    %277 = vector.extract_strided_slice %275 {offsets = [0, 0], sizes = [8, 128], strides = [1, 1]} : vector<8x384xf32> to vector<8x128xf32>
    %278 = arith.addf %276, %277 : vector<8x128xf32>
    %279 = arith.negf %278 : vector<8x128xf32>
    %280 = math.exp %279 : vector<8x128xf32>
    %cst_83 = arith.constant 1.000000e+00 : f32
    %281 = vector.broadcast %cst_83 : f32 to vector<8x128xf32>
    %282 = arith.addf %281, %280 : vector<8x128xf32>
    %283 = arith.divf %281, %282 : vector<8x128xf32>
    %284 = vector.extract_strided_slice %272 {offsets = [0, 128], sizes = [8, 128], strides = [1, 1]} : vector<8x384xf32> to vector<8x128xf32>
    %285 = vector.extract_strided_slice %275 {offsets = [0, 128], sizes = [8, 128], strides = [1, 1]} : vector<8x384xf32> to vector<8x128xf32>
    %286 = arith.addf %284, %285 : vector<8x128xf32>
    %287 = arith.negf %286 : vector<8x128xf32>
    %288 = math.exp %287 : vector<8x128xf32>
    %cst_84 = arith.constant 1.000000e+00 : f32
    %289 = vector.broadcast %cst_84 : f32 to vector<8x128xf32>
    %290 = arith.addf %289, %288 : vector<8x128xf32>
    %291 = arith.divf %289, %290 : vector<8x128xf32>
    %292 = vector.extract_strided_slice %272 {offsets = [0, 256], sizes = [8, 128], strides = [1, 1]} : vector<8x384xf32> to vector<8x128xf32>
    %293 = vector.extract_strided_slice %275 {offsets = [0, 256], sizes = [8, 128], strides = [1, 1]} : vector<8x384xf32> to vector<8x128xf32>
    %294 = arith.addf %293, %8 : vector<8x128xf32>
    %295 = arith.mulf %283, %294 : vector<8x128xf32>
    %296 = arith.addf %292, %295 : vector<8x128xf32>
    %297 = math.tanh %296 : vector<8x128xf32>
    %cst_85 = arith.constant 1.000000e+00 : f32
    %298 = vector.broadcast %cst_85 : f32 to vector<8x128xf32>
    %299 = arith.subf %298, %291 : vector<8x128xf32>
    %300 = arith.mulf %299, %297 : vector<8x128xf32>
    %301 = arith.mulf %291, %227 : vector<8x128xf32>
    %302 = arith.addf %300, %301 : vector<8x128xf32>
    %303 = arith.index_cast %c3_i32 : i32 to index
    %c0_86 = arith.constant 0 : index
    %c0_87 = arith.constant 0 : index
    %304 = vector.load %arg6[%303, %c0_86, %c0_87] : memref<8x8x128xf32, #tpu.memory_space<vmem>>, vector<1x8x128xf32>
    %305 = vector.shape_cast %304 : vector<1x8x128xf32> to vector<8x128xf32>
    %306 = vector.shape_cast %269 : vector<8x128xf32> to vector<1x8x128xf32>
    tpu.vector_store %arg6[%303, %c0_86, %c0_87], %306 {strides = array<i32>} : memref<8x8x128xf32, #tpu.memory_space<vmem>>, vector<1x8x128xf32>,
    %307 = arith.index_cast %236 : i32 to index
    %c0_88 = arith.constant 0 : index
    %c0_89 = arith.constant 0 : index
    %308 = vector.load %arg7[%307, %c0_88, %c0_89] : memref<8x8x128xf32, #tpu.memory_space<vmem>>, vector<1x8x128xf32>
    %309 = vector.shape_cast %308 : vector<1x8x128xf32> to vector<8x128xf32>
    %310 = vector.shape_cast %302 : vector<8x128xf32> to vector<1x8x128xf32>
    tpu.vector_store %arg7[%307, %c0_88, %c0_89], %310 {strides = array<i32>} : memref<8x8x128xf32, #tpu.memory_space<vmem>>, vector<1x8x128xf32>,
    %c4_i32 = arith.constant 4 : i32
    %c7_i32_90 = arith.constant 7 : i32
    %311 = arith.subi %c7_i32_90, %c4_i32 : i32
    %312 = arith.index_cast %c4_i32 : i32 to index
    %c0_91 = arith.constant 0 : index
    %c0_92 = arith.constant 0 : index
    %313 = vector.load %arg1[%312, %c0_91, %c0_92] : memref<8x8x384xf32, #tpu.memory_space<vmem>>, vector<1x8x384xf32>
    %314 = vector.shape_cast %313 : vector<1x8x384xf32> to vector<8x384xf32>
    %315 = arith.truncf %269 : vector<8x128xf32> to vector<8x128xbf16>
    %c0_93 = arith.constant 0 : index
    %c0_94 = arith.constant 0 : index
    %316 = vector.load %arg3[%c0_93, %c0_94] : memref<128x384xbf16, #tpu.memory_space<vmem>>, vector<128x384xbf16>
    %cst_95 = arith.constant dense<0.000000e+00> : vector<8x384xf32>
    %317 = tpu.matmul %315, %316, %cst_95 {dimension_numbers = #tpu.dot_dimension_numbers<[1], [0], [0], [1], [0, 0, 1, 1], [], []>} : vector<8x128xbf16>, vector<128x384xbf16>, vector<8x384xf32> -> vector<8x384xf32>
    %318 = vector.extract_strided_slice %314 {offsets = [0, 0], sizes = [8, 128], strides = [1, 1]} : vector<8x384xf32> to vector<8x128xf32>
    %319 = vector.extract_strided_slice %317 {offsets = [0, 0], sizes = [8, 128], strides = [1, 1]} : vector<8x384xf32> to vector<8x128xf32>
    %320 = arith.addf %318, %319 : vector<8x128xf32>
    %321 = arith.negf %320 : vector<8x128xf32>
    %322 = math.exp %321 : vector<8x128xf32>
    %cst_96 = arith.constant 1.000000e+00 : f32
    %323 = vector.broadcast %cst_96 : f32 to vector<8x128xf32>
    %324 = arith.addf %323, %322 : vector<8x128xf32>
    %325 = arith.divf %323, %324 : vector<8x128xf32>
    %326 = vector.extract_strided_slice %314 {offsets = [0, 128], sizes = [8, 128], strides = [1, 1]} : vector<8x384xf32> to vector<8x128xf32>
    %327 = vector.extract_strided_slice %317 {offsets = [0, 128], sizes = [8, 128], strides = [1, 1]} : vector<8x384xf32> to vector<8x128xf32>
    %328 = arith.addf %326, %327 : vector<8x128xf32>
    %329 = arith.negf %328 : vector<8x128xf32>
    %330 = math.exp %329 : vector<8x128xf32>
    %cst_97 = arith.constant 1.000000e+00 : f32
    %331 = vector.broadcast %cst_97 : f32 to vector<8x128xf32>
    %332 = arith.addf %331, %330 : vector<8x128xf32>
    %333 = arith.divf %331, %332 : vector<8x128xf32>
    %334 = vector.extract_strided_slice %314 {offsets = [0, 256], sizes = [8, 128], strides = [1, 1]} : vector<8x384xf32> to vector<8x128xf32>
    %335 = vector.extract_strided_slice %317 {offsets = [0, 256], sizes = [8, 128], strides = [1, 1]} : vector<8x384xf32> to vector<8x128xf32>
    %336 = arith.addf %335, %5 : vector<8x128xf32>
    %337 = arith.mulf %325, %336 : vector<8x128xf32>
    %338 = arith.addf %334, %337 : vector<8x128xf32>
    %339 = math.tanh %338 : vector<8x128xf32>
    %cst_98 = arith.constant 1.000000e+00 : f32
    %340 = vector.broadcast %cst_98 : f32 to vector<8x128xf32>
    %341 = arith.subf %340, %333 : vector<8x128xf32>
    %342 = arith.mulf %341, %339 : vector<8x128xf32>
    %343 = arith.mulf %333, %269 : vector<8x128xf32>
    %344 = arith.addf %342, %343 : vector<8x128xf32>
    %345 = arith.index_cast %311 : i32 to index
    %c0_99 = arith.constant 0 : index
    %c0_100 = arith.constant 0 : index
    %346 = vector.load %arg2[%345, %c0_99, %c0_100] : memref<8x8x384xf32, #tpu.memory_space<vmem>>, vector<1x8x384xf32>
    %347 = vector.shape_cast %346 : vector<1x8x384xf32> to vector<8x384xf32>
    %348 = arith.truncf %302 : vector<8x128xf32> to vector<8x128xbf16>
    %c0_101 = arith.constant 0 : index
    %c0_102 = arith.constant 0 : index
    %349 = vector.load %arg4[%c0_101, %c0_102] : memref<128x384xbf16, #tpu.memory_space<vmem>>, vector<128x384xbf16>
    %cst_103 = arith.constant dense<0.000000e+00> : vector<8x384xf32>
    %350 = tpu.matmul %348, %349, %cst_103 {dimension_numbers = #tpu.dot_dimension_numbers<[1], [0], [0], [1], [0, 0, 1, 1], [], []>} : vector<8x128xbf16>, vector<128x384xbf16>, vector<8x384xf32> -> vector<8x384xf32>
    %351 = vector.extract_strided_slice %347 {offsets = [0, 0], sizes = [8, 128], strides = [1, 1]} : vector<8x384xf32> to vector<8x128xf32>
    %352 = vector.extract_strided_slice %350 {offsets = [0, 0], sizes = [8, 128], strides = [1, 1]} : vector<8x384xf32> to vector<8x128xf32>
    %353 = arith.addf %351, %352 : vector<8x128xf32>
    %354 = arith.negf %353 : vector<8x128xf32>
    %355 = math.exp %354 : vector<8x128xf32>
    %cst_104 = arith.constant 1.000000e+00 : f32
    %356 = vector.broadcast %cst_104 : f32 to vector<8x128xf32>
    %357 = arith.addf %356, %355 : vector<8x128xf32>
    %358 = arith.divf %356, %357 : vector<8x128xf32>
    %359 = vector.extract_strided_slice %347 {offsets = [0, 128], sizes = [8, 128], strides = [1, 1]} : vector<8x384xf32> to vector<8x128xf32>
    %360 = vector.extract_strided_slice %350 {offsets = [0, 128], sizes = [8, 128], strides = [1, 1]} : vector<8x384xf32> to vector<8x128xf32>
    %361 = arith.addf %359, %360 : vector<8x128xf32>
    %362 = arith.negf %361 : vector<8x128xf32>
    %363 = math.exp %362 : vector<8x128xf32>
    %cst_105 = arith.constant 1.000000e+00 : f32
    %364 = vector.broadcast %cst_105 : f32 to vector<8x128xf32>
    %365 = arith.addf %364, %363 : vector<8x128xf32>
    %366 = arith.divf %364, %365 : vector<8x128xf32>
    %367 = vector.extract_strided_slice %347 {offsets = [0, 256], sizes = [8, 128], strides = [1, 1]} : vector<8x384xf32> to vector<8x128xf32>
    %368 = vector.extract_strided_slice %350 {offsets = [0, 256], sizes = [8, 128], strides = [1, 1]} : vector<8x384xf32> to vector<8x128xf32>
    %369 = arith.addf %368, %8 : vector<8x128xf32>
    %370 = arith.mulf %358, %369 : vector<8x128xf32>
    %371 = arith.addf %367, %370 : vector<8x128xf32>
    %372 = math.tanh %371 : vector<8x128xf32>
    %cst_106 = arith.constant 1.000000e+00 : f32
    %373 = vector.broadcast %cst_106 : f32 to vector<8x128xf32>
    %374 = arith.subf %373, %366 : vector<8x128xf32>
    %375 = arith.mulf %374, %372 : vector<8x128xf32>
    %376 = arith.mulf %366, %302 : vector<8x128xf32>
    %377 = arith.addf %375, %376 : vector<8x128xf32>
    %378 = arith.index_cast %c4_i32 : i32 to index
    %c0_107 = arith.constant 0 : index
    %c0_108 = arith.constant 0 : index
    %379 = vector.load %arg6[%378, %c0_107, %c0_108] : memref<8x8x128xf32, #tpu.memory_space<vmem>>, vector<1x8x128xf32>
    %380 = vector.shape_cast %379 : vector<1x8x128xf32> to vector<8x128xf32>
    %381 = vector.shape_cast %344 : vector<8x128xf32> to vector<1x8x128xf32>
    tpu.vector_store %arg6[%378, %c0_107, %c0_108], %381 {strides = array<i32>} : memref<8x8x128xf32, #tpu.memory_space<vmem>>, vector<1x8x128xf32>,
    %382 = arith.index_cast %311 : i32 to index
    %c0_109 = arith.constant 0 : index
    %c0_110 = arith.constant 0 : index
    %383 = vector.load %arg7[%382, %c0_109, %c0_110] : memref<8x8x128xf32, #tpu.memory_space<vmem>>, vector<1x8x128xf32>
    %384 = vector.shape_cast %383 : vector<1x8x128xf32> to vector<8x128xf32>
    %385 = vector.shape_cast %377 : vector<8x128xf32> to vector<1x8x128xf32>
    tpu.vector_store %arg7[%382, %c0_109, %c0_110], %385 {strides = array<i32>} : memref<8x8x128xf32, #tpu.memory_space<vmem>>, vector<1x8x128xf32>,
    %c5_i32 = arith.constant 5 : i32
    %c7_i32_111 = arith.constant 7 : i32
    %386 = arith.subi %c7_i32_111, %c5_i32 : i32
    %387 = arith.index_cast %c5_i32 : i32 to index
    %c0_112 = arith.constant 0 : index
    %c0_113 = arith.constant 0 : index
    %388 = vector.load %arg1[%387, %c0_112, %c0_113] : memref<8x8x384xf32, #tpu.memory_space<vmem>>, vector<1x8x384xf32>
    %389 = vector.shape_cast %388 : vector<1x8x384xf32> to vector<8x384xf32>
    %390 = arith.truncf %344 : vector<8x128xf32> to vector<8x128xbf16>
    %c0_114 = arith.constant 0 : index
    %c0_115 = arith.constant 0 : index
    %391 = vector.load %arg3[%c0_114, %c0_115] : memref<128x384xbf16, #tpu.memory_space<vmem>>, vector<128x384xbf16>
    %cst_116 = arith.constant dense<0.000000e+00> : vector<8x384xf32>
    %392 = tpu.matmul %390, %391, %cst_116 {dimension_numbers = #tpu.dot_dimension_numbers<[1], [0], [0], [1], [0, 0, 1, 1], [], []>} : vector<8x128xbf16>, vector<128x384xbf16>, vector<8x384xf32> -> vector<8x384xf32>
    %393 = vector.extract_strided_slice %389 {offsets = [0, 0], sizes = [8, 128], strides = [1, 1]} : vector<8x384xf32> to vector<8x128xf32>
    %394 = vector.extract_strided_slice %392 {offsets = [0, 0], sizes = [8, 128], strides = [1, 1]} : vector<8x384xf32> to vector<8x128xf32>
    %395 = arith.addf %393, %394 : vector<8x128xf32>
    %396 = arith.negf %395 : vector<8x128xf32>
    %397 = math.exp %396 : vector<8x128xf32>
    %cst_117 = arith.constant 1.000000e+00 : f32
    %398 = vector.broadcast %cst_117 : f32 to vector<8x128xf32>
    %399 = arith.addf %398, %397 : vector<8x128xf32>
    %400 = arith.divf %398, %399 : vector<8x128xf32>
    %401 = vector.extract_strided_slice %389 {offsets = [0, 128], sizes = [8, 128], strides = [1, 1]} : vector<8x384xf32> to vector<8x128xf32>
    %402 = vector.extract_strided_slice %392 {offsets = [0, 128], sizes = [8, 128], strides = [1, 1]} : vector<8x384xf32> to vector<8x128xf32>
    %403 = arith.addf %401, %402 : vector<8x128xf32>
    %404 = arith.negf %403 : vector<8x128xf32>
    %405 = math.exp %404 : vector<8x128xf32>
    %cst_118 = arith.constant 1.000000e+00 : f32
    %406 = vector.broadcast %cst_118 : f32 to vector<8x128xf32>
    %407 = arith.addf %406, %405 : vector<8x128xf32>
    %408 = arith.divf %406, %407 : vector<8x128xf32>
    %409 = vector.extract_strided_slice %389 {offsets = [0, 256], sizes = [8, 128], strides = [1, 1]} : vector<8x384xf32> to vector<8x128xf32>
    %410 = vector.extract_strided_slice %392 {offsets = [0, 256], sizes = [8, 128], strides = [1, 1]} : vector<8x384xf32> to vector<8x128xf32>
    %411 = arith.addf %410, %5 : vector<8x128xf32>
    %412 = arith.mulf %400, %411 : vector<8x128xf32>
    %413 = arith.addf %409, %412 : vector<8x128xf32>
    %414 = math.tanh %413 : vector<8x128xf32>
    %cst_119 = arith.constant 1.000000e+00 : f32
    %415 = vector.broadcast %cst_119 : f32 to vector<8x128xf32>
    %416 = arith.subf %415, %408 : vector<8x128xf32>
    %417 = arith.mulf %416, %414 : vector<8x128xf32>
    %418 = arith.mulf %408, %344 : vector<8x128xf32>
    %419 = arith.addf %417, %418 : vector<8x128xf32>
    %420 = arith.index_cast %386 : i32 to index
    %c0_120 = arith.constant 0 : index
    %c0_121 = arith.constant 0 : index
    %421 = vector.load %arg2[%420, %c0_120, %c0_121] : memref<8x8x384xf32, #tpu.memory_space<vmem>>, vector<1x8x384xf32>
    %422 = vector.shape_cast %421 : vector<1x8x384xf32> to vector<8x384xf32>
    %423 = arith.truncf %377 : vector<8x128xf32> to vector<8x128xbf16>
    %c0_122 = arith.constant 0 : index
    %c0_123 = arith.constant 0 : index
    %424 = vector.load %arg4[%c0_122, %c0_123] : memref<128x384xbf16, #tpu.memory_space<vmem>>, vector<128x384xbf16>
    %cst_124 = arith.constant dense<0.000000e+00> : vector<8x384xf32>
    %425 = tpu.matmul %423, %424, %cst_124 {dimension_numbers = #tpu.dot_dimension_numbers<[1], [0], [0], [1], [0, 0, 1, 1], [], []>} : vector<8x128xbf16>, vector<128x384xbf16>, vector<8x384xf32> -> vector<8x384xf32>
    %426 = vector.extract_strided_slice %422 {offsets = [0, 0], sizes = [8, 128], strides = [1, 1]} : vector<8x384xf32> to vector<8x128xf32>
    %427 = vector.extract_strided_slice %425 {offsets = [0, 0], sizes = [8, 128], strides = [1, 1]} : vector<8x384xf32> to vector<8x128xf32>
    %428 = arith.addf %426, %427 : vector<8x128xf32>
    %429 = arith.negf %428 : vector<8x128xf32>
    %430 = math.exp %429 : vector<8x128xf32>
    %cst_125 = arith.constant 1.000000e+00 : f32
    %431 = vector.broadcast %cst_125 : f32 to vector<8x128xf32>
    %432 = arith.addf %431, %430 : vector<8x128xf32>
    %433 = arith.divf %431, %432 : vector<8x128xf32>
    %434 = vector.extract_strided_slice %422 {offsets = [0, 128], sizes = [8, 128], strides = [1, 1]} : vector<8x384xf32> to vector<8x128xf32>
    %435 = vector.extract_strided_slice %425 {offsets = [0, 128], sizes = [8, 128], strides = [1, 1]} : vector<8x384xf32> to vector<8x128xf32>
    %436 = arith.addf %434, %435 : vector<8x128xf32>
    %437 = arith.negf %436 : vector<8x128xf32>
    %438 = math.exp %437 : vector<8x128xf32>
    %cst_126 = arith.constant 1.000000e+00 : f32
    %439 = vector.broadcast %cst_126 : f32 to vector<8x128xf32>
    %440 = arith.addf %439, %438 : vector<8x128xf32>
    %441 = arith.divf %439, %440 : vector<8x128xf32>
    %442 = vector.extract_strided_slice %422 {offsets = [0, 256], sizes = [8, 128], strides = [1, 1]} : vector<8x384xf32> to vector<8x128xf32>
    %443 = vector.extract_strided_slice %425 {offsets = [0, 256], sizes = [8, 128], strides = [1, 1]} : vector<8x384xf32> to vector<8x128xf32>
    %444 = arith.addf %443, %8 : vector<8x128xf32>
    %445 = arith.mulf %433, %444 : vector<8x128xf32>
    %446 = arith.addf %442, %445 : vector<8x128xf32>
    %447 = math.tanh %446 : vector<8x128xf32>
    %cst_127 = arith.constant 1.000000e+00 : f32
    %448 = vector.broadcast %cst_127 : f32 to vector<8x128xf32>
    %449 = arith.subf %448, %441 : vector<8x128xf32>
    %450 = arith.mulf %449, %447 : vector<8x128xf32>
    %451 = arith.mulf %441, %377 : vector<8x128xf32>
    %452 = arith.addf %450, %451 : vector<8x128xf32>
    %453 = arith.index_cast %c5_i32 : i32 to index
    %c0_128 = arith.constant 0 : index
    %c0_129 = arith.constant 0 : index
    %454 = vector.load %arg6[%453, %c0_128, %c0_129] : memref<8x8x128xf32, #tpu.memory_space<vmem>>, vector<1x8x128xf32>
    %455 = vector.shape_cast %454 : vector<1x8x128xf32> to vector<8x128xf32>
    %456 = vector.shape_cast %419 : vector<8x128xf32> to vector<1x8x128xf32>
    tpu.vector_store %arg6[%453, %c0_128, %c0_129], %456 {strides = array<i32>} : memref<8x8x128xf32, #tpu.memory_space<vmem>>, vector<1x8x128xf32>,
    %457 = arith.index_cast %386 : i32 to index
    %c0_130 = arith.constant 0 : index
    %c0_131 = arith.constant 0 : index
    %458 = vector.load %arg7[%457, %c0_130, %c0_131] : memref<8x8x128xf32, #tpu.memory_space<vmem>>, vector<1x8x128xf32>
    %459 = vector.shape_cast %458 : vector<1x8x128xf32> to vector<8x128xf32>
    %460 = vector.shape_cast %452 : vector<8x128xf32> to vector<1x8x128xf32>
    tpu.vector_store %arg7[%457, %c0_130, %c0_131], %460 {strides = array<i32>} : memref<8x8x128xf32, #tpu.memory_space<vmem>>, vector<1x8x128xf32>,
    %c6_i32 = arith.constant 6 : i32
    %c7_i32_132 = arith.constant 7 : i32
    %461 = arith.subi %c7_i32_132, %c6_i32 : i32
    %462 = arith.index_cast %c6_i32 : i32 to index
    %c0_133 = arith.constant 0 : index
    %c0_134 = arith.constant 0 : index
    %463 = vector.load %arg1[%462, %c0_133, %c0_134] : memref<8x8x384xf32, #tpu.memory_space<vmem>>, vector<1x8x384xf32>
    %464 = vector.shape_cast %463 : vector<1x8x384xf32> to vector<8x384xf32>
    %465 = arith.truncf %419 : vector<8x128xf32> to vector<8x128xbf16>
    %c0_135 = arith.constant 0 : index
    %c0_136 = arith.constant 0 : index
    %466 = vector.load %arg3[%c0_135, %c0_136] : memref<128x384xbf16, #tpu.memory_space<vmem>>, vector<128x384xbf16>
    %cst_137 = arith.constant dense<0.000000e+00> : vector<8x384xf32>
    %467 = tpu.matmul %465, %466, %cst_137 {dimension_numbers = #tpu.dot_dimension_numbers<[1], [0], [0], [1], [0, 0, 1, 1], [], []>} : vector<8x128xbf16>, vector<128x384xbf16>, vector<8x384xf32> -> vector<8x384xf32>
    %468 = vector.extract_strided_slice %464 {offsets = [0, 0], sizes = [8, 128], strides = [1, 1]} : vector<8x384xf32> to vector<8x128xf32>
    %469 = vector.extract_strided_slice %467 {offsets = [0, 0], sizes = [8, 128], strides = [1, 1]} : vector<8x384xf32> to vector<8x128xf32>
    %470 = arith.addf %468, %469 : vector<8x128xf32>
    %471 = arith.negf %470 : vector<8x128xf32>
    %472 = math.exp %471 : vector<8x128xf32>
    %cst_138 = arith.constant 1.000000e+00 : f32
    %473 = vector.broadcast %cst_138 : f32 to vector<8x128xf32>
    %474 = arith.addf %473, %472 : vector<8x128xf32>
    %475 = arith.divf %473, %474 : vector<8x128xf32>
    %476 = vector.extract_strided_slice %464 {offsets = [0, 128], sizes = [8, 128], strides = [1, 1]} : vector<8x384xf32> to vector<8x128xf32>
    %477 = vector.extract_strided_slice %467 {offsets = [0, 128], sizes = [8, 128], strides = [1, 1]} : vector<8x384xf32> to vector<8x128xf32>
    %478 = arith.addf %476, %477 : vector<8x128xf32>
    %479 = arith.negf %478 : vector<8x128xf32>
    %480 = math.exp %479 : vector<8x128xf32>
    %cst_139 = arith.constant 1.000000e+00 : f32
    %481 = vector.broadcast %cst_139 : f32 to vector<8x128xf32>
    %482 = arith.addf %481, %480 : vector<8x128xf32>
    %483 = arith.divf %481, %482 : vector<8x128xf32>
    %484 = vector.extract_strided_slice %464 {offsets = [0, 256], sizes = [8, 128], strides = [1, 1]} : vector<8x384xf32> to vector<8x128xf32>
    %485 = vector.extract_strided_slice %467 {offsets = [0, 256], sizes = [8, 128], strides = [1, 1]} : vector<8x384xf32> to vector<8x128xf32>
    %486 = arith.addf %485, %5 : vector<8x128xf32>
    %487 = arith.mulf %475, %486 : vector<8x128xf32>
    %488 = arith.addf %484, %487 : vector<8x128xf32>
    %489 = math.tanh %488 : vector<8x128xf32>
    %cst_140 = arith.constant 1.000000e+00 : f32
    %490 = vector.broadcast %cst_140 : f32 to vector<8x128xf32>
    %491 = arith.subf %490, %483 : vector<8x128xf32>
    %492 = arith.mulf %491, %489 : vector<8x128xf32>
    %493 = arith.mulf %483, %419 : vector<8x128xf32>
    %494 = arith.addf %492, %493 : vector<8x128xf32>
    %495 = arith.index_cast %461 : i32 to index
    %c0_141 = arith.constant 0 : index
    %c0_142 = arith.constant 0 : index
    %496 = vector.load %arg2[%495, %c0_141, %c0_142] : memref<8x8x384xf32, #tpu.memory_space<vmem>>, vector<1x8x384xf32>
    %497 = vector.shape_cast %496 : vector<1x8x384xf32> to vector<8x384xf32>
    %498 = arith.truncf %452 : vector<8x128xf32> to vector<8x128xbf16>
    %c0_143 = arith.constant 0 : index
    %c0_144 = arith.constant 0 : index
    %499 = vector.load %arg4[%c0_143, %c0_144] : memref<128x384xbf16, #tpu.memory_space<vmem>>, vector<128x384xbf16>
    %cst_145 = arith.constant dense<0.000000e+00> : vector<8x384xf32>
    %500 = tpu.matmul %498, %499, %cst_145 {dimension_numbers = #tpu.dot_dimension_numbers<[1], [0], [0], [1], [0, 0, 1, 1], [], []>} : vector<8x128xbf16>, vector<128x384xbf16>, vector<8x384xf32> -> vector<8x384xf32>
    %501 = vector.extract_strided_slice %497 {offsets = [0, 0], sizes = [8, 128], strides = [1, 1]} : vector<8x384xf32> to vector<8x128xf32>
    %502 = vector.extract_strided_slice %500 {offsets = [0, 0], sizes = [8, 128], strides = [1, 1]} : vector<8x384xf32> to vector<8x128xf32>
    %503 = arith.addf %501, %502 : vector<8x128xf32>
    %504 = arith.negf %503 : vector<8x128xf32>
    %505 = math.exp %504 : vector<8x128xf32>
    %cst_146 = arith.constant 1.000000e+00 : f32
    %506 = vector.broadcast %cst_146 : f32 to vector<8x128xf32>
    %507 = arith.addf %506, %505 : vector<8x128xf32>
    %508 = arith.divf %506, %507 : vector<8x128xf32>
    %509 = vector.extract_strided_slice %497 {offsets = [0, 128], sizes = [8, 128], strides = [1, 1]} : vector<8x384xf32> to vector<8x128xf32>
    %510 = vector.extract_strided_slice %500 {offsets = [0, 128], sizes = [8, 128], strides = [1, 1]} : vector<8x384xf32> to vector<8x128xf32>
    %511 = arith.addf %509, %510 : vector<8x128xf32>
    %512 = arith.negf %511 : vector<8x128xf32>
    %513 = math.exp %512 : vector<8x128xf32>
    %cst_147 = arith.constant 1.000000e+00 : f32
    %514 = vector.broadcast %cst_147 : f32 to vector<8x128xf32>
    %515 = arith.addf %514, %513 : vector<8x128xf32>
    %516 = arith.divf %514, %515 : vector<8x128xf32>
    %517 = vector.extract_strided_slice %497 {offsets = [0, 256], sizes = [8, 128], strides = [1, 1]} : vector<8x384xf32> to vector<8x128xf32>
    %518 = vector.extract_strided_slice %500 {offsets = [0, 256], sizes = [8, 128], strides = [1, 1]} : vector<8x384xf32> to vector<8x128xf32>
    %519 = arith.addf %518, %8 : vector<8x128xf32>
    %520 = arith.mulf %508, %519 : vector<8x128xf32>
    %521 = arith.addf %517, %520 : vector<8x128xf32>
    %522 = math.tanh %521 : vector<8x128xf32>
    %cst_148 = arith.constant 1.000000e+00 : f32
    %523 = vector.broadcast %cst_148 : f32 to vector<8x128xf32>
    %524 = arith.subf %523, %516 : vector<8x128xf32>
    %525 = arith.mulf %524, %522 : vector<8x128xf32>
    %526 = arith.mulf %516, %452 : vector<8x128xf32>
    %527 = arith.addf %525, %526 : vector<8x128xf32>
    %528 = arith.index_cast %c6_i32 : i32 to index
    %c0_149 = arith.constant 0 : index
    %c0_150 = arith.constant 0 : index
    %529 = vector.load %arg6[%528, %c0_149, %c0_150] : memref<8x8x128xf32, #tpu.memory_space<vmem>>, vector<1x8x128xf32>
    %530 = vector.shape_cast %529 : vector<1x8x128xf32> to vector<8x128xf32>
    %531 = vector.shape_cast %494 : vector<8x128xf32> to vector<1x8x128xf32>
    tpu.vector_store %arg6[%528, %c0_149, %c0_150], %531 {strides = array<i32>} : memref<8x8x128xf32, #tpu.memory_space<vmem>>, vector<1x8x128xf32>,
    %532 = arith.index_cast %461 : i32 to index
    %c0_151 = arith.constant 0 : index
    %c0_152 = arith.constant 0 : index
    %533 = vector.load %arg7[%532, %c0_151, %c0_152] : memref<8x8x128xf32, #tpu.memory_space<vmem>>, vector<1x8x128xf32>
    %534 = vector.shape_cast %533 : vector<1x8x128xf32> to vector<8x128xf32>
    %535 = vector.shape_cast %527 : vector<8x128xf32> to vector<1x8x128xf32>
    tpu.vector_store %arg7[%532, %c0_151, %c0_152], %535 {strides = array<i32>} : memref<8x8x128xf32, #tpu.memory_space<vmem>>, vector<1x8x128xf32>,
    %c7_i32_153 = arith.constant 7 : i32
    %c7_i32_154 = arith.constant 7 : i32
    %536 = arith.subi %c7_i32_154, %c7_i32_153 : i32
    %537 = arith.index_cast %c7_i32_153 : i32 to index
    %c0_155 = arith.constant 0 : index
    %c0_156 = arith.constant 0 : index
    %538 = vector.load %arg1[%537, %c0_155, %c0_156] : memref<8x8x384xf32, #tpu.memory_space<vmem>>, vector<1x8x384xf32>
    %539 = vector.shape_cast %538 : vector<1x8x384xf32> to vector<8x384xf32>
    %540 = arith.truncf %494 : vector<8x128xf32> to vector<8x128xbf16>
    %c0_157 = arith.constant 0 : index
    %c0_158 = arith.constant 0 : index
    %541 = vector.load %arg3[%c0_157, %c0_158] : memref<128x384xbf16, #tpu.memory_space<vmem>>, vector<128x384xbf16>
    %cst_159 = arith.constant dense<0.000000e+00> : vector<8x384xf32>
    %542 = tpu.matmul %540, %541, %cst_159 {dimension_numbers = #tpu.dot_dimension_numbers<[1], [0], [0], [1], [0, 0, 1, 1], [], []>} : vector<8x128xbf16>, vector<128x384xbf16>, vector<8x384xf32> -> vector<8x384xf32>
    %543 = vector.extract_strided_slice %539 {offsets = [0, 0], sizes = [8, 128], strides = [1, 1]} : vector<8x384xf32> to vector<8x128xf32>
    %544 = vector.extract_strided_slice %542 {offsets = [0, 0], sizes = [8, 128], strides = [1, 1]} : vector<8x384xf32> to vector<8x128xf32>
    %545 = arith.addf %543, %544 : vector<8x128xf32>
    %546 = arith.negf %545 : vector<8x128xf32>
    %547 = math.exp %546 : vector<8x128xf32>
    %cst_160 = arith.constant 1.000000e+00 : f32
    %548 = vector.broadcast %cst_160 : f32 to vector<8x128xf32>
    %549 = arith.addf %548, %547 : vector<8x128xf32>
    %550 = arith.divf %548, %549 : vector<8x128xf32>
    %551 = vector.extract_strided_slice %539 {offsets = [0, 128], sizes = [8, 128], strides = [1, 1]} : vector<8x384xf32> to vector<8x128xf32>
    %552 = vector.extract_strided_slice %542 {offsets = [0, 128], sizes = [8, 128], strides = [1, 1]} : vector<8x384xf32> to vector<8x128xf32>
    %553 = arith.addf %551, %552 : vector<8x128xf32>
    %554 = arith.negf %553 : vector<8x128xf32>
    %555 = math.exp %554 : vector<8x128xf32>
    %cst_161 = arith.constant 1.000000e+00 : f32
    %556 = vector.broadcast %cst_161 : f32 to vector<8x128xf32>
    %557 = arith.addf %556, %555 : vector<8x128xf32>
    %558 = arith.divf %556, %557 : vector<8x128xf32>
    %559 = vector.extract_strided_slice %539 {offsets = [0, 256], sizes = [8, 128], strides = [1, 1]} : vector<8x384xf32> to vector<8x128xf32>
    %560 = vector.extract_strided_slice %542 {offsets = [0, 256], sizes = [8, 128], strides = [1, 1]} : vector<8x384xf32> to vector<8x128xf32>
    %561 = arith.addf %560, %5 : vector<8x128xf32>
    %562 = arith.mulf %550, %561 : vector<8x128xf32>
    %563 = arith.addf %559, %562 : vector<8x128xf32>
    %564 = math.tanh %563 : vector<8x128xf32>
    %cst_162 = arith.constant 1.000000e+00 : f32
    %565 = vector.broadcast %cst_162 : f32 to vector<8x128xf32>
    %566 = arith.subf %565, %558 : vector<8x128xf32>
    %567 = arith.mulf %566, %564 : vector<8x128xf32>
    %568 = arith.mulf %558, %494 : vector<8x128xf32>
    %569 = arith.addf %567, %568 : vector<8x128xf32>
    %570 = arith.index_cast %536 : i32 to index
    %c0_163 = arith.constant 0 : index
    %c0_164 = arith.constant 0 : index
    %571 = vector.load %arg2[%570, %c0_163, %c0_164] : memref<8x8x384xf32, #tpu.memory_space<vmem>>, vector<1x8x384xf32>
    %572 = vector.shape_cast %571 : vector<1x8x384xf32> to vector<8x384xf32>
    %573 = arith.truncf %527 : vector<8x128xf32> to vector<8x128xbf16>
    %c0_165 = arith.constant 0 : index
    %c0_166 = arith.constant 0 : index
    %574 = vector.load %arg4[%c0_165, %c0_166] : memref<128x384xbf16, #tpu.memory_space<vmem>>, vector<128x384xbf16>
    %cst_167 = arith.constant dense<0.000000e+00> : vector<8x384xf32>
    %575 = tpu.matmul %573, %574, %cst_167 {dimension_numbers = #tpu.dot_dimension_numbers<[1], [0], [0], [1], [0, 0, 1, 1], [], []>} : vector<8x128xbf16>, vector<128x384xbf16>, vector<8x384xf32> -> vector<8x384xf32>
    %576 = vector.extract_strided_slice %572 {offsets = [0, 0], sizes = [8, 128], strides = [1, 1]} : vector<8x384xf32> to vector<8x128xf32>
    %577 = vector.extract_strided_slice %575 {offsets = [0, 0], sizes = [8, 128], strides = [1, 1]} : vector<8x384xf32> to vector<8x128xf32>
    %578 = arith.addf %576, %577 : vector<8x128xf32>
    %579 = arith.negf %578 : vector<8x128xf32>
    %580 = math.exp %579 : vector<8x128xf32>
    %cst_168 = arith.constant 1.000000e+00 : f32
    %581 = vector.broadcast %cst_168 : f32 to vector<8x128xf32>
    %582 = arith.addf %581, %580 : vector<8x128xf32>
    %583 = arith.divf %581, %582 : vector<8x128xf32>
    %584 = vector.extract_strided_slice %572 {offsets = [0, 128], sizes = [8, 128], strides = [1, 1]} : vector<8x384xf32> to vector<8x128xf32>
    %585 = vector.extract_strided_slice %575 {offsets = [0, 128], sizes = [8, 128], strides = [1, 1]} : vector<8x384xf32> to vector<8x128xf32>
    %586 = arith.addf %584, %585 : vector<8x128xf32>
    %587 = arith.negf %586 : vector<8x128xf32>
    %588 = math.exp %587 : vector<8x128xf32>
    %cst_169 = arith.constant 1.000000e+00 : f32
    %589 = vector.broadcast %cst_169 : f32 to vector<8x128xf32>
    %590 = arith.addf %589, %588 : vector<8x128xf32>
    %591 = arith.divf %589, %590 : vector<8x128xf32>
    %592 = vector.extract_strided_slice %572 {offsets = [0, 256], sizes = [8, 128], strides = [1, 1]} : vector<8x384xf32> to vector<8x128xf32>
    %593 = vector.extract_strided_slice %575 {offsets = [0, 256], sizes = [8, 128], strides = [1, 1]} : vector<8x384xf32> to vector<8x128xf32>
    %594 = arith.addf %593, %8 : vector<8x128xf32>
    %595 = arith.mulf %583, %594 : vector<8x128xf32>
    %596 = arith.addf %592, %595 : vector<8x128xf32>
    %597 = math.tanh %596 : vector<8x128xf32>
    %cst_170 = arith.constant 1.000000e+00 : f32
    %598 = vector.broadcast %cst_170 : f32 to vector<8x128xf32>
    %599 = arith.subf %598, %591 : vector<8x128xf32>
    %600 = arith.mulf %599, %597 : vector<8x128xf32>
    %601 = arith.mulf %591, %527 : vector<8x128xf32>
    %602 = arith.addf %600, %601 : vector<8x128xf32>
    %603 = arith.index_cast %c7_i32_153 : i32 to index
    %c0_171 = arith.constant 0 : index
    %c0_172 = arith.constant 0 : index
    %604 = vector.load %arg6[%603, %c0_171, %c0_172] : memref<8x8x128xf32, #tpu.memory_space<vmem>>, vector<1x8x128xf32>
    %605 = vector.shape_cast %604 : vector<1x8x128xf32> to vector<8x128xf32>
    %606 = vector.shape_cast %569 : vector<8x128xf32> to vector<1x8x128xf32>
    tpu.vector_store %arg6[%603, %c0_171, %c0_172], %606 {strides = array<i32>} : memref<8x8x128xf32, #tpu.memory_space<vmem>>, vector<1x8x128xf32>,
    %607 = arith.index_cast %536 : i32 to index
    %c0_173 = arith.constant 0 : index
    %c0_174 = arith.constant 0 : index
    %608 = vector.load %arg7[%607, %c0_173, %c0_174] : memref<8x8x128xf32, #tpu.memory_space<vmem>>, vector<1x8x128xf32>
    %609 = vector.shape_cast %608 : vector<1x8x128xf32> to vector<8x128xf32>
    %610 = vector.shape_cast %602 : vector<8x128xf32> to vector<1x8x128xf32>
    tpu.vector_store %arg7[%607, %c0_173, %c0_174], %610 {strides = array<i32>} : memref<8x8x128xf32, #tpu.memory_space<vmem>>, vector<1x8x128xf32>,
    %c8_i32 = arith.constant 8 : i32
    %c0_175 = arith.constant 0 : index
    %c0_176 = arith.constant 0 : index
    %611 = vector.load %arg8[%c0_175, %c0_176] : memref<8x128xf32, #tpu.memory_space<vmem>>, vector<8x128xf32>
    tpu.vector_store %arg8[%c0_175, %c0_176], %569 {strides = array<i32>} : memref<8x128xf32, #tpu.memory_space<vmem>>, vector<8x128xf32>,
    %c0_177 = arith.constant 0 : index
    %c0_178 = arith.constant 0 : index
    %612 = vector.load %arg9[%c0_177, %c0_178] : memref<8x128xf32, #tpu.memory_space<vmem>>, vector<8x128xf32>
    tpu.vector_store %arg9[%c0_177, %c0_178], %602 {strides = array<i32>} : memref<8x128xf32, #tpu.memory_space<vmem>>, vector<8x128xf32>,
    return
  }
  func.func @transform_0(%arg0: i32) -> (i32, i32, i32) {
    %c0_i32 = arith.constant 0 : i32
    %c0_i32_0 = arith.constant 0 : i32
    %c0_i32_1 = arith.constant 0 : i32
    return %arg0, %c0_i32, %c0_i32_0 : i32, i32, i32
  }
  func.func @transform_1(%arg0: i32) -> (i32, i32, i32) {
    %c0_i32 = arith.constant 0 : i32
    %0 = arith.subi %c0_i32, %arg0 : i32
    %c0_i32_0 = arith.constant 0 : i32
    %c0_i32_1 = arith.constant 0 : i32
    %c0_i32_2 = arith.constant 0 : i32
    return %0, %c0_i32_0, %c0_i32_1 : i32, i32, i32
  }
  func.func @transform_2(%arg0: i32) -> (i32, i32) {
    %c0_i32 = arith.constant 0 : i32
    %c0_i32_0 = arith.constant 0 : i32
    %c0_i32_1 = arith.constant 0 : i32
    return %c0_i32, %c0_i32_0 : i32, i32
  }
  func.func @transform_3(%arg0: i32) -> (i32, i32) {
    %c0_i32 = arith.constant 0 : i32
    %c0_i32_0 = arith.constant 0 : i32
    %c0_i32_1 = arith.constant 0 : i32
    return %c0_i32, %c0_i32_0 : i32, i32
  }
  func.func @transform_4(%arg0: i32) -> (i32, i32) {
    %c0_i32 = arith.constant 0 : i32
    %c0_i32_0 = arith.constant 0 : i32
    %c0_i32_1 = arith.constant 0 : i32
    return %c0_i32, %c0_i32_0 : i32, i32
  }
  func.func @transform_5(%arg0: i32) -> (i32, i32, i32) {
    %c0_i32 = arith.constant 0 : i32
    %c0_i32_0 = arith.constant 0 : i32
    %c0_i32_1 = arith.constant 0 : i32
    return %arg0, %c0_i32, %c0_i32_0 : i32, i32, i32
  }
  func.func @transform_6(%arg0: i32) -> (i32, i32, i32) {
    %c0_i32 = arith.constant 0 : i32
    %0 = arith.subi %c0_i32, %arg0 : i32
    %c0_i32_0 = arith.constant 0 : i32
    %c0_i32_1 = arith.constant 0 : i32
    %c0_i32_2 = arith.constant 0 : i32
    return %0, %c0_i32_0, %c0_i32_1 : i32, i32, i32
  }
}

</mosaic_0001>

<llo_original>
// kernel: tpu_custom_call.1
$region0: #{tpu_custom_call.1}
  #allocation0 [shape = 'u32[]', space=smem, size = 0x4, offset = 0x4, fixed_abs, tag = 'smem constant byte address 0x4 - core index']
  #allocation1 [shape = 'u32[144,128]{1,0:T(1,128)}', space=vmem, size = 0x12000, scoped, tag = 'internal scratch']
  #allocation2 [shape = 'f32[8,128]{1,0:T(8,128)}', space=vmem, size = 0x1000, scoped, tag = 'scratch operand']
  #allocation3 [shape = 'f32[8,128]{1,0:T(8,128)}', space=vmem, size = 0x1000, scoped, tag = 'scratch operand']
  %s0 = inlined_call_operand.hbm [shape: f32[8,8,384], index: 0, kind: input, shape index: {}]
  %s1 = inlined_call_operand.hbm [shape: f32[8,8,384], index: 1, kind: input, shape index: {}]
  %s2 = inlined_call_operand.hbm [shape: bf16[128,384], index: 2, kind: input, shape index: {}]
  %s3 = inlined_call_operand.hbm [shape: bf16[128,384], index: 3, kind: input, shape index: {}]
  %s4 = inlined_call_operand.vmem [shape: f32[1,256], index: 4, kind: input, shape index: {}]
  %s5 = inlined_call_operand.hbm [shape: f32[8,8,128], index: 5, kind: output, shape index: {0}]
  %s6 = inlined_call_operand.hbm [shape: f32[8,8,128], index: 6, kind: output, shape index: {1}]
  %7 = xla_tuple %s5, %s6
  %s8 = sld [smem:[#allocation0]]
  $region58: #{tpu_custom_call.1} parent=0
    _
  %s10 = ssub.s32 1, %s8
  %s11 = scalar_select 0, %s10, %s8
  $region1: #{tpu_custom_call.1} parent=0
    #allocation4 [shape = 'u8[98304]{0}', space=vmem, size = 0x18000, scoped, tag = 'input window, operand 0, single buffered']
    #allocation5 [shape = 's32[1]{0}', space=sflag, size = 0x4, scoped, tag = 'scoped memory for tpu_custom_call.1']
    #allocation6 [shape = 's32[1]{0}', space=sflag, size = 0x4, scoped, tag = 'scoped memory for tpu_custom_call.1']
    #allocation7 [shape = 'u8[98304]{0}', space=vmem, size = 0x18000, scoped, tag = 'input window, operand 1, single buffered']
    #allocation8 [shape = 's32[1]{0}', space=sflag, size = 0x4, scoped, tag = 'scoped memory for tpu_custom_call.1']
    #allocation9 [shape = 'u8[98304]{0}', space=vmem, size = 0x18000, scoped, tag = 'input window, operand 2, single buffered']
    #allocation10 [shape = 'u8[98304]{0}', space=vmem, size = 0x18000, scoped, tag = 'input window, operand 3, single buffered']
    #allocation11 [shape = 's32[1]{0}', space=sflag, size = 0x4, scoped, tag = 'scoped memory for tpu_custom_call.1']
    #allocation12 [shape = 'u8[32768]{0}', space=vmem, size = 0x8000, scoped, tag = 'output window, operand 0, single buffered']
    #allocation13 [shape = 'u8[32768]{0}', space=vmem, size = 0x8000, scoped, tag = 'output window, operand 1, single buffered']
    #allocation14 [shape = 's32[1]{0}', space=sflag, size = 0x4, scoped, tag = 'scoped memory for tpu_custom_call.1']
    %12 = vsyncpa [#allocation5], 0
    %13 = vsyncpa [#allocation8], 0
    %14 = vsyncpa [#allocation11], 0
    %15 = vsyncpa [#allocation6], 0
    %16 = vsyncpa [#allocation14], 0
    // Predicated region
    $region2: #{tpu_custom_call.1} parent=1 // pred_check
      _
    $region3: #{tpu_custom_call.1} parent=1 // pred_check_branch
      %18 = sbr.rel (0) target = $region5
    $region4: #{tpu_custom_call.1} parent=1 // pred_region
      %s20 = ssub.s32 3072, 3072
      %21 = vsyncadd [#allocation5], %s20
      %s22 = sshll.u32 [#allocation4], 4
      %s23 = int_to_ptr.vmem [resolvable:$true] %s22
      %28 = dma.hbm_to_vmem [thread:$0]  %s0, 3072, %s23, [#allocation5], 384, 384, 24
    $region5: #{tpu_custom_call.1} parent=1 // pred_fallthru
      _
    // Predicated region
    $region6: #{tpu_custom_call.1} parent=1 // pred_check
      _
    $region7: #{tpu_custom_call.1} parent=1 // pred_check_branch
      %30 = sbr.rel (0) target = $region9
    $region8: #{tpu_custom_call.1} parent=1 // pred_region
      %s31 = ssub.s32 0, 0
      %s32 = smul.u32 8, %s31
      %s34 = ssub.s32 3072, 3072
      %35 = vsyncadd [#allocation8], %s34
      %s36 = smul.addr %s32, 3
      %s37 = smul.addr %s36, 128
      %s38 = scalar_lea.hbm %s1, %s37
      %s39 = sshll.u32 [#allocation7], 4
      %s40 = int_to_ptr.vmem [resolvable:$true] %s39
      %45 = dma.hbm_to_vmem [thread:$0]  %s38, 3072, %s40, [#allocation8], 384, 384, 24
    $region9: #{tpu_custom_call.1} parent=1 // pred_fallthru
      _
    // Predicated region
    $region10: #{tpu_custom_call.1} parent=1 // pred_check
      _
    $region11: #{tpu_custom_call.1} parent=1 // pred_check_branch
      %47 = sbr.rel (0) target = $region13
    $region12: #{tpu_custom_call.1} parent=1 // pred_region
      %s49 = ssub.s32 3072, 3072
      %50 = vsyncadd [#allocation8], %s49
      %s51 = sshll.u32 [#allocation9], 4
      %s52 = int_to_ptr.vmem [resolvable:$true] %s51
      %57 = dma.hbm_to_vmem [thread:$0]  %s2, 3072, %s52, [#allocation8], 192, 192, 12
    $region13: #{tpu_custom_call.1} parent=1 // pred_fallthru
      _
    // Predicated region
    $region14: #{tpu_custom_call.1} parent=1 // pred_check
      _
    $region15: #{tpu_custom_call.1} parent=1 // pred_check_branch
      %59 = sbr.rel (0) target = $region17
    $region16: #{tpu_custom_call.1} parent=1 // pred_region
      %s61 = ssub.s32 3072, 3072
      %62 = vsyncadd [#allocation11], %s61
      %s63 = sshll.u32 [#allocation10], 4
      %s64 = int_to_ptr.vmem [resolvable:$true] %s63
      %69 = dma.hbm_to_vmem [thread:$0]  %s3, 3072, %s64, [#allocation11], 192, 192, 12
    $region17: #{tpu_custom_call.1} parent=1 // pred_fallthru
      _
    // Predicated region
    $region18: #{tpu_custom_call.1} parent=1 // pred_check
      _
    $region19: #{tpu_custom_call.1} parent=1 // pred_check_branch
      %71 = sbr.rel (0) target = $region21
    $region20: #{tpu_custom_call.1} parent=1 // pred_region
      _
    $region21: #{tpu_custom_call.1} parent=1 // pred_fallthru
      _
    // Predicated region
    $region22: #{tpu_custom_call.1} parent=1 // pred_check
      _
    $region23: #{tpu_custom_call.1} parent=1 // pred_check_branch
      %73 = sbr.rel (0) target = $region25
    $region24: #{tpu_custom_call.1} parent=1 // pred_region
      %74 = dma.done [#allocation5], 3072
    $region25: #{tpu_custom_call.1} parent=1 // pred_fallthru
      _
    // Predicated region
    $region26: #{tpu_custom_call.1} parent=1 // pred_check
      _
    $region27: #{tpu_custom_call.1} parent=1 // pred_check_branch
      %76 = sbr.rel (0) target = $region29
    $region28: #{tpu_custom_call.1} parent=1 // pred_region
      %77 = dma.done [#allocation8], 3072
    $region29: #{tpu_custom_call.1} parent=1 // pred_fallthru
      _
    // Predicated region
    $region30: #{tpu_custom_call.1} parent=1 // pred_check
      _
    $region31: #{tpu_custom_call.1} parent=1 // pred_check_branch
      %79 = sbr.rel (0) target = $region33
    $region32: #{tpu_custom_call.1} parent=1 // pred_region
      %80 = dma.done [#allocation8], 3072
    $region33: #{tpu_custom_call.1} parent=1 // pred_fallthru
      _
    // Predicated region
    $region34: #{tpu_custom_call.1} parent=1 // pred_check
      _
    $region35: #{tpu_custom_call.1} parent=1 // pred_check_branch
      %82 = sbr.rel (0) target = $region37
    $region36: #{tpu_custom_call.1} parent=1 // pred_region
      %83 = dma.done [#allocation11], 3072
    $region37: #{tpu_custom_call.1} parent=1 // pred_fallthru
      _
    %s84 = ssub.s32 0, 0
    %s85 = smul.u32 8, %s84
    %s86 = ssub.s32 0, 0
    %s87 = smul.u32 8, %s86
    %p89 = scmp.eq.s32.totalorder 0, 0
    // Predicated region
    $region38: #{tpu_custom_call.1} parent=1 // pred_check
      %p90 = pneg %p89
    $region39: #{tpu_custom_call.1} parent=1 // pred_check_branch
      %92 = sbr.rel (%p90) target = $region41
    $region40: #{tpu_custom_call.1} parent=1 // pred_region
      %93 = vst [vmem:[#allocation2] sm:$0xff] 0.0
      %94 = vst [vmem:[#allocation3] sm:$0xff] 0.0
    $region41: #{tpu_custom_call.1} parent=1 // pred_fallthru
      _
    %v95 = vld [vmem:[%s4] sm:$0x1]
    %v97 = vlaneseq
    %v98 = vshrl.u32 %v97, 7
    %v99 = vsub.s32 0, %v98
    %v100 = vrot.slane %v95, %v99
    %v102 = vld [vmem:[%s4 + $0x1] sm:$0x1]
    %v104 = vlaneseq
    %v105 = vshrl.u32 %v104, 7
    %v106 = vsub.s32 0, %v105
    %v107 = vrot.slane %v102, %v106
    %v109 = vld [vmem:[#allocation2] sm:$0xff]
    %v110 = vld [vmem:[#allocation3] sm:$0xff]
    %v111 = vld [vmem:[#allocation4] sm:$0xff]
    %v112 = vld [vmem:[#allocation4 + $0x8] sm:$0xff]
    %v113 = vld [vmem:[#allocation4 + $0x10] sm:$0xff]
    %v114 = vpack.c.bf16 %v109, %v109
    %v115 = vld [vmem:[#allocation9] sm:$0xff]
    %v116 = vld [vmem:[#allocation9 + $0x8] sm:$0xf]
    %v117 = vld [vmem:[#allocation9 + $0xc] sm:$0xff]
    %v118 = vld [vmem:[#allocation9 + $0x14] sm:$0xf]
    %v119 = vld [vmem:[#allocation9 + $0x18] sm:$0xff]
    %v120 = vld [vmem:[#allocation9 + $0x20] sm:$0xf]
    %v121 = vld [vmem:[#allocation9 + $0x24] sm:$0xff]
    %v122 = vld [vmem:[#allocation9 + $0x2c] sm:$0xf]
    %v123 = vld [vmem:[#allocation9 + $0x30] sm:$0xff]
    %v124 = vld [vmem:[#allocation9 + $0x38] sm:$0xf]
    %v125 = vld [vmem:[#allocation9 + $0x3c] sm:$0xff]
    %v126 = vld [vmem:[#allocation9 + $0x44] sm:$0xf]
    %v127 = vld [vmem:[#allocation9 + $0x48] sm:$0xff]
    %v128 = vld [vmem:[#allocation9 + $0x50] sm:$0xf]
    %v129 = vld [vmem:[#allocation9 + $0x54] sm:$0xff]
    %v130 = vld [vmem:[#allocation9 + $0x5c] sm:$0xf]
    %v131 = vld [vmem:[#allocation9 + $0x60] sm:$0xff]
    %v132 = vld [vmem:[#allocation9 + $0x68] sm:$0xf]
    %v133 = vld [vmem:[#allocation9 + $0x6c] sm:$0xff]
    %v134 = vld [vmem:[#allocation9 + $0x74] sm:$0xf]
    %v135 = vld [vmem:[#allocation9 + $0x78] sm:$0xff]
    %v136 = vld [vmem:[#allocation9 + $0x80] sm:$0xf]
    %v137 = vld [vmem:[#allocation9 + $0x84] sm:$0xff]
    %v138 = vld [vmem:[#allocation9 + $0x8c] sm:$0xf]
    %v139 = vld [vmem:[#allocation9 + $0x90] sm:$0xff]
    %v140 = vld [vmem:[#allocation9 + $0x98] sm:$0xf]
    %v141 = vld [vmem:[#allocation9 + $0x9c] sm:$0xff]
    %v142 = vld [vmem:[#allocation9 + $0xa4] sm:$0xf]
    %v143 = vld [vmem:[#allocation9 + $0xa8] sm:$0xff]
    %v144 = vld [vmem:[#allocation9 + $0xb0] sm:$0xf]
    %v145 = vld [vmem:[#allocation9 + $0xb4] sm:$0xff]
    %v146 = vld [vmem:[#allocation9 + $0xbc] sm:$0xf]
    %v179 = vunpack.c.l.b16 %v115
    %v180 = vunpack.c.h.b16 %v115
    %v181 = vunpack.c.l.b16 %v116
    %v182 = vunpack.c.l.b16 %v117
    %v183 = vunpack.c.h.b16 %v117
    %v184 = vunpack.c.l.b16 %v118
    %v185 = vunpack.c.l.b16 %v119
    %v186 = vunpack.c.h.b16 %v119
    %v187 = vunpack.c.l.b16 %v120
    %v188 = vunpack.c.l.b16 %v121
    %v189 = vunpack.c.h.b16 %v121
    %v190 = vunpack.c.l.b16 %v122
    %v191 = vunpack.c.l.b16 %v123
    %v192 = vunpack.c.h.b16 %v123
    %v193 = vunpack.c.l.b16 %v124
    %v194 = vunpack.c.l.b16 %v125
    %v195 = vunpack.c.h.b16 %v125
    %v196 = vunpack.c.l.b16 %v126
    %v197 = vunpack.c.l.b16 %v127
    %v198 = vunpack.c.h.b16 %v127
    %v199 = vunpack.c.l.b16 %v128
    %v200 = vunpack.c.l.b16 %v129
    %v201 = vunpack.c.h.b16 %v129
    %v202 = vunpack.c.l.b16 %v130
    %v203 = vunpack.c.l.b16 %v131
    %v204 = vunpack.c.h.b16 %v131
    %v205 = vunpack.c.l.b16 %v132
    %v206 = vunpack.c.l.b16 %v133
    %v207 = vunpack.c.h.b16 %v133
    %v208 = vunpack.c.l.b16 %v134
    %v209 = vunpack.c.l.b16 %v135
    %v210 = vunpack.c.h.b16 %v135
    %v211 = vunpack.c.l.b16 %v136
    %v212 = vunpack.c.l.b16 %v137
    %v213 = vunpack.c.h.b16 %v137
    %v214 = vunpack.c.l.b16 %v138
    %v215 = vunpack.c.l.b16 %v139
    %v216 = vunpack.c.h.b16 %v139
    %v217 = vunpack.c.l.b16 %v140
    %v218 = vunpack.c.l.b16 %v141
    %v219 = vunpack.c.h.b16 %v141
    %v220 = vunpack.c.l.b16 %v142
    %v221 = vunpack.c.l.b16 %v143
    %v222 = vunpack.c.h.b16 %v143
    %v223 = vunpack.c.l.b16 %v144
    %v224 = vunpack.c.l.b16 %v145
    %v225 = vunpack.c.h.b16 %v145
    %v226 = vunpack.c.l.b16 %v146
    %v227 = vpack.c.b16 %v182, %v179
    %v228 = vpack.c.b16 %v183, %v180
    %v229 = vpack.c.b16 %v184, %v181
    %v230 = vpack.c.b16 %v188, %v185
    %v231 = vpack.c.b16 %v189, %v186
    %v232 = vpack.c.b16 %v190, %v187
    %v233 = vpack.c.b16 %v194, %v191
    %v234 = vpack.c.b16 %v195, %v192
    %v235 = vpack.c.b16 %v196, %v193
    %v236 = vpack.c.b16 %v200, %v197
    %v237 = vpack.c.b16 %v201, %v198
    %v238 = vpack.c.b16 %v202, %v199
    %v239 = vpack.c.b16 %v206, %v203
    %v240 = vpack.c.b16 %v207, %v204
    %v241 = vpack.c.b16 %v208, %v205
    %v242 = vpack.c.b16 %v212, %v209
    %v243 = vpack.c.b16 %v213, %v210
    %v244 = vpack.c.b16 %v214, %v211
    %v245 = vpack.c.b16 %v218, %v215
    %v246 = vpack.c.b16 %v219, %v216
    %v247 = vpack.c.b16 %v220, %v217
    %v248 = vpack.c.b16 %v224, %v221
    %v249 = vpack.c.b16 %v225, %v222
    %v250 = vpack.c.b16 %v226, %v223
    %275 = vmatprep.subr.bf16.mxu0 %v249
    %276 = vmatpush1.bf16.msra.mxu0 %v248
    %277 = vmatprep.subr.bf16.mxu0 %v246
    %278 = vmatpush1.bf16.msra.mxu0 %v245
    %279 = vmatprep.subr.bf16.mxu0 %v243
    %280 = vmatpush1.bf16.msra.mxu0 %v242
    %281 = vmatprep.subr.bf16.mxu0 %v240
    %282 = vmatpush1.bf16.msra.mxu0 %v239
    %283 = vmatprep.subr.bf16.mxu0 %v237
    %284 = vmatpush1.bf16.msra.mxu0 %v236
    %285 = vmatprep.subr.bf16.mxu0 %v234
    %286 = vmatpush1.bf16.msra.mxu0 %v233
    %287 = vmatprep.subr.bf16.mxu0 %v231
    %288 = vmatpush1.bf16.msra.mxu0 %v230
    %289 = vmatprep.subr.bf16.mxu0 %v228
    %290 = vmatpush1.bf16.msra.mxu0 %v227
    %291 = vmatprep.subr.bf16.mxu0 0
    %292 = vmatpush2.bf16.msra.mxu0 0
    %293 = vmatprep.subr.bf16.mxu0 0
    %294 = vmatpush2.bf16.msra.mxu0 0
    %295 = vmatprep.subr.bf16.mxu0 0
    %296 = vmatpush2.bf16.msra.mxu0 0
    %297 = vmatprep.subr.bf16.mxu0 0
    %298 = vmatpush2.bf16.msra.mxu0 0
    %299 = vmatprep.subr.bf16.mxu0 0
    %300 = vmatpush2.bf16.msra.mxu0 0
    %301 = vmatprep.subr.bf16.mxu0 0
    %302 = vmatpush2.bf16.msra.mxu0 0
    %303 = vmatprep.subr.bf16.mxu0 0
    %304 = vmatpush2.bf16.msra.mxu0 0
    %305 = vmatprep.subr.bf16.mxu0 0
    %306 = vmatpush2.bf16.msra.mxu0 0
    %307 = vmatprep.mubr.bf16.mxu0 0
    %308 = vmatmul.mubr.bf16.gmra.mxu0 %v114
    %v309 = vpop.f32.mrf.mxu0
    %v310 = vadd.f32 0.0, %v309
    %v311 = vpop.f32.mrf.mxu0
    %v312 = vadd.f32 0.0, %v311
    %v313 = vpop.f32.mrf.mxu0
    %v314 = vpop.f32.mrf.mxu0
    %315 = vdwg.mxu0
    %316 = vmatprep.subr.bf16.mxu0 0
    %317 = vmatpush1.bf16.msra.mxu0 %v250
    %318 = vmatprep.subr.bf16.mxu0 0
    %319 = vmatpush1.bf16.msra.mxu0 %v247
    %320 = vmatprep.subr.bf16.mxu0 0
    %321 = vmatpush1.bf16.msra.mxu0 %v244
    %322 = vmatprep.subr.bf16.mxu0 0
    %323 = vmatpush1.bf16.msra.mxu0 %v241
    %324 = vmatprep.subr.bf16.mxu0 0
    %325 = vmatpush1.bf16.msra.mxu0 %v238
    %326 = vmatprep.subr.bf16.mxu0 0
    %327 = vmatpush1.bf16.msra.mxu0 %v235
    %328 = vmatprep.subr.bf16.mxu0 0
    %329 = vmatpush1.bf16.msra.mxu0 %v232
    %330 = vmatprep.subr.bf16.mxu0 0
    %331 = vmatpush1.bf16.msra.mxu0 %v229
    %332 = vmatprep.subr.bf16.mxu0 0
    %333 = vmatpush2.bf16.msra.mxu0 0
    %334 = vmatprep.subr.bf16.mxu0 0
    %335 = vmatpush2.bf16.msra.mxu0 0
    %336 = vmatprep.subr.bf16.mxu0 0
    %337 = vmatpush2.bf16.msra.mxu0 0
    %338 = vmatprep.subr.bf16.mxu0 0
    %339 = vmatpush2.bf16.msra.mxu0 0
    %340 = vmatprep.subr.bf16.mxu0 0
    %341 = vmatpush2.bf16.msra.mxu0 0
    %342 = vmatprep.subr.bf16.mxu0 0
    %343 = vmatpush2.bf16.msra.mxu0 0
    %344 = vmatprep.subr.bf16.mxu0 0
    %345 = vmatpush2.bf16.msra.mxu0 0
    %346 = vmatprep.subr.bf16.mxu0 0
    %347 = vmatpush2.bf16.msra.mxu0 0
    %348 = vmatprep.mubr.bf16.mxu0 0
    %349 = vmatmul.mubr.bf16.gmra.mxu0 %v114
    %v350 = vpop.f32.mrf.mxu0
    %v351 = vadd.f32 0.0, %v350
    %v352 = vpop.f32.mrf.mxu0
    %v353 = vpop.f32.mrf.mxu0
    %v354 = vpop.f32.mrf.mxu0
    %355 = vdwg.mxu0
    %v356 = vadd.f32 %v111, %v310
    %v357 = vxor.u32 %v356, 2147483648
    %v358 = vmul.f32 %v357, 1.442695
    %v359 = vpow.pop %v358
    %v360 = vadd.f32 %v359, 1.0
    %v361 = vrcp.pop %v360
    %v362 = vmul.f32 1.0, %v361
    %v363 = vadd.f32 %v112, %v312
    %v364 = vxor.u32 %v363, 2147483648
    %v365 = vmul.f32 %v364, 1.442695
    %v366 = vpow.pop %v365
    %v367 = vadd.f32 %v366, 1.0
    %v368 = vrcp.pop %v367
    %v369 = vmul.f32 1.0, %v368
    %v370 = vadd.f32 %v351, %v100
    %v371 = vmul.f32 %v362, %v370
    %v372 = vadd.f32 %v113, %v371
    %v373 = vtanh.pop %v372
    %v374 = vsub.f32 1.0, %v369
    %v375 = vmul.f32 %v374, %v373
    %v376 = vmul.f32 %v369, %v109
    %v377 = vadd.f32 %v375, %v376
    %s378 = scalar_lea.vmem [#allocation7], 168
    %v379 = vld [vmem:[%s378] sm:$0xff]
    %v380 = vld [vmem:[%s378 + $0x8] sm:$0xff]
    %v381 = vld [vmem:[%s378 + $0x10] sm:$0xff]
    %v382 = vpack.c.bf16 %v110, %v110
    %v383 = vld [vmem:[#allocation10] sm:$0xff]
    %v384 = vld [vmem:[#allocation10 + $0x8] sm:$0xf]
    %v385 = vld [vmem:[#allocation10 + $0xc] sm:$0xff]
    %v386 = vld [vmem:[#allocation10 + $0x14] sm:$0xf]
    %v387 = vld [vmem:[#allocation10 + $0x18] sm:$0xff]
    %v388 = vld [vmem:[#allocation10 + $0x20] sm:$0xf]
    %v389 = vld [vmem:[#allocation10 + $0x24] sm:$0xff]
    %v390 = vld [vmem:[#allocation10 + $0x2c] sm:$0xf]
    %v391 = vld [vmem:[#allocation10 + $0x30] sm:$0xff]
    %v392 = vld [vmem:[#allocation10 + $0x38] sm:$0xf]
    %v393 = vld [vmem:[#allocation10 + $0x3c] sm:$0xff]
    %v394 = vld [vmem:[#allocation10 + $0x44] sm:$0xf]
    %v395 = vld [vmem:[#allocation10 + $0x48] sm:$0xff]
    %v396 = vld [vmem:[#allocation10 + $0x50] sm:$0xf]
    %v397 = vld [vmem:[#allocation10 + $0x54] sm:$0xff]
    %v398 = vld [vmem:[#allocation10 + $0x5c] sm:$0xf]
    %v399 = vld [vmem:[#allocation10 + $0x60] sm:$0xff]
    %v400 = vld [vmem:[#allocation10 + $0x68] sm:$0xf]
    %v401 = vld [vmem:[#allocation10 + $0x6c] sm:$0xff]
    %v402 = vld [vmem:[#allocation10 + $0x74] sm:$0xf]
    %v403 = vld [vmem:[#allocation10 + $0x78] sm:$0xff]
    %v404 = vld [vmem:[#allocation10 + $0x80] sm:$0xf]
    %v405 = vld [vmem:[#allocation10 + $0x84] sm:$0xff]
    %v406 = vld [vmem:[#allocation10 + $0x8c] sm:$0xf]
    %v407 = vld [vmem:[#allocation10 + $0x90] sm:$0xff]
    %v408 = vld [vmem:[#allocation10 + $0x98] sm:$0xf]
    %v409 = vld [vmem:[#allocation10 + $0x9c] sm:$0xff]
    %v410 = vld [vmem:[#allocation10 + $0xa4] sm:$0xf]
    %v411 = vld [vmem:[#allocation10 + $0xa8] sm:$0xff]
    %v412 = vld [vmem:[#allocation10 + $0xb0] sm:$0xf]
    %v413 = vld [vmem:[#allocation10 + $0xb4] sm:$0xff]
    %v414 = vld [vmem:[#allocation10 + $0xbc] sm:$0xf]
    %v447 = vunpack.c.l.b16 %v383
    %v448 = vunpack.c.h.b16 %v383
    %v449 = vunpack.c.l.b16 %v384
    %v450 = vunpack.c.l.b16 %v385
    %v451 = vunpack.c.h.b16 %v385
    %v452 = vunpack.c.l.b16 %v386
    %v453 = vunpack.c.l.b16 %v387
    %v454 = vunpack.c.h.b16 %v387
    %v455 = vunpack.c.l.b16 %v388
    %v456 = vunpack.c.l.b16 %v389
    %v457 = vunpack.c.h.b16 %v389
    %v458 = vunpack.c.l.b16 %v390
    %v459 = vunpack.c.l.b16 %v391
    %v460 = vunpack.c.h.b16 %v391
    %v461 = vunpack.c.l.b16 %v392
    %v462 = vunpack.c.l.b16 %v393
    %v463 = vunpack.c.h.b16 %v393
    %v464 = vunpack.c.l.b16 %v394
    %v465 = vunpack.c.l.b16 %v395
    %v466 = vunpack.c.h.b16 %v395
    %v467 = vunpack.c.l.b16 %v396
    %v468 = vunpack.c.l.b16 %v397
    %v469 = vunpack.c.h.b16 %v397
    %v470 = vunpack.c.l.b16 %v398
    %v471 = vunpack.c.l.b16 %v399
    %v472 = vunpack.c.h.b16 %v399
    %v473 = vunpack.c.l.b16 %v400
    %v474 = vunpack.c.l.b16 %v401
    %v475 = vunpack.c.h.b16 %v401
    %v476 = vunpack.c.l.b16 %v402
    %v477 = vunpack.c.l.b16 %v403
    %v478 = vunpack.c.h.b16 %v403
    %v479 = vunpack.c.l.b16 %v404
    %v480 = vunpack.c.l.b16 %v405
    %v481 = vunpack.c.h.b16 %v405
    %v482 = vunpack.c.l.b16 %v406
    %v483 = vunpack.c.l.b16 %v407
    %v484 = vunpack.c.h.b16 %v407
    %v485 = vunpack.c.l.b16 %v408
    %v486 = vunpack.c.l.b16 %v409
    %v487 = vunpack.c.h.b16 %v409
    %v488 = vunpack.c.l.b16 %v410
    %v489 = vunpack.c.l.b16 %v411
    %v490 = vunpack.c.h.b16 %v411
    %v491 = vunpack.c.l.b16 %v412
    %v492 = vunpack.c.l.b16 %v413
    %v493 = vunpack.c.h.b16 %v413
    %v494 = vunpack.c.l.b16 %v414
    %v495 = vpack.c.b16 %v450, %v447
    %v496 = vpack.c.b16 %v451, %v448
    %v497 = vpack.c.b16 %v452, %v449
    %v498 = vpack.c.b16 %v456, %v453
    %v499 = vpack.c.b16 %v457, %v454
    %v500 = vpack.c.b16 %v458, %v455
    %v501 = vpack.c.b16 %v462, %v459
    %v502 = vpack.c.b16 %v463, %v460
    %v503 = vpack.c.b16 %v464, %v461
    %v504 = vpack.c.b16 %v468, %v465
    %v505 = vpack.c.b16 %v469, %v466
    %v506 = vpack.c.b16 %v470, %v467
    %v507 = vpack.c.b16 %v474, %v471
    %v508 = vpack.c.b16 %v475, %v472
    %v509 = vpack.c.b16 %v476, %v473
    %v510 = vpack.c.b16 %v480, %v477
    %v511 = vpack.c.b16 %v481, %v478
    %v512 = vpack.c.b16 %v482, %v479
    %v513 = vpack.c.b16 %v486, %v483
    %v514 = vpack.c.b16 %v487, %v484
    %v515 = vpack.c.b16 %v488, %v485
    %v516 = vpack.c.b16 %v492, %v489
    %v517 = vpack.c.b16 %v493, %v490
    %v518 = vpack.c.b16 %v494, %v491
    %543 = vmatprep.subr.bf16.mxu0 %v517
    %544 = vmatpush1.bf16.msra.mxu0 %v516
    %545 = vmatprep.subr.bf16.mxu0 %v514
    %546 = vmatpush1.bf16.msra.mxu0 %v513
    %547 = vmatprep.subr.bf16.mxu0 %v511
    %548 = vmatpush1.bf16.msra.mxu0 %v510
    %549 = vmatprep.subr.bf16.mxu0 %v508
    %550 = vmatpush1.bf16.msra.mxu0 %v507
    %551 = vmatprep.subr.bf16.mxu0 %v505
    %552 = vmatpush1.bf16.msra.mxu0 %v504
    %553 = vmatprep.subr.bf16.mxu0 %v502
    %554 = vmatpush1.bf16.msra.mxu0 %v501
    %555 = vmatprep.subr.bf16.mxu0 %v499
    %556 = vmatpush1.bf16.msra.mxu0 %v498
    %557 = vmatprep.subr.bf16.mxu0 %v496
    %558 = vmatpush1.bf16.msra.mxu0 %v495
    %559 = vmatprep.subr.bf16.mxu0 0
    %560 = vmatpush2.bf16.msra.mxu0 0
    %561 = vmatprep.subr.bf16.mxu0 0
    %562 = vmatpush2.bf16.msra.mxu0 0
    %563 = vmatprep.subr.bf16.mxu0 0
    %564 = vmatpush2.bf16.msra.mxu0 0
    %565 = vmatprep.subr.bf16.mxu0 0
    %566 = vmatpush2.bf16.msra.mxu0 0
    %567 = vmatprep.subr.bf16.mxu0 0
    %568 = vmatpush2.bf16.msra.mxu0 0
    %569 = vmatprep.subr.bf16.mxu0 0
    %570 = vmatpush2.bf16.msra.mxu0 0
    %571 = vmatprep.subr.bf16.mxu0 0
    %572 = vmatpush2.bf16.msra.mxu0 0
    %573 = vmatprep.subr.bf16.mxu0 0
    %574 = vmatpush2.bf16.msra.mxu0 0
    %575 = vmatprep.mubr.bf16.mxu0 0
    %576 = vmatmul.mubr.bf16.gmra.mxu0 %v382
    %v577 = vpop.f32.mrf.mxu0
    %v578 = vadd.f32 0.0, %v577
    %v579 = vpop.f32.mrf.mxu0
    %v580 = vadd.f32 0.0, %v579
    %v581 = vpop.f32.mrf.mxu0
    %v582 = vpop.f32.mrf.mxu0
    %583 = vdwg.mxu0
    %584 = vmatprep.subr.bf16.mxu0 0
    %585 = vmatpush1.bf16.msra.mxu0 %v518
    %586 = vmatprep.subr.bf16.mxu0 0
    %587 = vmatpush1.bf16.msra.mxu0 %v515
    %588 = vmatprep.subr.bf16.mxu0 0
    %589 = vmatpush1.bf16.msra.mxu0 %v512
    %590 = vmatprep.subr.bf16.mxu0 0
    %591 = vmatpush1.bf16.msra.mxu0 %v509
    %592 = vmatprep.subr.bf16.mxu0 0
    %593 = vmatpush1.bf16.msra.mxu0 %v506
    %594 = vmatprep.subr.bf16.mxu0 0
    %595 = vmatpush1.bf16.msra.mxu0 %v503
    %596 = vmatprep.subr.bf16.mxu0 0
    %597 = vmatpush1.bf16.msra.mxu0 %v500
    %598 = vmatprep.subr.bf16.mxu0 0
    %599 = vmatpush1.bf16.msra.mxu0 %v497
    %600 = vmatprep.subr.bf16.mxu0 0
    %601 = vmatpush2.bf16.msra.mxu0 0
    %602 = vmatprep.subr.bf16.mxu0 0
    %603 = vmatpush2.bf16.msra.mxu0 0
    %604 = vmatprep.subr.bf16.mxu0 0
    %605 = vmatpush2.bf16.msra.mxu0 0
    %606 = vmatprep.subr.bf16.mxu0 0
    %607 = vmatpush2.bf16.msra.mxu0 0
    %608 = vmatprep.subr.bf16.mxu0 0
    %609 = vmatpush2.bf16.msra.mxu0 0
    %610 = vmatprep.subr.bf16.mxu0 0
    %611 = vmatpush2.bf16.msra.mxu0 0
    %612 = vmatprep.subr.bf16.mxu0 0
    %613 = vmatpush2.bf16.msra.mxu0 0
    %614 = vmatprep.subr.bf16.mxu0 0
    %615 = vmatpush2.bf16.msra.mxu0 0
    %616 = vmatprep.mubr.bf16.mxu0 0
    %617 = vmatmul.mubr.bf16.gmra.mxu0 %v382
    %v618 = vpop.f32.mrf.mxu0
    %v619 = vadd.f32 0.0, %v618
    %v620 = vpop.f32.mrf.mxu0
    %v621 = vpop.f32.mrf.mxu0
    %v622 = vpop.f32.mrf.mxu0
    %623 = vdwg.mxu0
    %v624 = vadd.f32 %v379, %v578
    %v625 = vxor.u32 %v624, 2147483648
    %v626 = vmul.f32 %v625, 1.442695
    %v627 = vpow.pop %v626
    %v628 = vadd.f32 %v627, 1.0
    %v629 = vrcp.pop %v628
    %v630 = vmul.f32 1.0, %v629
    %v631 = vadd.f32 %v380, %v580
    %v632 = vxor.u32 %v631, 2147483648
    %v633 = vmul.f32 %v632, 1.442695
    %v634 = vpow.pop %v633
    %v635 = vadd.f32 %v634, 1.0
    %v636 = vrcp.pop %v635
    %v637 = vmul.f32 1.0, %v636
    %v638 = vadd.f32 %v619, %v107
    %v639 = vmul.f32 %v630, %v638
    %v640 = vadd.f32 %v381, %v639
    %v641 = vtanh.pop %v640
    %v642 = vsub.f32 1.0, %v637
    %v643 = vmul.f32 %v642, %v641
    %v644 = vmul.f32 %v637, %v110
    %v645 = vadd.f32 %v643, %v644
    %646 = vst [vmem:[#allocation12] sm:$0xff] %v377
    %s647 = scalar_lea.vmem [#allocation13], 56
    %648 = vst [vmem:[%s647] sm:$0xff] %v645
    %s649 = scalar_lea.vmem [#allocation4], 24
    %v650 = vld [vmem:[%s649] sm:$0xff]
    %v651 = vld [vmem:[%s649 + $0x8] sm:$0xff]
    %v652 = vld [vmem:[%s649 + $0x10] sm:$0xff]
    %v653 = vpack.c.bf16 %v377, %v377
    %v654 = vld [vmem:[#allocation9] sm:$0xff]
    %v655 = vld [vmem:[#allocation9 + $0x8] sm:$0xf]
    %v656 = vld [vmem:[#allocation9 + $0xc] sm:$0xff]
    %v657 = vld [vmem:[#allocation9 + $0x14] sm:$0xf]
    %v658 = vld [vmem:[#allocation9 + $0x18] sm:$0xff]
    %v659 = vld [vmem:[#allocation9 + $0x20] sm:$0xf]
    %v660 = vld [vmem:[#allocation9 + $0x24] sm:$0xff]
    %v661 = vld [vmem:[#allocation9 + $0x2c] sm:$0xf]
    %v662 = vld [vmem:[#allocation9 + $0x30] sm:$0xff]
    %v663 = vld [vmem:[#allocation9 + $0x38] sm:$0xf]
    %v664 = vld [vmem:[#allocation9 + $0x3c] sm:$0xff]
    %v665 = vld [vmem:[#allocation9 + $0x44] sm:$0xf]
    %v666 = vld [vmem:[#allocation9 + $0x48] sm:$0xff]
    %v667 = vld [vmem:[#allocation9 + $0x50] sm:$0xf]
    %v668 = vld [vmem:[#allocation9 + $0x54] sm:$0xff]
    %v669 = vld [vmem:[#allocation9 + $0x5c] sm:$0xf]
    %v670 = vld [vmem:[#allocation9 + $0x60] sm:$0xff]
    %v671 = vld [vmem:[#allocation9 + $0x68] sm:$0xf]
    %v672 = vld [vmem:[#allocation9 + $0x6c] sm:$0xff]
    %v673 = vld [vmem:[#allocation9 + $0x74] sm:$0xf]
    %v674 = vld [vmem:[#allocation9 + $0x78] sm:$0xff]
    %v675 = vld [vmem:[#allocation9 + $0x80] sm:$0xf]
    %v676 = vld [vmem:[#allocation9 + $0x84] sm:$0xff]
    %v677 = vld [vmem:[#allocation9 + $0x8c] sm:$0xf]
    %v678 = vld [vmem:[#allocation9 + $0x90] sm:$0xff]
    %v679 = vld [vmem:[#allocation9 + $0x98] sm:$0xf]
    %v680 = vld [vmem:[#allocation9 + $0x9c] sm:$0xff]
    %v681 = vld [vmem:[#allocation9 + $0xa4] sm:$0xf]
    %v682 = vld [vmem:[#allocation9 + $0xa8] sm:$0xff]
    %v683 = vld [vmem:[#allocation9 + $0xb0] sm:$0xf]
    %v684 = vld [vmem:[#allocation9 + $0xb4] sm:$0xff]
    %v685 = vld [vmem:[#allocation9 + $0xbc] sm:$0xf]
    %v718 = vunpack.c.l.b16 %v654
    %v719 = vunpack.c.h.b16 %v654
    %v720 = vunpack.c.l.b16 %v655
    %v721 = vunpack.c.l.b16 %v656
    %v722 = vunpack.c.h.b16 %v656
    %v723 = vunpack.c.l.b16 %v657
    %v724 = vunpack.c.l.b16 %v658
    %v725 = vunpack.c.h.b16 %v658
    %v726 = vunpack.c.l.b16 %v659
    %v727 = vunpack.c.l.b16 %v660
    %v728 = vunpack.c.h.b16 %v660
    %v729 = vunpack.c.l.b16 %v661
    %v730 = vunpack.c.l.b16 %v662
    %v731 = vunpack.c.h.b16 %v662
    %v732 = vunpack.c.l.b16 %v663
    %v733 = vunpack.c.l.b16 %v664
    %v734 = vunpack.c.h.b16 %v664
    %v735 = vunpack.c.l.b16 %v665
    %v736 = vunpack.c.l.b16 %v666
    %v737 = vunpack.c.h.b16 %v666
    %v738 = vunpack.c.l.b16 %v667
    %v739 = vunpack.c.l.b16 %v668
    %v740 = vunpack.c.h.b16 %v668
    %v741 = vunpack.c.l.b16 %v669
    %v742 = vunpack.c.l.b16 %v670
    %v743 = vunpack.c.h.b16 %v670
    %v744 = vunpack.c.l.b16 %v671
    %v745 = vunpack.c.l.b16 %v672
    %v746 = vunpack.c.h.b16 %v672
    %v747 = vunpack.c.l.b16 %v673
    %v748 = vunpack.c.l.b16 %v674
    %v749 = vunpack.c.h.b16 %v674
    %v750 = vunpack.c.l.b16 %v675
    %v751 = vunpack.c.l.b16 %v676
    %v752 = vunpack.c.h.b16 %v676
    %v753 = vunpack.c.l.b16 %v677
    %v754 = vunpack.c.l.b16 %v678
    %v755 = vunpack.c.h.b16 %v678
    %v756 = vunpack.c.l.b16 %v679
    %v757 = vunpack.c.l.b16 %v680
    %v758 = vunpack.c.h.b16 %v680
    %v759 = vunpack.c.l.b16 %v681
    %v760 = vunpack.c.l.b16 %v682
    %v761 = vunpack.c.h.b16 %v682
    %v762 = vunpack.c.l.b16 %v683
    %v763 = vunpack.c.l.b16 %v684
    %v764 = vunpack.c.h.b16 %v684
    %v765 = vunpack.c.l.b16 %v685
    %v766 = vpack.c.b16 %v721, %v718
    %v767 = vpack.c.b16 %v722, %v719
    %v768 = vpack.c.b16 %v723, %v720
    %v769 = vpack.c.b16 %v727, %v724
    %v770 = vpack.c.b16 %v728, %v725
    %v771 = vpack.c.b16 %v729, %v726
    %v772 = vpack.c.b16 %v733, %v730
    %v773 = vpack.c.b16 %v734, %v731
    %v774 = vpack.c.b16 %v735, %v732
    %v775 = vpack.c.b16 %v739, %v736
    %v776 = vpack.c.b16 %v740, %v737
    %v777 = vpack.c.b16 %v741, %v738
    %v778 = vpack.c.b16 %v745, %v742
    %v779 = vpack.c.b16 %v746, %v743
    %v780 = vpack.c.b16 %v747, %v744
    %v781 = vpack.c.b16 %v751, %v748
    %v782 = vpack.c.b16 %v752, %v749
    %v783 = vpack.c.b16 %v753, %v750
    %v784 = vpack.c.b16 %v757, %v754
    %v785 = vpack.c.b16 %v758, %v755
    %v786 = vpack.c.b16 %v759, %v756
    %v787 = vpack.c.b16 %v763, %v760
    %v788 = vpack.c.b16 %v764, %v761
    %v789 = vpack.c.b16 %v765, %v762
    %814 = vmatprep.subr.bf16.mxu0 %v788
    %815 = vmatpush1.bf16.msra.mxu0 %v787
    %816 = vmatprep.subr.bf16.mxu0 %v785
    %817 = vmatpush1.bf16.msra.mxu0 %v784
    %818 = vmatprep.subr.bf16.mxu0 %v782
    %819 = vmatpush1.bf16.msra.mxu0 %v781
    %820 = vmatprep.subr.bf16.mxu0 %v779
    %821 = vmatpush1.bf16.msra.mxu0 %v778
    %822 = vmatprep.subr.bf16.mxu0 %v776
    %823 = vmatpush1.bf16.msra.mxu0 %v775
    %824 = vmatprep.subr.bf16.mxu0 %v773
    %825 = vmatpush1.bf16.msra.mxu0 %v772
    %826 = vmatprep.subr.bf16.mxu0 %v770
    %827 = vmatpush1.bf16.msra.mxu0 %v769
    %828 = vmatprep.subr.bf16.mxu0 %v767
    %829 = vmatpush1.bf16.msra.mxu0 %v766
    %830 = vmatprep.subr.bf16.mxu0 0
    %831 = vmatpush2.bf16.msra.mxu0 0
    %832 = vmatprep.subr.bf16.mxu0 0
    %833 = vmatpush2.bf16.msra.mxu0 0
    %834 = vmatprep.subr.bf16.mxu0 0
    %835 = vmatpush2.bf16.msra.mxu0 0
    %836 = vmatprep.subr.bf16.mxu0 0
    %837 = vmatpush2.bf16.msra.mxu0 0
    %838 = vmatprep.subr.bf16.mxu0 0
    %839 = vmatpush2.bf16.msra.mxu0 0
    %840 = vmatprep.subr.bf16.mxu0 0
    %841 = vmatpush2.bf16.msra.mxu0 0
    %842 = vmatprep.subr.bf16.mxu0 0
    %843 = vmatpush2.bf16.msra.mxu0 0
    %844 = vmatprep.subr.bf16.mxu0 0
    %845 = vmatpush2.bf16.msra.mxu0 0
    %846 = vmatprep.mubr.bf16.mxu0 0
    %847 = vmatmul.mubr.bf16.gmra.mxu0 %v653
    %v848 = vpop.f32.mrf.mxu0
    %v849 = vadd.f32 0.0, %v848
    %v850 = vpop.f32.mrf.mxu0
    %v851 = vadd.f32 0.0, %v850
    %v852 = vpop.f32.mrf.mxu0
    %v853 = vpop.f32.mrf.mxu0
    %854 = vdwg.mxu0
    %855 = vmatprep.subr.bf16.mxu0 0
    %856 = vmatpush1.bf16.msra.mxu0 %v789
    %857 = vmatprep.subr.bf16.mxu0 0
    %858 = vmatpush1.bf16.msra.mxu0 %v786
    %859 = vmatprep.subr.bf16.mxu0 0
    %860 = vmatpush1.bf16.msra.mxu0 %v783
    %861 = vmatprep.subr.bf16.mxu0 0
    %862 = vmatpush1.bf16.msra.mxu0 %v780
    %863 = vmatprep.subr.bf16.mxu0 0
    %864 = vmatpush1.bf16.msra.mxu0 %v777
    %865 = vmatprep.subr.bf16.mxu0 0
    %866 = vmatpush1.bf16.msra.mxu0 %v774
    %867 = vmatprep.subr.bf16.mxu0 0
    %868 = vmatpush1.bf16.msra.mxu0 %v771
    %869 = vmatprep.subr.bf16.mxu0 0
    %870 = vmatpush1.bf16.msra.mxu0 %v768
    %871 = vmatprep.subr.bf16.mxu0 0
    %872 = vmatpush2.bf16.msra.mxu0 0
    %873 = vmatprep.subr.bf16.mxu0 0
    %874 = vmatpush2.bf16.msra.mxu0 0
    %875 = vmatprep.subr.bf16.mxu0 0
    %876 = vmatpush2.bf16.msra.mxu0 0
    %877 = vmatprep.subr.bf16.mxu0 0
    %878 = vmatpush2.bf16.msra.mxu0 0
    %879 = vmatprep.subr.bf16.mxu0 0
    %880 = vmatpush2.bf16.msra.mxu0 0
    %881 = vmatprep.subr.bf16.mxu0 0
    %882 = vmatpush2.bf16.msra.mxu0 0
    %883 = vmatprep.subr.bf16.mxu0 0
    %884 = vmatpush2.bf16.msra.mxu0 0
    %885 = vmatprep.subr.bf16.mxu0 0
    %886 = vmatpush2.bf16.msra.mxu0 0
    %887 = vmatprep.mubr.bf16.mxu0 0
    %888 = vmatmul.mubr.bf16.gmra.mxu0 %v653
    %v889 = vpop.f32.mrf.mxu0
    %v890 = vadd.f32 0.0, %v889
    %v891 = vpop.f32.mrf.mxu0
    %v892 = vpop.f32.mrf.mxu0
    %v893 = vpop.f32.mrf.mxu0
    %894 = vdwg.mxu0
    %v895 = vadd.f32 %v650, %v849
    %v896 = vxor.u32 %v895, 2147483648
    %v897 = vmul.f32 %v896, 1.442695
    %v898 = vpow.pop %v897
    %v899 = vadd.f32 %v898, 1.0
    %v900 = vrcp.pop %v899
    %v901 = vmul.f32 1.0, %v900
    %v902 = vadd.f32 %v651, %v851
    %v903 = vxor.u32 %v902, 2147483648
    %v904 = vmul.f32 %v903, 1.442695
    %v905 = vpow.pop %v904
    %v906 = vadd.f32 %v905, 1.0
    %v907 = vrcp.pop %v906
    %v908 = vmul.f32 1.0, %v907
    %v909 = vadd.f32 %v890, %v100
    %v910 = vmul.f32 %v901, %v909
    %v911 = vadd.f32 %v652, %v910
    %v912 = vtanh.pop %v911
    %v913 = vsub.f32 1.0, %v908
    %v914 = vmul.f32 %v913, %v912
    %v915 = vmul.f32 %v908, %v377
    %v916 = vadd.f32 %v914, %v915
    %s917 = scalar_lea.vmem [#allocation7], 144
    %v918 = vld [vmem:[%s917] sm:$0xff]
    %v919 = vld [vmem:[%s917 + $0x8] sm:$0xff]
    %v920 = vld [vmem:[%s917 + $0x10] sm:$0xff]
    %v921 = vpack.c.bf16 %v645, %v645
    %v922 = vld [vmem:[#allocation10] sm:$0xff]
    %v923 = vld [vmem:[#allocation10 + $0x8] sm:$0xf]
    %v924 = vld [vmem:[#allocation10 + $0xc] sm:$0xff]
    %v925 = vld [vmem:[#allocation10 + $0x14] sm:$0xf]
    %v926 = vld [vmem:[#allocation10 + $0x18] sm:$0xff]
    %v927 = vld [vmem:[#allocation10 + $0x20] sm:$0xf]
    %v928 = vld [vmem:[#allocation10 + $0x24] sm:$0xff]
    %v929 = vld [vmem:[#allocation10 + $0x2c] sm:$0xf]
    %v930 = vld [vmem:[#allocation10 + $0x30] sm:$0xff]
    %v931 = vld [vmem:[#allocation10 + $0x38] sm:$0xf]
    %v932 = vld [vmem:[#allocation10 + $0x3c] sm:$0xff]
    %v933 = vld [vmem:[#allocation10 + $0x44] sm:$0xf]
    %v934 = vld [vmem:[#allocation10 + $0x48] sm:$0xff]
    %v935 = vld [vmem:[#allocation10 + $0x50] sm:$0xf]
    %v936 = vld [vmem:[#allocation10 + $0x54] sm:$0xff]
    %v937 = vld [vmem:[#allocation10 + $0x5c] sm:$0xf]
    %v938 = vld [vmem:[#allocation10 + $0x60] sm:$0xff]
    %v939 = vld [vmem:[#allocation10 + $0x68] sm:$0xf]
    %v940 = vld [vmem:[#allocation10 + $0x6c] sm:$0xff]
    %v941 = vld [vmem:[#allocation10 + $0x74] sm:$0xf]
    %v942 = vld [vmem:[#allocation10 + $0x78] sm:$0xff]
    %v943 = vld [vmem:[#allocation10 + $0x80] sm:$0xf]
    %v944 = vld [vmem:[#allocation10 + $0x84] sm:$0xff]
    %v945 = vld [vmem:[#allocation10 + $0x8c] sm:$0xf]
    %v946 = vld [vmem:[#allocation10 + $0x90] sm:$0xff]
    %v947 = vld [vmem:[#allocation10 + $0x98] sm:$0xf]
    %v948 = vld [vmem:[#allocation10 + $0x9c] sm:$0xff]
    %v949 = vld [vmem:[#allocation10 + $0xa4] sm:$0xf]
    %v950 = vld [vmem:[#allocation10 + $0xa8] sm:$0xff]
    %v951 = vld [vmem:[#allocation10 + $0xb0] sm:$0xf]
    %v952 = vld [vmem:[#allocation10 + $0xb4] sm:$0xff]
    %v953 = vld [vmem:[#allocation10 + $0xbc] sm:$0xf]
    %v986 = vunpack.c.l.b16 %v922
    %v987 = vunpack.c.h.b16 %v922
    %v988 = vunpack.c.l.b16 %v923
    %v989 = vunpack.c.l.b16 %v924
    %v990 = vunpack.c.h.b16 %v924
    %v991 = vunpack.c.l.b16 %v925
    %v992 = vunpack.c.l.b16 %v926
    %v993 = vunpack.c.h.b16 %v926
    %v994 = vunpack.c.l.b16 %v927
    %v995 = vunpack.c.l.b16 %v928
    %v996 = vunpack.c.h.b16 %v928
    %v997 = vunpack.c.l.b16 %v929
    %v998 = vunpack.c.l.b16 %v930
    %v999 = vunpack.c.h.b16 %v930
    %v1000 = vunpack.c.l.b16 %v931
    %v1001 = vunpack.c.l.b16 %v932
    %v1002 = vunpack.c.h.b16 %v932
    %v1003 = vunpack.c.l.b16 %v933
    %v1004 = vunpack.c.l.b16 %v934
    %v1005 = vunpack.c.h.b16 %v934
    %v1006 = vunpack.c.l.b16 %v935
    %v1007 = vunpack.c.l.b16 %v936
    %v1008 = vunpack.c.h.b16 %v936
    %v1009 = vunpack.c.l.b16 %v937
    %v1010 = vunpack.c.l.b16 %v938
    %v1011 = vunpack.c.h.b16 %v938
    %v1012 = vunpack.c.l.b16 %v939
    %v1013 = vunpack.c.l.b16 %v940
    %v1014 = vunpack.c.h.b16 %v940
    %v1015 = vunpack.c.l.b16 %v941
    %v1016 = vunpack.c.l.b16 %v942
    %v1017 = vunpack.c.h.b16 %v942
    %v1018 = vunpack.c.l.b16 %v943
    %v1019 = vunpack.c.l.b16 %v944
    %v1020 = vunpack.c.h.b16 %v944
    %v1021 = vunpack.c.l.b16 %v945
    %v1022 = vunpack.c.l.b16 %v946
    %v1023 = vunpack.c.h.b16 %v946
    %v1024 = vunpack.c.l.b16 %v947
    %v1025 = vunpack.c.l.b16 %v948
    %v1026 = vunpack.c.h.b16 %v948
    %v1027 = vunpack.c.l.b16 %v949
    %v1028 = vunpack.c.l.b16 %v950
    %v1029 = vunpack.c.h.b16 %v950
    %v1030 = vunpack.c.l.b16 %v951
    %v1031 = vunpack.c.l.b16 %v952
    %v1032 = vunpack.c.h.b16 %v952
    %v1033 = vunpack.c.l.b16 %v953
    %v1034 = vpack.c.b16 %v989, %v986
    %v1035 = vpack.c.b16 %v990, %v987
    %v1036 = vpack.c.b16 %v991, %v988
    %v1037 = vpack.c.b16 %v995, %v992
    %v1038 = vpack.c.b16 %v996, %v993
    %v1039 = vpack.c.b16 %v997, %v994
    %v1040 = vpack.c.b16 %v1001, %v998
    %v1041 = vpack.c.b16 %v1002, %v999
    %v1042 = vpack.c.b16 %v1003, %v1000
    %v1043 = vpack.c.b16 %v1007, %v1004
    %v1044 = vpack.c.b16 %v1008, %v1005
    %v1045 = vpack.c.b16 %v1009, %v1006
    %v1046 = vpack.c.b16 %v1013, %v1010
    %v1047 = vpack.c.b16 %v1014, %v1011
    %v1048 = vpack.c.b16 %v1015, %v1012
    %v1049 = vpack.c.b16 %v1019, %v1016
    %v1050 = vpack.c.b16 %v1020, %v1017
    %v1051 = vpack.c.b16 %v1021, %v1018
    %v1052 = vpack.c.b16 %v1025, %v1022
    %v1053 = vpack.c.b16 %v1026, %v1023
    %v1054 = vpack.c.b16 %v1027, %v1024
    %v1055 = vpack.c.b16 %v1031, %v1028
    %v1056 = vpack.c.b16 %v1032, %v1029
    %v1057 = vpack.c.b16 %v1033, %v1030
    %1082 = vmatprep.subr.bf16.mxu0 %v1056
    %1083 = vmatpush1.bf16.msra.mxu0 %v1055
    %1084 = vmatprep.subr.bf16.mxu0 %v1053
    %1085 = vmatpush1.bf16.msra.mxu0 %v1052
    %1086 = vmatprep.subr.bf16.mxu0 %v1050
    %1087 = vmatpush1.bf16.msra.mxu0 %v1049
    %1088 = vmatprep.subr.bf16.mxu0 %v1047
    %1089 = vmatpush1.bf16.msra.mxu0 %v1046
    %1090 = vmatprep.subr.bf16.mxu0 %v1044
    %1091 = vmatpush1.bf16.msra.mxu0 %v1043
    %1092 = vmatprep.subr.bf16.mxu0 %v1041
    %1093 = vmatpush1.bf16.msra.mxu0 %v1040
    %1094 = vmatprep.subr.bf16.mxu0 %v1038
    %1095 = vmatpush1.bf16.msra.mxu0 %v1037
    %1096 = vmatprep.subr.bf16.mxu0 %v1035
    %1097 = vmatpush1.bf16.msra.mxu0 %v1034
    %1098 = vmatprep.subr.bf16.mxu0 0
    %1099 = vmatpush2.bf16.msra.mxu0 0
    %1100 = vmatprep.subr.bf16.mxu0 0
    %1101 = vmatpush2.bf16.msra.mxu0 0
    %1102 = vmatprep.subr.bf16.mxu0 0
    %1103 = vmatpush2.bf16.msra.mxu0 0
    %1104 = vmatprep.subr.bf16.mxu0 0
    %1105 = vmatpush2.bf16.msra.mxu0 0
    %1106 = vmatprep.subr.bf16.mxu0 0
    %1107 = vmatpush2.bf16.msra.mxu0 0
    %1108 = vmatprep.subr.bf16.mxu0 0
    %1109 = vmatpush2.bf16.msra.mxu0 0
    %1110 = vmatprep.subr.bf16.mxu0 0
    %1111 = vmatpush2.bf16.msra.mxu0 0
    %1112 = vmatprep.subr.bf16.mxu0 0
    %1113 = vmatpush2.bf16.msra.mxu0 0
    %1114 = vmatprep.mubr.bf16.mxu0 0
    %1115 = vmatmul.mubr.bf16.gmra.mxu0 %v921
    %v1116 = vpop.f32.mrf.mxu0
    %v1117 = vadd.f32 0.0, %v1116
    %v1118 = vpop.f32.mrf.mxu0
    %v1119 = vadd.f32 0.0, %v1118
    %v1120 = vpop.f32.mrf.mxu0
    %v1121 = vpop.f32.mrf.mxu0
    %1122 = vdwg.mxu0
    %1123 = vmatprep.subr.bf16.mxu0 0
    %1124 = vmatpush1.bf16.msra.mxu0 %v1057
    %1125 = vmatprep.subr.bf16.mxu0 0
    %1126 = vmatpush1.bf16.msra.mxu0 %v1054
    %1127 = vmatprep.subr.bf16.mxu0 0
    %1128 = vmatpush1.bf16.msra.mxu0 %v1051
    %1129 = vmatprep.subr.bf16.mxu0 0
    %1130 = vmatpush1.bf16.msra.mxu0 %v1048
    %1131 = vmatprep.subr.bf16.mxu0 0
    %1132 = vmatpush1.bf16.msra.mxu0 %v1045
    %1133 = vmatprep.subr.bf16.mxu0 0
    %1134 = vmatpush1.bf16.msra.mxu0 %v1042
    %1135 = vmatprep.subr.bf16.mxu0 0
    %1136 = vmatpush1.bf16.msra.mxu0 %v1039
    %1137 = vmatprep.subr.bf16.mxu0 0
    %1138 = vmatpush1.bf16.msra.mxu0 %v1036
    %1139 = vmatprep.subr.bf16.mxu0 0
    %1140 = vmatpush2.bf16.msra.mxu0 0
    %1141 = vmatprep.subr.bf16.mxu0 0
    %1142 = vmatpush2.bf16.msra.mxu0 0
    %1143 = vmatprep.subr.bf16.mxu0 0
    %1144 = vmatpush2.bf16.msra.mxu0 0
    %1145 = vmatprep.subr.bf16.mxu0 0
    %1146 = vmatpush2.bf16.msra.mxu0 0
    %1147 = vmatprep.subr.bf16.mxu0 0
    %1148 = vmatpush2.bf16.msra.mxu0 0
    %1149 = vmatprep.subr.bf16.mxu0 0
    %1150 = vmatpush2.bf16.msra.mxu0 0
    %1151 = vmatprep.subr.bf16.mxu0 0
    %1152 = vmatpush2.bf16.msra.mxu0 0
    %1153 = vmatprep.subr.bf16.mxu0 0
    %1154 = vmatpush2.bf16.msra.mxu0 0
    %1155 = vmatprep.mubr.bf16.mxu0 0
    %1156 = vmatmul.mubr.bf16.gmra.mxu0 %v921
    %v1157 = vpop.f32.mrf.mxu0
    %v1158 = vadd.f32 0.0, %v1157
    %v1159 = vpop.f32.mrf.mxu0
    %v1160 = vpop.f32.mrf.mxu0
    %v1161 = vpop.f32.mrf.mxu0
    %1162 = vdwg.mxu0
    %v1163 = vadd.f32 %v918, %v1117
    %v1164 = vxor.u32 %v1163, 2147483648
    %v1165 = vmul.f32 %v1164, 1.442695
    %v1166 = vpow.pop %v1165
    %v1167 = vadd.f32 %v1166, 1.0
    %v1168 = vrcp.pop %v1167
    %v1169 = vmul.f32 1.0, %v1168
    %v1170 = vadd.f32 %v919, %v1119
    %v1171 = vxor.u32 %v1170, 2147483648
    %v1172 = vmul.f32 %v1171, 1.442695
    %v1173 = vpow.pop %v1172
    %v1174 = vadd.f32 %v1173, 1.0
    %v1175 = vrcp.pop %v1174
    %v1176 = vmul.f32 1.0, %v1175
    %v1177 = vadd.f32 %v1158, %v107
    %v1178 = vmul.f32 %v1169, %v1177
    %v1179 = vadd.f32 %v920, %v1178
    %v1180 = vtanh.pop %v1179
    %v1181 = vsub.f32 1.0, %v1176
    %v1182 = vmul.f32 %v1181, %v1180
    %v1183 = vmul.f32 %v1176, %v645
    %v1184 = vadd.f32 %v1182, %v1183
    %s1185 = scalar_lea.vmem [#allocation12], 8
    %1186 = vst [vmem:[%s1185] sm:$0xff] %v916
    %s1187 = scalar_lea.vmem [#allocation13], 48
    %1188 = vst [vmem:[%s1187] sm:$0xff] %v1184
    %s1189 = scalar_lea.vmem [#allocation4], 48
    %v1190 = vld [vmem:[%s1189] sm:$0xff]
    %v1191 = vld [vmem:[%s1189 + $0x8] sm:$0xff]
    %v1192 = vld [vmem:[%s1189 + $0x10] sm:$0xff]
    %v1193 = vpack.c.bf16 %v916, %v916
    %v1194 = vld [vmem:[#allocation9] sm:$0xff]
    %v1195 = vld [vmem:[#allocation9 + $0x8] sm:$0xf]
    %v1196 = vld [vmem:[#allocation9 + $0xc] sm:$0xff]
    %v1197 = vld [vmem:[#allocation9 + $0x14] sm:$0xf]
    %v1198 = vld [vmem:[#allocation9 + $0x18] sm:$0xff]
    %v1199 = vld [vmem:[#allocation9 + $0x20] sm:$0xf]
    %v1200 = vld [vmem:[#allocation9 + $0x24] sm:$0xff]
    %v1201 = vld [vmem:[#allocation9 + $0x2c] sm:$0xf]
    %v1202 = vld [vmem:[#allocation9 + $0x30] sm:$0xff]
    %v1203 = vld [vmem:[#allocation9 + $0x38] sm:$0xf]
    %v1204 = vld [vmem:[#allocation9 + $0x3c] sm:$0xff]
    %v1205 = vld [vmem:[#allocation9 + $0x44] sm:$0xf]
    %v1206 = vld [vmem:[#allocation9 + $0x48] sm:$0xff]
    %v1207 = vld [vmem:[#allocation9 + $0x50] sm:$0xf]
    %v1208 = vld [vmem:[#allocation9 + $0x54] sm:$0xff]
    %v1209 = vld [vmem:[#allocation9 + $0x5c] sm:$0xf]
    %v1210 = vld [vmem:[#allocation9 + $0x60] sm:$0xff]
    %v1211 = vld [vmem:[#allocation9 + $0x68] sm:$0xf]
    %v1212 = vld [vmem:[#allocation9 + $0x6c] sm:$0xff]
    %v1213 = vld [vmem:[#allocation9 + $0x74] sm:$0xf]
    %v1214 = vld [vmem:[#allocation9 + $0x78] sm:$0xff]
    %v1215 = vld [vmem:[#allocation9 + $0x80] sm:$0xf]
    %v1216 = vld [vmem:[#allocation9 + $0x84] sm:$0xff]
    %v1217 = vld [vmem:[#allocation9 + $0x8c] sm:$0xf]
    %v1218 = vld [vmem:[#allocation9 + $0x90] sm:$0xff]
    %v1219 = vld [vmem:[#allocation9 + $0x98] sm:$0xf]
    %v1220 = vld [vmem:[#allocation9 + $0x9c] sm:$0xff]
    %v1221 = vld [vmem:[#allocation9 + $0xa4] sm:$0xf]
    %v1222 = vld [vmem:[#allocation9 + $0xa8] sm:$0xff]
    %v1223 = vld [vmem:[#allocation9 + $0xb0] sm:$0xf]
    %v1224 = vld [vmem:[#allocation9 + $0xb4] sm:$0xff]
    %v1225 = vld [vmem:[#allocation9 + $0xbc] sm:$0xf]
    %v1258 = vunpack.c.l.b16 %v1194
    %v1259 = vunpack.c.h.b16 %v1194
    %v1260 = vunpack.c.l.b16 %v1195
    %v1261 = vunpack.c.l.b16 %v1196
    %v1262 = vunpack.c.h.b16 %v1196
    %v1263 = vunpack.c.l.b16 %v1197
    %v1264 = vunpack.c.l.b16 %v1198
    %v1265 = vunpack.c.h.b16 %v1198
    %v1266 = vunpack.c.l.b16 %v1199
    %v1267 = vunpack.c.l.b16 %v1200
    %v1268 = vunpack.c.h.b16 %v1200
    %v1269 = vunpack.c.l.b16 %v1201
    %v1270 = vunpack.c.l.b16 %v1202
    %v1271 = vunpack.c.h.b16 %v1202
    %v1272 = vunpack.c.l.b16 %v1203
    %v1273 = vunpack.c.l.b16 %v1204
    %v1274 = vunpack.c.h.b16 %v1204
    %v1275 = vunpack.c.l.b16 %v1205
    %v1276 = vunpack.c.l.b16 %v1206
    %v1277 = vunpack.c.h.b16 %v1206
    %v1278 = vunpack.c.l.b16 %v1207
    %v1279 = vunpack.c.l.b16 %v1208
    %v1280 = vunpack.c.h.b16 %v1208
    %v1281 = vunpack.c.l.b16 %v1209
    %v1282 = vunpack.c.l.b16 %v1210
    %v1283 = vunpack.c.h.b16 %v1210
    %v1284 = vunpack.c.l.b16 %v1211
    %v1285 = vunpack.c.l.b16 %v1212
    %v1286 = vunpack.c.h.b16 %v1212
    %v1287 = vunpack.c.l.b16 %v1213
    %v1288 = vunpack.c.l.b16 %v1214
    %v1289 = vunpack.c.h.b16 %v1214
    %v1290 = vunpack.c.l.b16 %v1215
    %v1291 = vunpack.c.l.b16 %v1216
    %v1292 = vunpack.c.h.b16 %v1216
    %v1293 = vunpack.c.l.b16 %v1217
    %v1294 = vunpack.c.l.b16 %v1218
    %v1295 = vunpack.c.h.b16 %v1218
    %v1296 = vunpack.c.l.b16 %v1219
    %v1297 = vunpack.c.l.b16 %v1220
    %v1298 = vunpack.c.h.b16 %v1220
    %v1299 = vunpack.c.l.b16 %v1221
    %v1300 = vunpack.c.l.b16 %v1222
    %v1301 = vunpack.c.h.b16 %v1222
    %v1302 = vunpack.c.l.b16 %v1223
    %v1303 = vunpack.c.l.b16 %v1224
    %v1304 = vunpack.c.h.b16 %v1224
    %v1305 = vunpack.c.l.b16 %v1225
    %v1306 = vpack.c.b16 %v1261, %v1258
    %v1307 = vpack.c.b16 %v1262, %v1259
    %v1308 = vpack.c.b16 %v1263, %v1260
    %v1309 = vpack.c.b16 %v1267, %v1264
    %v1310 = vpack.c.b16 %v1268, %v1265
    %v1311 = vpack.c.b16 %v1269, %v1266
    %v1312 = vpack.c.b16 %v1273, %v1270
    %v1313 = vpack.c.b16 %v1274, %v1271
    %v1314 = vpack.c.b16 %v1275, %v1272
    %v1315 = vpack.c.b16 %v1279, %v1276
    %v1316 = vpack.c.b16 %v1280, %v1277
    %v1317 = vpack.c.b16 %v1281, %v1278
    %v1318 = vpack.c.b16 %v1285, %v1282
    %v1319 = vpack.c.b16 %v1286, %v1283
    %v1320 = vpack.c.b16 %v1287, %v1284
    %v1321 = vpack.c.b16 %v1291, %v1288
    %v1322 = vpack.c.b16 %v1292, %v1289
    %v1323 = vpack.c.b16 %v1293, %v1290
    %v1324 = vpack.c.b16 %v1297, %v1294
    %v1325 = vpack.c.b16 %v1298, %v1295
    %v1326 = vpack.c.b16 %v1299, %v1296
    %v1327 = vpack.c.b16 %v1303, %v1300
    %v1328 = vpack.c.b16 %v1304, %v1301
    %v1329 = vpack.c.b16 %v1305, %v1302
    %1354 = vmatprep.subr.bf16.mxu0 %v1328
    %1355 = vmatpush1.bf16.msra.mxu0 %v1327
    %1356 = vmatprep.subr.bf16.mxu0 %v1325
    %1357 = vmatpush1.bf16.msra.mxu0 %v1324
    %1358 = vmatprep.subr.bf16.mxu0 %v1322
    %1359 = vmatpush1.bf16.msra.mxu0 %v1321
    %1360 = vmatprep.subr.bf16.mxu0 %v1319
    %1361 = vmatpush1.bf16.msra.mxu0 %v1318
    %1362 = vmatprep.subr.bf16.mxu0 %v1316
    %1363 = vmatpush1.bf16.msra.mxu0 %v1315
    %1364 = vmatprep.subr.bf16.mxu0 %v1313
    %1365 = vmatpush1.bf16.msra.mxu0 %v1312
    %1366 = vmatprep.subr.bf16.mxu0 %v1310
    %1367 = vmatpush1.bf16.msra.mxu0 %v1309
    %1368 = vmatprep.subr.bf16.mxu0 %v1307
    %1369 = vmatpush1.bf16.msra.mxu0 %v1306
    %1370 = vmatprep.subr.bf16.mxu0 0
    %1371 = vmatpush2.bf16.msra.mxu0 0
    %1372 = vmatprep.subr.bf16.mxu0 0
    %1373 = vmatpush2.bf16.msra.mxu0 0
    %1374 = vmatprep.subr.bf16.mxu0 0
    %1375 = vmatpush2.bf16.msra.mxu0 0
    %1376 = vmatprep.subr.bf16.mxu0 0
    %1377 = vmatpush2.bf16.msra.mxu0 0
    %1378 = vmatprep.subr.bf16.mxu0 0
    %1379 = vmatpush2.bf16.msra.mxu0 0
    %1380 = vmatprep.subr.bf16.mxu0 0
    %1381 = vmatpush2.bf16.msra.mxu0 0
    %1382 = vmatprep.subr.bf16.mxu0 0
    %1383 = vmatpush2.bf16.msra.mxu0 0
    %1384 = vmatprep.subr.bf16.mxu0 0
    %1385 = vmatpush2.bf16.msra.mxu0 0
    %1386 = vmatprep.mubr.bf16.mxu0 0
    %1387 = vmatmul.mubr.bf16.gmra.mxu0 %v1193
    %v1388 = vpop.f32.mrf.mxu0
    %v1389 = vadd.f32 0.0, %v1388
    %v1390 = vpop.f32.mrf.mxu0
    %v1391 = vadd.f32 0.0, %v1390
    %v1392 = vpop.f32.mrf.mxu0
    %v1393 = vpop.f32.mrf.mxu0
    %1394 = vdwg.mxu0
    %1395 = vmatprep.subr.bf16.mxu0 0
    %1396 = vmatpush1.bf16.msra.mxu0 %v1329
    %1397 = vmatprep.subr.bf16.mxu0 0
    %1398 = vmatpush1.bf16.msra.mxu0 %v1326
    %1399 = vmatprep.subr.bf16.mxu0 0
    %1400 = vmatpush1.bf16.msra.mxu0 %v1323
    %1401 = vmatprep.subr.bf16.mxu0 0
    %1402 = vmatpush1.bf16.msra.mxu0 %v1320
    %1403 = vmatprep.subr.bf16.mxu0 0
    %1404 = vmatpush1.bf16.msra.mxu0 %v1317
    %1405 = vmatprep.subr.bf16.mxu0 0
    %1406 = vmatpush1.bf16.msra.mxu0 %v1314
    %1407 = vmatprep.subr.bf16.mxu0 0
    %1408 = vmatpush1.bf16.msra.mxu0 %v1311
    %1409 = vmatprep.subr.bf16.mxu0 0
    %1410 = vmatpush1.bf16.msra.mxu0 %v1308
    %1411 = vmatprep.subr.bf16.mxu0 0
    %1412 = vmatpush2.bf16.msra.mxu0 0
    %1413 = vmatprep.subr.bf16.mxu0 0
    %1414 = vmatpush2.bf16.msra.mxu0 0
    %1415 = vmatprep.subr.bf16.mxu0 0
    %1416 = vmatpush2.bf16.msra.mxu0 0
    %1417 = vmatprep.subr.bf16.mxu0 0
    %1418 = vmatpush2.bf16.msra.mxu0 0
    %1419 = vmatprep.subr.bf16.mxu0 0
    %1420 = vmatpush2.bf16.msra.mxu0 0
    %1421 = vmatprep.subr.bf16.mxu0 0
    %1422 = vmatpush2.bf16.msra.mxu0 0
    %1423 = vmatprep.subr.bf16.mxu0 0
    %1424 = vmatpush2.bf16.msra.mxu0 0
    %1425 = vmatprep.subr.bf16.mxu0 0
    %1426 = vmatpush2.bf16.msra.mxu0 0
    %1427 = vmatprep.mubr.bf16.mxu0 0
    %1428 = vmatmul.mubr.bf16.gmra.mxu0 %v1193
    %v1429 = vpop.f32.mrf.mxu0
    %v1430 = vadd.f32 0.0, %v1429
    %v1431 = vpop.f32.mrf.mxu0
    %v1432 = vpop.f32.mrf.mxu0
    %v1433 = vpop.f32.mrf.mxu0
    %1434 = vdwg.mxu0
    %v1435 = vadd.f32 %v1190, %v1389
    %v1436 = vxor.u32 %v1435, 2147483648
    %v1437 = vmul.f32 %v1436, 1.442695
    %v1438 = vpow.pop %v1437
    %v1439 = vadd.f32 %v1438, 1.0
    %v1440 = vrcp.pop %v1439
    %v1441 = vmul.f32 1.0, %v1440
    %v1442 = vadd.f32 %v1191, %v1391
    %v1443 = vxor.u32 %v1442, 2147483648
    %v1444 = vmul.f32 %v1443, 1.442695
    %v1445 = vpow.pop %v1444
    %v1446 = vadd.f32 %v1445, 1.0
    %v1447 = vrcp.pop %v1446
    %v1448 = vmul.f32 1.0, %v1447
    %v1449 = vadd.f32 %v1430, %v100
    %v1450 = vmul.f32 %v1441, %v1449
    %v1451 = vadd.f32 %v1192, %v1450
    %v1452 = vtanh.pop %v1451
    %v1453 = vsub.f32 1.0, %v1448
    %v1454 = vmul.f32 %v1453, %v1452
    %v1455 = vmul.f32 %v1448, %v916
    %v1456 = vadd.f32 %v1454, %v1455
    %s1457 = scalar_lea.vmem [#allocation7], 120
    %v1458 = vld [vmem:[%s1457] sm:$0xff]
    %v1459 = vld [vmem:[%s1457 + $0x8] sm:$0xff]
    %v1460 = vld [vmem:[%s1457 + $0x10] sm:$0xff]
    %v1461 = vpack.c.bf16 %v1184, %v1184
    %v1462 = vld [vmem:[#allocation10] sm:$0xff]
    %v1463 = vld [vmem:[#allocation10 + $0x8] sm:$0xf]
    %v1464 = vld [vmem:[#allocation10 + $0xc] sm:$0xff]
    %v1465 = vld [vmem:[#allocation10 + $0x14] sm:$0xf]
    %v1466 = vld [vmem:[#allocation10 + $0x18] sm:$0xff]
    %v1467 = vld [vmem:[#allocation10 + $0x20] sm:$0xf]
    %v1468 = vld [vmem:[#allocation10 + $0x24] sm:$0xff]
    %v1469 = vld [vmem:[#allocation10 + $0x2c] sm:$0xf]
    %v1470 = vld [vmem:[#allocation10 + $0x30] sm:$0xff]
    %v1471 = vld [vmem:[#allocation10 + $0x38] sm:$0xf]
    %v1472 = vld [vmem:[#allocation10 + $0x3c] sm:$0xff]
    %v1473 = vld [vmem:[#allocation10 + $0x44] sm:$0xf]
    %v1474 = vld [vmem:[#allocation10 + $0x48] sm:$0xff]
    %v1475 = vld [vmem:[#allocation10 + $0x50] sm:$0xf]
    %v1476 = vld [vmem:[#allocation10 + $0x54] sm:$0xff]
    %v1477 = vld [vmem:[#allocation10 + $0x5c] sm:$0xf]
    %v1478 = vld [vmem:[#allocation10 + $0x60] sm:$0xff]
    %v1479 = vld [vmem:[#allocation10 + $0x68] sm:$0xf]
    %v1480 = vld [vmem:[#allocation10 + $0x6c] sm:$0xff]
    %v1481 = vld [vmem:[#allocation10 + $0x74] sm:$0xf]
    %v1482 = vld [vmem:[#allocation10 + $0x78] sm:$0xff]
    %v1483 = vld [vmem:[#allocation10 + $0x80] sm:$0xf]
    %v1484 = vld [vmem:[#allocation10 + $0x84] sm:$0xff]
    %v1485 = vld [vmem:[#allocation10 + $0x8c] sm:$0xf]
    %v1486 = vld [vmem:[#allocation10 + $0x90] sm:$0xff]
    %v1487 = vld [vmem:[#allocation10 + $0x98] sm:$0xf]
    %v1488 = vld [vmem:[#allocation10 + $0x9c] sm:$0xff]
    %v1489 = vld [vmem:[#allocation10 + $0xa4] sm:$0xf]
    %v1490 = vld [vmem:[#allocation10 + $0xa8] sm:$0xff]
    %v1491 = vld [vmem:[#allocation10 + $0xb0] sm:$0xf]
    %v1492 = vld [vmem:[#allocation10 + $0xb4] sm:$0xff]
    %v1493 = vld [vmem:[#allocation10 + $0xbc] sm:$0xf]
    %v1526 = vunpack.c.l.b16 %v1462
    %v1527 = vunpack.c.h.b16 %v1462
    %v1528 = vunpack.c.l.b16 %v1463
    %v1529 = vunpack.c.l.b16 %v1464
    %v1530 = vunpack.c.h.b16 %v1464
    %v1531 = vunpack.c.l.b16 %v1465
    %v1532 = vunpack.c.l.b16 %v1466
    %v1533 = vunpack.c.h.b16 %v1466
    %v1534 = vunpack.c.l.b16 %v1467
    %v1535 = vunpack.c.l.b16 %v1468
    %v1536 = vunpack.c.h.b16 %v1468
    %v1537 = vunpack.c.l.b16 %v1469
    %v1538 = vunpack.c.l.b16 %v1470
    %v1539 = vunpack.c.h.b16 %v1470
    %v1540 = vunpack.c.l.b16 %v1471
    %v1541 = vunpack.c.l.b16 %v1472
    %v1542 = vunpack.c.h.b16 %v1472
    %v1543 = vunpack.c.l.b16 %v1473
    %v1544 = vunpack.c.l.b16 %v1474
    %v1545 = vunpack.c.h.b16 %v1474
    %v1546 = vunpack.c.l.b16 %v1475
    %v1547 = vunpack.c.l.b16 %v1476
    %v1548 = vunpack.c.h.b16 %v1476
    %v1549 = vunpack.c.l.b16 %v1477
    %v1550 = vunpack.c.l.b16 %v1478
    %v1551 = vunpack.c.h.b16 %v1478
    %v1552 = vunpack.c.l.b16 %v1479
    %v1553 = vunpack.c.l.b16 %v1480
    %v1554 = vunpack.c.h.b16 %v1480
    %v1555 = vunpack.c.l.b16 %v1481
    %v1556 = vunpack.c.l.b16 %v1482
    %v1557 = vunpack.c.h.b16 %v1482
    %v1558 = vunpack.c.l.b16 %v1483
    %v1559 = vunpack.c.l.b16 %v1484
    %v1560 = vunpack.c.h.b16 %v1484
    %v1561 = vunpack.c.l.b16 %v1485
    %v1562 = vunpack.c.l.b16 %v1486
    %v1563 = vunpack.c.h.b16 %v1486
    %v1564 = vunpack.c.l.b16 %v1487
    %v1565 = vunpack.c.l.b16 %v1488
    %v1566 = vunpack.c.h.b16 %v1488
    %v1567 = vunpack.c.l.b16 %v1489
    %v1568 = vunpack.c.l.b16 %v1490
    %v1569 = vunpack.c.h.b16 %v1490
    %v1570 = vunpack.c.l.b16 %v1491
    %v1571 = vunpack.c.l.b16 %v1492
    %v1572 = vunpack.c.h.b16 %v1492
    %v1573 = vunpack.c.l.b16 %v1493
    %v1574 = vpack.c.b16 %v1529, %v1526
    %v1575 = vpack.c.b16 %v1530, %v1527
    %v1576 = vpack.c.b16 %v1531, %v1528
    %v1577 = vpack.c.b16 %v1535, %v1532
    %v1578 = vpack.c.b16 %v1536, %v1533
    %v1579 = vpack.c.b16 %v1537, %v1534
    %v1580 = vpack.c.b16 %v1541, %v1538
    %v1581 = vpack.c.b16 %v1542, %v1539
    %v1582 = vpack.c.b16 %v1543, %v1540
    %v1583 = vpack.c.b16 %v1547, %v1544
    %v1584 = vpack.c.b16 %v1548, %v1545
    %v1585 = vpack.c.b16 %v1549, %v1546
    %v1586 = vpack.c.b16 %v1553, %v1550
    %v1587 = vpack.c.b16 %v1554, %v1551
    %v1588 = vpack.c.b16 %v1555, %v1552
    %v1589 = vpack.c.b16 %v1559, %v1556
    %v1590 = vpack.c.b16 %v1560, %v1557
    %v1591 = vpack.c.b16 %v1561, %v1558
    %v1592 = vpack.c.b16 %v1565, %v1562
    %v1593 = vpack.c.b16 %v1566, %v1563
    %v1594 = vpack.c.b16 %v1567, %v1564
    %v1595 = vpack.c.b16 %v1571, %v1568
    %v1596 = vpack.c.b16 %v1572, %v1569
    %v1597 = vpack.c.b16 %v1573, %v1570
    %1622 = vmatprep.subr.bf16.mxu0 %v1596
    %1623 = vmatpush1.bf16.msra.mxu0 %v1595
    %1624 = vmatprep.subr.bf16.mxu0 %v1593
    %1625 = vmatpush1.bf16.msra.mxu0 %v1592
    %1626 = vmatprep.subr.bf16.mxu0 %v1590
    %1627 = vmatpush1.bf16.msra.mxu0 %v1589
    %1628 = vmatprep.subr.bf16.mxu0 %v1587
    %1629 = vmatpush1.bf16.msra.mxu0 %v1586
    %1630 = vmatprep.subr.bf16.mxu0 %v1584
    %1631 = vmatpush1.bf16.msra.mxu0 %v1583
    %1632 = vmatprep.subr.bf16.mxu0 %v1581
    %1633 = vmatpush1.bf16.msra.mxu0 %v1580
    %1634 = vmatprep.subr.bf16.mxu0 %v1578
    %1635 = vmatpush1.bf16.msra.mxu0 %v1577
    %1636 = vmatprep.subr.bf16.mxu0 %v1575
    %1637 = vmatpush1.bf16.msra.mxu0 %v1574
    %1638 = vmatprep.subr.bf16.mxu0 0
    %1639 = vmatpush2.bf16.msra.mxu0 0
    %1640 = vmatprep.subr.bf16.mxu0 0
    %1641 = vmatpush2.bf16.msra.mxu0 0
    %1642 = vmatprep.subr.bf16.mxu0 0
    %1643 = vmatpush2.bf16.msra.mxu0 0
    %1644 = vmatprep.subr.bf16.mxu0 0
    %1645 = vmatpush2.bf16.msra.mxu0 0
    %1646 = vmatprep.subr.bf16.mxu0 0
    %1647 = vmatpush2.bf16.msra.mxu0 0
    %1648 = vmatprep.subr.bf16.mxu0 0
    %1649 = vmatpush2.bf16.msra.mxu0 0
    %1650 = vmatprep.subr.bf16.mxu0 0
    %1651 = vmatpush2.bf16.msra.mxu0 0
    %1652 = vmatprep.subr.bf16.mxu0 0
    %1653 = vmatpush2.bf16.msra.mxu0 0
    %1654 = vmatprep.mubr.bf16.mxu0 0
    %1655 = vmatmul.mubr.bf16.gmra.mxu0 %v1461
    %v1656 = vpop.f32.mrf.mxu0
    %v1657 = vadd.f32 0.0, %v1656
    %v1658 = vpop.f32.mrf.mxu0
    %v1659 = vadd.f32 0.0, %v1658
    %v1660 = vpop.f32.mrf.mxu0
    %v1661 = vpop.f32.mrf.mxu0
    %1662 = vdwg.mxu0
    %1663 = vmatprep.subr.bf16.mxu0 0
    %1664 = vmatpush1.bf16.msra.mxu0 %v1597
    %1665 = vmatprep.subr.bf16.mxu0 0
    %1666 = vmatpush1.bf16.msra.mxu0 %v1594
    %1667 = vmatprep.subr.bf16.mxu0 0
    %1668 = vmatpush1.bf16.msra.mxu0 %v1591
    %1669 = vmatprep.subr.bf16.mxu0 0
    %1670 = vmatpush1.bf16.msra.mxu0 %v1588
    %1671 = vmatprep.subr.bf16.mxu0 0
    %1672 = vmatpush1.bf16.msra.mxu0 %v1585
    %1673 = vmatprep.subr.bf16.mxu0 0
    %1674 = vmatpush1.bf16.msra.mxu0 %v1582
    %1675 = vmatprep.subr.bf16.mxu0 0
    %1676 = vmatpush1.bf16.msra.mxu0 %v1579
    %1677 = vmatprep.subr.bf16.mxu0 0
    %1678 = vmatpush1.bf16.msra.mxu0 %v1576
    %1679 = vmatprep.subr.bf16.mxu0 0
    %1680 = vmatpush2.bf16.msra.mxu0 0
    %1681 = vmatprep.subr.bf16.mxu0 0
    %1682 = vmatpush2.bf16.msra.mxu0 0
    %1683 = vmatprep.subr.bf16.mxu0 0
    %1684 = vmatpush2.bf16.msra.mxu0 0
    %1685 = vmatprep.subr.bf16.mxu0 0
    %1686 = vmatpush2.bf16.msra.mxu0 0
    %1687 = vmatprep.subr.bf16.mxu0 0
    %1688 = vmatpush2.bf16.msra.mxu0 0
    %1689 = vmatprep.subr.bf16.mxu0 0
    %1690 = vmatpush2.bf16.msra.mxu0 0
    %1691 = vmatprep.subr.bf16.mxu0 0
    %1692 = vmatpush2.bf16.msra.mxu0 0
    %1693 = vmatprep.subr.bf16.mxu0 0
    %1694 = vmatpush2.bf16.msra.mxu0 0
    %1695 = vmatprep.mubr.bf16.mxu0 0
    %1696 = vmatmul.mubr.bf16.gmra.mxu0 %v1461
    %v1697 = vpop.f32.mrf.mxu0
    %v1698 = vadd.f32 0.0, %v1697
    %v1699 = vpop.f32.mrf.mxu0
    %v1700 = vpop.f32.mrf.mxu0
    %v1701 = vpop.f32.mrf.mxu0
    %1702 = vdwg.mxu0
    %v1703 = vadd.f32 %v1458, %v1657
    %v1704 = vxor.u32 %v1703, 2147483648
    %v1705 = vmul.f32 %v1704, 1.442695
    %v1706 = vpow.pop %v1705
    %v1707 = vadd.f32 %v1706, 1.0
    %v1708 = vrcp.pop %v1707
    %v1709 = vmul.f32 1.0, %v1708
    %v1710 = vadd.f32 %v1459, %v1659
    %v1711 = vxor.u32 %v1710, 2147483648
    %v1712 = vmul.f32 %v1711, 1.442695
    %v1713 = vpow.pop %v1712
    %v1714 = vadd.f32 %v1713, 1.0
    %v1715 = vrcp.pop %v1714
    %v1716 = vmul.f32 1.0, %v1715
    %v1717 = vadd.f32 %v1698, %v107
    %v1718 = vmul.f32 %v1709, %v1717
    %v1719 = vadd.f32 %v1460, %v1718
    %v1720 = vtanh.pop %v1719
    %v1721 = vsub.f32 1.0, %v1716
    %v1722 = vmul.f32 %v1721, %v1720
    %v1723 = vmul.f32 %v1716, %v1184
    %v1724 = vadd.f32 %v1722, %v1723
    %s1725 = scalar_lea.vmem [#allocation12], 16
    %1726 = vst [vmem:[%s1725] sm:$0xff] %v1456
    %s1727 = scalar_lea.vmem [#allocation13], 40
    %1728 = vst [vmem:[%s1727] sm:$0xff] %v1724
    %s1729 = scalar_lea.vmem [#allocation4], 72
    %v1730 = vld [vmem:[%s1729] sm:$0xff]
    %v1731 = vld [vmem:[%s1729 + $0x8] sm:$0xff]
    %v1732 = vld [vmem:[%s1729 + $0x10] sm:$0xff]
    %v1733 = vpack.c.bf16 %v1456, %v1456
    %v1734 = vld [vmem:[#allocation9] sm:$0xff]
    %v1735 = vld [vmem:[#allocation9 + $0x8] sm:$0xf]
    %v1736 = vld [vmem:[#allocation9 + $0xc] sm:$0xff]
    %v1737 = vld [vmem:[#allocation9 + $0x14] sm:$0xf]
    %v1738 = vld [vmem:[#allocation9 + $0x18] sm:$0xff]
    %v1739 = vld [vmem:[#allocation9 + $0x20] sm:$0xf]
    %v1740 = vld [vmem:[#allocation9 + $0x24] sm:$0xff]
    %v1741 = vld [vmem:[#allocation9 + $0x2c] sm:$0xf]
    %v1742 = vld [vmem:[#allocation9 + $0x30] sm:$0xff]
    %v1743 = vld [vmem:[#allocation9 + $0x38] sm:$0xf]
    %v1744 = vld [vmem:[#allocation9 + $0x3c] sm:$0xff]
    %v1745 = vld [vmem:[#allocation9 + $0x44] sm:$0xf]
    %v1746 = vld [vmem:[#allocation9 + $0x48] sm:$0xff]
    %v1747 = vld [vmem:[#allocation9 + $0x50] sm:$0xf]
    %v1748 = vld [vmem:[#allocation9 + $0x54] sm:$0xff]
    %v1749 = vld [vmem:[#allocation9 + $0x5c] sm:$0xf]
    %v1750 = vld [vmem:[#allocation9 + $0x60] sm:$0xff]
    %v1751 = vld [vmem:[#allocation9 + $0x68] sm:$0xf]
    %v1752 = vld [vmem:[#allocation9 + $0x6c] sm:$0xff]
    %v1753 = vld [vmem:[#allocation9 + $0x74] sm:$0xf]
    %v1754 = vld [vmem:[#allocation9 + $0x78] sm:$0xff]
    %v1755 = vld [vmem:[#allocation9 + $0x80] sm:$0xf]
    %v1756 = vld [vmem:[#allocation9 + $0x84] sm:$0xff]
    %v1757 = vld [vmem:[#allocation9 + $0x8c] sm:$0xf]
    %v1758 = vld [vmem:[#allocation9 + $0x90] sm:$0xff]
    %v1759 = vld [vmem:[#allocation9 + $0x98] sm:$0xf]
    %v1760 = vld [vmem:[#allocation9 + $0x9c] sm:$0xff]
    %v1761 = vld [vmem:[#allocation9 + $0xa4] sm:$0xf]
    %v1762 = vld [vmem:[#allocation9 + $0xa8] sm:$0xff]
    %v1763 = vld [vmem:[#allocation9 + $0xb0] sm:$0xf]
    %v1764 = vld [vmem:[#allocation9 + $0xb4] sm:$0xff]
    %v1765 = vld [vmem:[#allocation9 + $0xbc] sm:$0xf]
    %v1798 = vunpack.c.l.b16 %v1734
    %v1799 = vunpack.c.h.b16 %v1734
    %v1800 = vunpack.c.l.b16 %v1735
    %v1801 = vunpack.c.l.b16 %v1736
    %v1802 = vunpack.c.h.b16 %v1736
    %v1803 = vunpack.c.l.b16 %v1737
    %v1804 = vunpack.c.l.b16 %v1738
    %v1805 = vunpack.c.h.b16 %v1738
    %v1806 = vunpack.c.l.b16 %v1739
    %v1807 = vunpack.c.l.b16 %v1740
    %v1808 = vunpack.c.h.b16 %v1740
    %v1809 = vunpack.c.l.b16 %v1741
    %v1810 = vunpack.c.l.b16 %v1742
    %v1811 = vunpack.c.h.b16 %v1742
    %v1812 = vunpack.c.l.b16 %v1743
    %v1813 = vunpack.c.l.b16 %v1744
    %v1814 = vunpack.c.h.b16 %v1744
    %v1815 = vunpack.c.l.b16 %v1745
    %v1816 = vunpack.c.l.b16 %v1746
    %v1817 = vunpack.c.h.b16 %v1746
    %v1818 = vunpack.c.l.b16 %v1747
    %v1819 = vunpack.c.l.b16 %v1748
    %v1820 = vunpack.c.h.b16 %v1748
    %v1821 = vunpack.c.l.b16 %v1749
    %v1822 = vunpack.c.l.b16 %v1750
    %v1823 = vunpack.c.h.b16 %v1750
    %v1824 = vunpack.c.l.b16 %v1751
    %v1825 = vunpack.c.l.b16 %v1752
    %v1826 = vunpack.c.h.b16 %v1752
    %v1827 = vunpack.c.l.b16 %v1753
    %v1828 = vunpack.c.l.b16 %v1754
    %v1829 = vunpack.c.h.b16 %v1754
    %v1830 = vunpack.c.l.b16 %v1755
    %v1831 = vunpack.c.l.b16 %v1756
    %v1832 = vunpack.c.h.b16 %v1756
    %v1833 = vunpack.c.l.b16 %v1757
    %v1834 = vunpack.c.l.b16 %v1758
    %v1835 = vunpack.c.h.b16 %v1758
    %v1836 = vunpack.c.l.b16 %v1759
    %v1837 = vunpack.c.l.b16 %v1760
    %v1838 = vunpack.c.h.b16 %v1760
    %v1839 = vunpack.c.l.b16 %v1761
    %v1840 = vunpack.c.l.b16 %v1762
    %v1841 = vunpack.c.h.b16 %v1762
    %v1842 = vunpack.c.l.b16 %v1763
    %v1843 = vunpack.c.l.b16 %v1764
    %v1844 = vunpack.c.h.b16 %v1764
    %v1845 = vunpack.c.l.b16 %v1765
    %v1846 = vpack.c.b16 %v1801, %v1798
    %v1847 = vpack.c.b16 %v1802, %v1799
    %v1848 = vpack.c.b16 %v1803, %v1800
    %v1849 = vpack.c.b16 %v1807, %v1804
    %v1850 = vpack.c.b16 %v1808, %v1805
    %v1851 = vpack.c.b16 %v1809, %v1806
    %v1852 = vpack.c.b16 %v1813, %v1810
    %v1853 = vpack.c.b16 %v1814, %v1811
    %v1854 = vpack.c.b16 %v1815, %v1812
    %v1855 = vpack.c.b16 %v1819, %v1816
    %v1856 = vpack.c.b16 %v1820, %v1817
    %v1857 = vpack.c.b16 %v1821, %v1818
    %v1858 = vpack.c.b16 %v1825, %v1822
    %v1859 = vpack.c.b16 %v1826, %v1823
    %v1860 = vpack.c.b16 %v1827, %v1824
    %v1861 = vpack.c.b16 %v1831, %v1828
    %v1862 = vpack.c.b16 %v1832, %v1829
    %v1863 = vpack.c.b16 %v1833, %v1830
    %v1864 = vpack.c.b16 %v1837, %v1834
    %v1865 = vpack.c.b16 %v1838, %v1835
    %v1866 = vpack.c.b16 %v1839, %v1836
    %v1867 = vpack.c.b16 %v1843, %v1840
    %v1868 = vpack.c.b16 %v1844, %v1841
    %v1869 = vpack.c.b16 %v1845, %v1842
    %1894 = vmatprep.subr.bf16.mxu0 %v1868
    %1895 = vmatpush1.bf16.msra.mxu0 %v1867
    %1896 = vmatprep.subr.bf16.mxu0 %v1865
    %1897 = vmatpush1.bf16.msra.mxu0 %v1864
    %1898 = vmatprep.subr.bf16.mxu0 %v1862
    %1899 = vmatpush1.bf16.msra.mxu0 %v1861
    %1900 = vmatprep.subr.bf16.mxu0 %v1859
    %1901 = vmatpush1.bf16.msra.mxu0 %v1858
    %1902 = vmatprep.subr.bf16.mxu0 %v1856
    %1903 = vmatpush1.bf16.msra.mxu0 %v1855
    %1904 = vmatprep.subr.bf16.mxu0 %v1853
    %1905 = vmatpush1.bf16.msra.mxu0 %v1852
    %1906 = vmatprep.subr.bf16.mxu0 %v1850
    %1907 = vmatpush1.bf16.msra.mxu0 %v1849
    %1908 = vmatprep.subr.bf16.mxu0 %v1847
    %1909 = vmatpush1.bf16.msra.mxu0 %v1846
    %1910 = vmatprep.subr.bf16.mxu0 0
    %1911 = vmatpush2.bf16.msra.mxu0 0
    %1912 = vmatprep.subr.bf16.mxu0 0
    %1913 = vmatpush2.bf16.msra.mxu0 0
    %1914 = vmatprep.subr.bf16.mxu0 0
    %1915 = vmatpush2.bf16.msra.mxu0 0
    %1916 = vmatprep.subr.bf16.mxu0 0
    %1917 = vmatpush2.bf16.msra.mxu0 0
    %1918 = vmatprep.subr.bf16.mxu0 0
    %1919 = vmatpush2.bf16.msra.mxu0 0
    %1920 = vmatprep.subr.bf16.mxu0 0
    %1921 = vmatpush2.bf16.msra.mxu0 0
    %1922 = vmatprep.subr.bf16.mxu0 0
    %1923 = vmatpush2.bf16.msra.mxu0 0
    %1924 = vmatprep.subr.bf16.mxu0 0
    %1925 = vmatpush2.bf16.msra.mxu0 0
    %1926 = vmatprep.mubr.bf16.mxu0 0
    %1927 = vmatmul.mubr.bf16.gmra.mxu0 %v1733
    %v1928 = vpop.f32.mrf.mxu0
    %v1929 = vadd.f32 0.0, %v1928
    %v1930 = vpop.f32.mrf.mxu0
    %v1931 = vadd.f32 0.0, %v1930
    %v1932 = vpop.f32.mrf.mxu0
    %v1933 = vpop.f32.mrf.mxu0
    %1934 = vdwg.mxu0
    %1935 = vmatprep.subr.bf16.mxu0 0
    %1936 = vmatpush1.bf16.msra.mxu0 %v1869
    %1937 = vmatprep.subr.bf16.mxu0 0
    %1938 = vmatpush1.bf16.msra.mxu0 %v1866
    %1939 = vmatprep.subr.bf16.mxu0 0
    %1940 = vmatpush1.bf16.msra.mxu0 %v1863
    %1941 = vmatprep.subr.bf16.mxu0 0
    %1942 = vmatpush1.bf16.msra.mxu0 %v1860
    %1943 = vmatprep.subr.bf16.mxu0 0
    %1944 = vmatpush1.bf16.msra.mxu0 %v1857
    %1945 = vmatprep.subr.bf16.mxu0 0
    %1946 = vmatpush1.bf16.msra.mxu0 %v1854
    %1947 = vmatprep.subr.bf16.mxu0 0
    %1948 = vmatpush1.bf16.msra.mxu0 %v1851
    %1949 = vmatprep.subr.bf16.mxu0 0
    %1950 = vmatpush1.bf16.msra.mxu0 %v1848
    %1951 = vmatprep.subr.bf16.mxu0 0
    %1952 = vmatpush2.bf16.msra.mxu0 0
    %1953 = vmatprep.subr.bf16.mxu0 0
    %1954 = vmatpush2.bf16.msra.mxu0 0
    %1955 = vmatprep.subr.bf16.mxu0 0
    %1956 = vmatpush2.bf16.msra.mxu0 0
    %1957 = vmatprep.subr.bf16.mxu0 0
    %1958 = vmatpush2.bf16.msra.mxu0 0
    %1959 = vmatprep.subr.bf16.mxu0 0
    %1960 = vmatpush2.bf16.msra.mxu0 0
    %1961 = vmatprep.subr.bf16.mxu0 0
    %1962 = vmatpush2.bf16.msra.mxu0 0
    %1963 = vmatprep.subr.bf16.mxu0 0
    %1964 = vmatpush2.bf16.msra.mxu0 0
    %1965 = vmatprep.subr.bf16.mxu0 0
    %1966 = vmatpush2.bf16.msra.mxu0 0
    %1967 = vmatprep.mubr.bf16.mxu0 0
    %1968 = vmatmul.mubr.bf16.gmra.mxu0 %v1733
    %v1969 = vpop.f32.mrf.mxu0
    %v1970 = vadd.f32 0.0, %v1969
    %v1971 = vpop.f32.mrf.mxu0
    %v1972 = vpop.f32.mrf.mxu0
    %v1973 = vpop.f32.mrf.mxu0
    %1974 = vdwg.mxu0
    %v1975 = vadd.f32 %v1730, %v1929
    %v1976 = vxor.u32 %v1975, 2147483648
    %v1977 = vmul.f32 %v1976, 1.442695
    %v1978 = vpow.pop %v1977
    %v1979 = vadd.f32 %v1978, 1.0
    %v1980 = vrcp.pop %v1979
    %v1981 = vmul.f32 1.0, %v1980
    %v1982 = vadd.f32 %v1731, %v1931
    %v1983 = vxor.u32 %v1982, 2147483648
    %v1984 = vmul.f32 %v1983, 1.442695
    %v1985 = vpow.pop %v1984
    %v1986 = vadd.f32 %v1985, 1.0
    %v1987 = vrcp.pop %v1986
    %v1988 = vmul.f32 1.0, %v1987
    %v1989 = vadd.f32 %v1970, %v100
    %v1990 = vmul.f32 %v1981, %v1989
    %v1991 = vadd.f32 %v1732, %v1990
    %v1992 = vtanh.pop %v1991
    %v1993 = vsub.f32 1.0, %v1988
    %v1994 = vmul.f32 %v1993, %v1992
    %v1995 = vmul.f32 %v1988, %v1456
    %v1996 = vadd.f32 %v1994, %v1995
    %s1997 = scalar_lea.vmem [#allocation7], 96
    %v1998 = vld [vmem:[%s1997] sm:$0xff]
    %v1999 = vld [vmem:[%s1997 + $0x8] sm:$0xff]
    %v2000 = vld [vmem:[%s1997 + $0x10] sm:$0xff]
    %v2001 = vpack.c.bf16 %v1724, %v1724
    %v2002 = vld [vmem:[#allocation10] sm:$0xff]
    %v2003 = vld [vmem:[#allocation10 + $0x8] sm:$0xf]
    %v2004 = vld [vmem:[#allocation10 + $0xc] sm:$0xff]
    %v2005 = vld [vmem:[#allocation10 + $0x14] sm:$0xf]
    %v2006 = vld [vmem:[#allocation10 + $0x18] sm:$0xff]
    %v2007 = vld [vmem:[#allocation10 + $0x20] sm:$0xf]
    %v2008 = vld [vmem:[#allocation10 + $0x24] sm:$0xff]
    %v2009 = vld [vmem:[#allocation10 + $0x2c] sm:$0xf]
    %v2010 = vld [vmem:[#allocation10 + $0x30] sm:$0xff]
    %v2011 = vld [vmem:[#allocation10 + $0x38] sm:$0xf]
    %v2012 = vld [vmem:[#allocation10 + $0x3c] sm:$0xff]
    %v2013 = vld [vmem:[#allocation10 + $0x44] sm:$0xf]
    %v2014 = vld [vmem:[#allocation10 + $0x48] sm:$0xff]
    %v2015 = vld [vmem:[#allocation10 + $0x50] sm:$0xf]
    %v2016 = vld [vmem:[#allocation10 + $0x54] sm:$0xff]
    %v2017 = vld [vmem:[#allocation10 + $0x5c] sm:$0xf]
    %v2018 = vld [vmem:[#allocation10 + $0x60] sm:$0xff]
    %v2019 = vld [vmem:[#allocation10 + $0x68] sm:$0xf]
    %v2020 = vld [vmem:[#allocation10 + $0x6c] sm:$0xff]
    %v2021 = vld [vmem:[#allocation10 + $0x74] sm:$0xf]
    %v2022 = vld [vmem:[#allocation10 + $0x78] sm:$0xff]
    %v2023 = vld [vmem:[#allocation10 + $0x80] sm:$0xf]
    %v2024 = vld [vmem:[#allocation10 + $0x84] sm:$0xff]
    %v2025 = vld [vmem:[#allocation10 + $0x8c] sm:$0xf]
    %v2026 = vld [vmem:[#allocation10 + $0x90] sm:$0xff]
    %v2027 = vld [vmem:[#allocation10 + $0x98] sm:$0xf]
    %v2028 = vld [vmem:[#allocation10 + $0x9c] sm:$0xff]
    %v2029 = vld [vmem:[#allocation10 + $0xa4] sm:$0xf]
    %v2030 = vld [vmem:[#allocation10 + $0xa8] sm:$0xff]
    %v2031 = vld [vmem:[#allocation10 + $0xb0] sm:$0xf]
    %v2032 = vld [vmem:[#allocation10 + $0xb4] sm:$0xff]
    %v2033 = vld [vmem:[#allocation10 + $0xbc] sm:$0xf]
    %v2066 = vunpack.c.l.b16 %v2002
    %v2067 = vunpack.c.h.b16 %v2002
    %v2068 = vunpack.c.l.b16 %v2003
    %v2069 = vunpack.c.l.b16 %v2004
    %v2070 = vunpack.c.h.b16 %v2004
    %v2071 = vunpack.c.l.b16 %v2005
    %v2072 = vunpack.c.l.b16 %v2006
    %v2073 = vunpack.c.h.b16 %v2006
    %v2074 = vunpack.c.l.b16 %v2007
    %v2075 = vunpack.c.l.b16 %v2008
    %v2076 = vunpack.c.h.b16 %v2008
    %v2077 = vunpack.c.l.b16 %v2009
    %v2078 = vunpack.c.l.b16 %v2010
    %v2079 = vunpack.c.h.b16 %v2010
    %v2080 = vunpack.c.l.b16 %v2011
    %v2081 = vunpack.c.l.b16 %v2012
    %v2082 = vunpack.c.h.b16 %v2012
    %v2083 = vunpack.c.l.b16 %v2013
    %v2084 = vunpack.c.l.b16 %v2014
    %v2085 = vunpack.c.h.b16 %v2014
    %v2086 = vunpack.c.l.b16 %v2015
    %v2087 = vunpack.c.l.b16 %v2016
    %v2088 = vunpack.c.h.b16 %v2016
    %v2089 = vunpack.c.l.b16 %v2017
    %v2090 = vunpack.c.l.b16 %v2018
    %v2091 = vunpack.c.h.b16 %v2018
    %v2092 = vunpack.c.l.b16 %v2019
    %v2093 = vunpack.c.l.b16 %v2020
    %v2094 = vunpack.c.h.b16 %v2020
    %v2095 = vunpack.c.l.b16 %v2021
    %v2096 = vunpack.c.l.b16 %v2022
    %v2097 = vunpack.c.h.b16 %v2022
    %v2098 = vunpack.c.l.b16 %v2023
    %v2099 = vunpack.c.l.b16 %v2024
    %v2100 = vunpack.c.h.b16 %v2024
    %v2101 = vunpack.c.l.b16 %v2025
    %v2102 = vunpack.c.l.b16 %v2026
    %v2103 = vunpack.c.h.b16 %v2026
    %v2104 = vunpack.c.l.b16 %v2027
    %v2105 = vunpack.c.l.b16 %v2028
    %v2106 = vunpack.c.h.b16 %v2028
    %v2107 = vunpack.c.l.b16 %v2029
    %v2108 = vunpack.c.l.b16 %v2030
    %v2109 = vunpack.c.h.b16 %v2030
    %v2110 = vunpack.c.l.b16 %v2031
    %v2111 = vunpack.c.l.b16 %v2032
    %v2112 = vunpack.c.h.b16 %v2032
    %v2113 = vunpack.c.l.b16 %v2033
    %v2114 = vpack.c.b16 %v2069, %v2066
    %v2115 = vpack.c.b16 %v2070, %v2067
    %v2116 = vpack.c.b16 %v2071, %v2068
    %v2117 = vpack.c.b16 %v2075, %v2072
    %v2118 = vpack.c.b16 %v2076, %v2073
    %v2119 = vpack.c.b16 %v2077, %v2074
    %v2120 = vpack.c.b16 %v2081, %v2078
    %v2121 = vpack.c.b16 %v2082, %v2079
    %v2122 = vpack.c.b16 %v2083, %v2080
    %v2123 = vpack.c.b16 %v2087, %v2084
    %v2124 = vpack.c.b16 %v2088, %v2085
    %v2125 = vpack.c.b16 %v2089, %v2086
    %v2126 = vpack.c.b16 %v2093, %v2090
    %v2127 = vpack.c.b16 %v2094, %v2091
    %v2128 = vpack.c.b16 %v2095, %v2092
    %v2129 = vpack.c.b16 %v2099, %v2096
    %v2130 = vpack.c.b16 %v2100, %v2097
    %v2131 = vpack.c.b16 %v2101, %v2098
    %v2132 = vpack.c.b16 %v2105, %v2102
    %v2133 = vpack.c.b16 %v2106, %v2103
    %v2134 = vpack.c.b16 %v2107, %v2104
    %v2135 = vpack.c.b16 %v2111, %v2108
    %v2136 = vpack.c.b16 %v2112, %v2109
    %v2137 = vpack.c.b16 %v2113, %v2110
    %2162 = vmatprep.subr.bf16.mxu0 %v2136
    %2163 = vmatpush1.bf16.msra.mxu0 %v2135
    %2164 = vmatprep.subr.bf16.mxu0 %v2133
    %2165 = vmatpush1.bf16.msra.mxu0 %v2132
    %2166 = vmatprep.subr.bf16.mxu0 %v2130
    %2167 = vmatpush1.bf16.msra.mxu0 %v2129
    %2168 = vmatprep.subr.bf16.mxu0 %v2127
    %2169 = vmatpush1.bf16.msra.mxu0 %v2126
    %2170 = vmatprep.subr.bf16.mxu0 %v2124
    %2171 = vmatpush1.bf16.msra.mxu0 %v2123
    %2172 = vmatprep.subr.bf16.mxu0 %v2121
    %2173 = vmatpush1.bf16.msra.mxu0 %v2120
    %2174 = vmatprep.subr.bf16.mxu0 %v2118
    %2175 = vmatpush1.bf16.msra.mxu0 %v2117
    %2176 = vmatprep.subr.bf16.mxu0 %v2115
    %2177 = vmatpush1.bf16.msra.mxu0 %v2114
    %2178 = vmatprep.subr.bf16.mxu0 0
    %2179 = vmatpush2.bf16.msra.mxu0 0
    %2180 = vmatprep.subr.bf16.mxu0 0
    %2181 = vmatpush2.bf16.msra.mxu0 0
    %2182 = vmatprep.subr.bf16.mxu0 0
    %2183 = vmatpush2.bf16.msra.mxu0 0
    %2184 = vmatprep.subr.bf16.mxu0 0
    %2185 = vmatpush2.bf16.msra.mxu0 0
    %2186 = vmatprep.subr.bf16.mxu0 0
    %2187 = vmatpush2.bf16.msra.mxu0 0
    %2188 = vmatprep.subr.bf16.mxu0 0
    %2189 = vmatpush2.bf16.msra.mxu0 0
    %2190 = vmatprep.subr.bf16.mxu0 0
    %2191 = vmatpush2.bf16.msra.mxu0 0
    %2192 = vmatprep.subr.bf16.mxu0 0
    %2193 = vmatpush2.bf16.msra.mxu0 0
    %2194 = vmatprep.mubr.bf16.mxu0 0
    %2195 = vmatmul.mubr.bf16.gmra.mxu0 %v2001
    %v2196 = vpop.f32.mrf.mxu0
    %v2197 = vadd.f32 0.0, %v2196
    %v2198 = vpop.f32.mrf.mxu0
    %v2199 = vadd.f32 0.0, %v2198
    %v2200 = vpop.f32.mrf.mxu0
    %v2201 = vpop.f32.mrf.mxu0
    %2202 = vdwg.mxu0
    %2203 = vmatprep.subr.bf16.mxu0 0
    %2204 = vmatpush1.bf16.msra.mxu0 %v2137
    %2205 = vmatprep.subr.bf16.mxu0 0
    %2206 = vmatpush1.bf16.msra.mxu0 %v2134
    %2207 = vmatprep.subr.bf16.mxu0 0
    %2208 = vmatpush1.bf16.msra.mxu0 %v2131
    %2209 = vmatprep.subr.bf16.mxu0 0
    %2210 = vmatpush1.bf16.msra.mxu0 %v2128
    %2211 = vmatprep.subr.bf16.mxu0 0
    %2212 = vmatpush1.bf16.msra.mxu0 %v2125
    %2213 = vmatprep.subr.bf16.mxu0 0
    %2214 = vmatpush1.bf16.msra.mxu0 %v2122
    %2215 = vmatprep.subr.bf16.mxu0 0
    %2216 = vmatpush1.bf16.msra.mxu0 %v2119
    %2217 = vmatprep.subr.bf16.mxu0 0
    %2218 = vmatpush1.bf16.msra.mxu0 %v2116
    %2219 = vmatprep.subr.bf16.mxu0 0
    %2220 = vmatpush2.bf16.msra.mxu0 0
    %2221 = vmatprep.subr.bf16.mxu0 0
    %2222 = vmatpush2.bf16.msra.mxu0 0
    %2223 = vmatprep.subr.bf16.mxu0 0
    %2224 = vmatpush2.bf16.msra.mxu0 0
    %2225 = vmatprep.subr.bf16.mxu0 0
    %2226 = vmatpush2.bf16.msra.mxu0 0
    %2227 = vmatprep.subr.bf16.mxu0 0
    %2228 = vmatpush2.bf16.msra.mxu0 0
    %2229 = vmatprep.subr.bf16.mxu0 0
    %2230 = vmatpush2.bf16.msra.mxu0 0
    %2231 = vmatprep.subr.bf16.mxu0 0
    %2232 = vmatpush2.bf16.msra.mxu0 0
    %2233 = vmatprep.subr.bf16.mxu0 0
    %2234 = vmatpush2.bf16.msra.mxu0 0
    %2235 = vmatprep.mubr.bf16.mxu0 0
    %2236 = vmatmul.mubr.bf16.gmra.mxu0 %v2001
    %v2237 = vpop.f32.mrf.mxu0
    %v2238 = vadd.f32 0.0, %v2237
    %v2239 = vpop.f32.mrf.mxu0
    %v2240 = vpop.f32.mrf.mxu0
    %v2241 = vpop.f32.mrf.mxu0
    %2242 = vdwg.mxu0
    %v2243 = vadd.f32 %v1998, %v2197
    %v2244 = vxor.u32 %v2243, 2147483648
    %v2245 = vmul.f32 %v2244, 1.442695
    %v2246 = vpow.pop %v2245
    %v2247 = vadd.f32 %v2246, 1.0
    %v2248 = vrcp.pop %v2247
    %v2249 = vmul.f32 1.0, %v2248
    %v2250 = vadd.f32 %v1999, %v2199
    %v2251 = vxor.u32 %v2250, 2147483648
    %v2252 = vmul.f32 %v2251, 1.442695
    %v2253 = vpow.pop %v2252
    %v2254 = vadd.f32 %v2253, 1.0
    %v2255 = vrcp.pop %v2254
    %v2256 = vmul.f32 1.0, %v2255
    %v2257 = vadd.f32 %v2238, %v107
    %v2258 = vmul.f32 %v2249, %v2257
    %v2259 = vadd.f32 %v2000, %v2258
    %v2260 = vtanh.pop %v2259
    %v2261 = vsub.f32 1.0, %v2256
    %v2262 = vmul.f32 %v2261, %v2260
    %v2263 = vmul.f32 %v2256, %v1724
    %v2264 = vadd.f32 %v2262, %v2263
    %s2265 = scalar_lea.vmem [#allocation12], 24
    %2266 = vst [vmem:[%s2265] sm:$0xff] %v1996
    %s2267 = scalar_lea.vmem [#allocation13], 32
    %2268 = vst [vmem:[%s2267] sm:$0xff] %v2264
    %s2269 = scalar_lea.vmem [#allocation4], 96
    %v2270 = vld [vmem:[%s2269] sm:$0xff]
    %v2271 = vld [vmem:[%s2269 + $0x8] sm:$0xff]
    %v2272 = vld [vmem:[%s2269 + $0x10] sm:$0xff]
    %v2273 = vpack.c.bf16 %v1996, %v1996
    %v2274 = vld [vmem:[#allocation9] sm:$0xff]
    %v2275 = vld [vmem:[#allocation9 + $0x8] sm:$0xf]
    %v2276 = vld [vmem:[#allocation9 + $0xc] sm:$0xff]
    %v2277 = vld [vmem:[#allocation9 + $0x14] sm:$0xf]
    %v2278 = vld [vmem:[#allocation9 + $0x18] sm:$0xff]
    %v2279 = vld [vmem:[#allocation9 + $0x20] sm:$0xf]
    %v2280 = vld [vmem:[#allocation9 + $0x24] sm:$0xff]
    %v2281 = vld [vmem:[#allocation9 + $0x2c] sm:$0xf]
    %v2282 = vld [vmem:[#allocation9 + $0x30] sm:$0xff]
    %v2283 = vld [vmem:[#allocation9 + $0x38] sm:$0xf]
    %v2284 = vld [vmem:[#allocation9 + $0x3c] sm:$0xff]
    %v2285 = vld [vmem:[#allocation9 + $0x44] sm:$0xf]
    %v2286 = vld [vmem:[#allocation9 + $0x48] sm:$0xff]
    %v2287 = vld [vmem:[#allocation9 + $0x50] sm:$0xf]
    %v2288 = vld [vmem:[#allocation9 + $0x54] sm:$0xff]
    %v2289 = vld [vmem:[#allocation9 + $0x5c] sm:$0xf]
    %v2290 = vld [vmem:[#allocation9 + $0x60] sm:$0xff]
    %v2291 = vld [vmem:[#allocation9 + $0x68] sm:$0xf]
    %v2292 = vld [vmem:[#allocation9 + $0x6c] sm:$0xff]
    %v2293 = vld [vmem:[#allocation9 + $0x74] sm:$0xf]
    %v2294 = vld [vmem:[#allocation9 + $0x78] sm:$0xff]
    %v2295 = vld [vmem:[#allocation9 + $0x80] sm:$0xf]
    %v2296 = vld [vmem:[#allocation9 + $0x84] sm:$0xff]
    %v2297 = vld [vmem:[#allocation9 + $0x8c] sm:$0xf]
    %v2298 = vld [vmem:[#allocation9 + $0x90] sm:$0xff]
    %v2299 = vld [vmem:[#allocation9 + $0x98] sm:$0xf]
    %v2300 = vld [vmem:[#allocation9 + $0x9c] sm:$0xff]
    %v2301 = vld [vmem:[#allocation9 + $0xa4] sm:$0xf]
    %v2302 = vld [vmem:[#allocation9 + $0xa8] sm:$0xff]
    %v2303 = vld [vmem:[#allocation9 + $0xb0] sm:$0xf]
    %v2304 = vld [vmem:[#allocation9 + $0xb4] sm:$0xff]
    %v2305 = vld [vmem:[#allocation9 + $0xbc] sm:$0xf]
    %v2338 = vunpack.c.l.b16 %v2274
    %v2339 = vunpack.c.h.b16 %v2274
    %v2340 = vunpack.c.l.b16 %v2275
    %v2341 = vunpack.c.l.b16 %v2276
    %v2342 = vunpack.c.h.b16 %v2276
    %v2343 = vunpack.c.l.b16 %v2277
    %v2344 = vunpack.c.l.b16 %v2278
    %v2345 = vunpack.c.h.b16 %v2278
    %v2346 = vunpack.c.l.b16 %v2279
    %v2347 = vunpack.c.l.b16 %v2280
    %v2348 = vunpack.c.h.b16 %v2280
    %v2349 = vunpack.c.l.b16 %v2281
    %v2350 = vunpack.c.l.b16 %v2282
    %v2351 = vunpack.c.h.b16 %v2282
    %v2352 = vunpack.c.l.b16 %v2283
    %v2353 = vunpack.c.l.b16 %v2284
    %v2354 = vunpack.c.h.b16 %v2284
    %v2355 = vunpack.c.l.b16 %v2285
    %v2356 = vunpack.c.l.b16 %v2286
    %v2357 = vunpack.c.h.b16 %v2286
    %v2358 = vunpack.c.l.b16 %v2287
    %v2359 = vunpack.c.l.b16 %v2288
    %v2360 = vunpack.c.h.b16 %v2288
    %v2361 = vunpack.c.l.b16 %v2289
    %v2362 = vunpack.c.l.b16 %v2290
    %v2363 = vunpack.c.h.b16 %v2290
    %v2364 = vunpack.c.l.b16 %v2291
    %v2365 = vunpack.c.l.b16 %v2292
    %v2366 = vunpack.c.h.b16 %v2292
    %v2367 = vunpack.c.l.b16 %v2293
    %v2368 = vunpack.c.l.b16 %v2294
    %v2369 = vunpack.c.h.b16 %v2294
    %v2370 = vunpack.c.l.b16 %v2295
    %v2371 = vunpack.c.l.b16 %v2296
    %v2372 = vunpack.c.h.b16 %v2296
    %v2373 = vunpack.c.l.b16 %v2297
    %v2374 = vunpack.c.l.b16 %v2298
    %v2375 = vunpack.c.h.b16 %v2298
    %v2376 = vunpack.c.l.b16 %v2299
    %v2377 = vunpack.c.l.b16 %v2300
    %v2378 = vunpack.c.h.b16 %v2300
    %v2379 = vunpack.c.l.b16 %v2301
    %v2380 = vunpack.c.l.b16 %v2302
    %v2381 = vunpack.c.h.b16 %v2302
    %v2382 = vunpack.c.l.b16 %v2303
    %v2383 = vunpack.c.l.b16 %v2304
    %v2384 = vunpack.c.h.b16 %v2304
    %v2385 = vunpack.c.l.b16 %v2305
    %v2386 = vpack.c.b16 %v2341, %v2338
    %v2387 = vpack.c.b16 %v2342, %v2339
    %v2388 = vpack.c.b16 %v2343, %v2340
    %v2389 = vpack.c.b16 %v2347, %v2344
    %v2390 = vpack.c.b16 %v2348, %v2345
    %v2391 = vpack.c.b16 %v2349, %v2346
    %v2392 = vpack.c.b16 %v2353, %v2350
    %v2393 = vpack.c.b16 %v2354, %v2351
    %v2394 = vpack.c.b16 %v2355, %v2352
    %v2395 = vpack.c.b16 %v2359, %v2356
    %v2396 = vpack.c.b16 %v2360, %v2357
    %v2397 = vpack.c.b16 %v2361, %v2358
    %v2398 = vpack.c.b16 %v2365, %v2362
    %v2399 = vpack.c.b16 %v2366, %v2363
    %v2400 = vpack.c.b16 %v2367, %v2364
    %v2401 = vpack.c.b16 %v2371, %v2368
    %v2402 = vpack.c.b16 %v2372, %v2369
    %v2403 = vpack.c.b16 %v2373, %v2370
    %v2404 = vpack.c.b16 %v2377, %v2374
    %v2405 = vpack.c.b16 %v2378, %v2375
    %v2406 = vpack.c.b16 %v2379, %v2376
    %v2407 = vpack.c.b16 %v2383, %v2380
    %v2408 = vpack.c.b16 %v2384, %v2381
    %v2409 = vpack.c.b16 %v2385, %v2382
    %2434 = vmatprep.subr.bf16.mxu0 %v2408
    %2435 = vmatpush1.bf16.msra.mxu0 %v2407
    %2436 = vmatprep.subr.bf16.mxu0 %v2405
    %2437 = vmatpush1.bf16.msra.mxu0 %v2404
    %2438 = vmatprep.subr.bf16.mxu0 %v2402
    %2439 = vmatpush1.bf16.msra.mxu0 %v2401
    %2440 = vmatprep.subr.bf16.mxu0 %v2399
    %2441 = vmatpush1.bf16.msra.mxu0 %v2398
    %2442 = vmatprep.subr.bf16.mxu0 %v2396
    %2443 = vmatpush1.bf16.msra.mxu0 %v2395
    %2444 = vmatprep.subr.bf16.mxu0 %v2393
    %2445 = vmatpush1.bf16.msra.mxu0 %v2392
    %2446 = vmatprep.subr.bf16.mxu0 %v2390
    %2447 = vmatpush1.bf16.msra.mxu0 %v2389
    %2448 = vmatprep.subr.bf16.mxu0 %v2387
    %2449 = vmatpush1.bf16.msra.mxu0 %v2386
    %2450 = vmatprep.subr.bf16.mxu0 0
    %2451 = vmatpush2.bf16.msra.mxu0 0
    %2452 = vmatprep.subr.bf16.mxu0 0
    %2453 = vmatpush2.bf16.msra.mxu0 0
    %2454 = vmatprep.subr.bf16.mxu0 0
    %2455 = vmatpush2.bf16.msra.mxu0 0
    %2456 = vmatprep.subr.bf16.mxu0 0
    %2457 = vmatpush2.bf16.msra.mxu0 0
    %2458 = vmatprep.subr.bf16.mxu0 0
    %2459 = vmatpush2.bf16.msra.mxu0 0
    %2460 = vmatprep.subr.bf16.mxu0 0
    %2461 = vmatpush2.bf16.msra.mxu0 0
    %2462 = vmatprep.subr.bf16.mxu0 0
    %2463 = vmatpush2.bf16.msra.mxu0 0
    %2464 = vmatprep.subr.bf16.mxu0 0
    %2465 = vmatpush2.bf16.msra.mxu0 0
    %2466 = vmatprep.mubr.bf16.mxu0 0
    %2467 = vmatmul.mubr.bf16.gmra.mxu0 %v2273
    %v2468 = vpop.f32.mrf.mxu0
    %v2469 = vadd.f32 0.0, %v2468
    %v2470 = vpop.f32.mrf.mxu0
    %v2471 = vadd.f32 0.0, %v2470
    %v2472 = vpop.f32.mrf.mxu0
    %v2473 = vpop.f32.mrf.mxu0
    %2474 = vdwg.mxu0
    %2475 = vmatprep.subr.bf16.mxu0 0
    %2476 = vmatpush1.bf16.msra.mxu0 %v2409
    %2477 = vmatprep.subr.bf16.mxu0 0
    %2478 = vmatpush1.bf16.msra.mxu0 %v2406
    %2479 = vmatprep.subr.bf16.mxu0 0
    %2480 = vmatpush1.bf16.msra.mxu0 %v2403
    %2481 = vmatprep.subr.bf16.mxu0 0
    %2482 = vmatpush1.bf16.msra.mxu0 %v2400
    %2483 = vmatprep.subr.bf16.mxu0 0
    %2484 = vmatpush1.bf16.msra.mxu0 %v2397
    %2485 = vmatprep.subr.bf16.mxu0 0
    %2486 = vmatpush1.bf16.msra.mxu0 %v2394
    %2487 = vmatprep.subr.bf16.mxu0 0
    %2488 = vmatpush1.bf16.msra.mxu0 %v2391
    %2489 = vmatprep.subr.bf16.mxu0 0
    %2490 = vmatpush1.bf16.msra.mxu0 %v2388
    %2491 = vmatprep.subr.bf16.mxu0 0
    %2492 = vmatpush2.bf16.msra.mxu0 0
    %2493 = vmatprep.subr.bf16.mxu0 0
    %2494 = vmatpush2.bf16.msra.mxu0 0
    %2495 = vmatprep.subr.bf16.mxu0 0
    %2496 = vmatpush2.bf16.msra.mxu0 0
    %2497 = vmatprep.subr.bf16.mxu0 0
    %2498 = vmatpush2.bf16.msra.mxu0 0
    %2499 = vmatprep.subr.bf16.mxu0 0
    %2500 = vmatpush2.bf16.msra.mxu0 0
    %2501 = vmatprep.subr.bf16.mxu0 0
    %2502 = vmatpush2.bf16.msra.mxu0 0
    %2503 = vmatprep.subr.bf16.mxu0 0
    %2504 = vmatpush2.bf16.msra.mxu0 0
    %2505 = vmatprep.subr.bf16.mxu0 0
    %2506 = vmatpush2.bf16.msra.mxu0 0
    %2507 = vmatprep.mubr.bf16.mxu0 0
    %2508 = vmatmul.mubr.bf16.gmra.mxu0 %v2273
    %v2509 = vpop.f32.mrf.mxu0
    %v2510 = vadd.f32 0.0, %v2509
    %v2511 = vpop.f32.mrf.mxu0
    %v2512 = vpop.f32.mrf.mxu0
    %v2513 = vpop.f32.mrf.mxu0
    %2514 = vdwg.mxu0
    %v2515 = vadd.f32 %v2270, %v2469
    %v2516 = vxor.u32 %v2515, 2147483648
    %v2517 = vmul.f32 %v2516, 1.442695
    %v2518 = vpow.pop %v2517
    %v2519 = vadd.f32 %v2518, 1.0
    %v2520 = vrcp.pop %v2519
    %v2521 = vmul.f32 1.0, %v2520
    %v2522 = vadd.f32 %v2271, %v2471
    %v2523 = vxor.u32 %v2522, 2147483648
    %v2524 = vmul.f32 %v2523, 1.442695
    %v2525 = vpow.pop %v2524
    %v2526 = vadd.f32 %v2525, 1.0
    %v2527 = vrcp.pop %v2526
    %v2528 = vmul.f32 1.0, %v2527
    %v2529 = vadd.f32 %v2510, %v100
    %v2530 = vmul.f32 %v2521, %v2529
    %v2531 = vadd.f32 %v2272, %v2530
    %v2532 = vtanh.pop %v2531
    %v2533 = vsub.f32 1.0, %v2528
    %v2534 = vmul.f32 %v2533, %v2532
    %v2535 = vmul.f32 %v2528, %v1996
    %v2536 = vadd.f32 %v2534, %v2535
    %s2537 = scalar_lea.vmem [#allocation7], 72
    %v2538 = vld [vmem:[%s2537] sm:$0xff]
    %v2539 = vld [vmem:[%s2537 + $0x8] sm:$0xff]
    %v2540 = vld [vmem:[%s2537 + $0x10] sm:$0xff]
    %v2541 = vpack.c.bf16 %v2264, %v2264
    %v2542 = vld [vmem:[#allocation10] sm:$0xff]
    %v2543 = vld [vmem:[#allocation10 + $0x8] sm:$0xf]
    %v2544 = vld [vmem:[#allocation10 + $0xc] sm:$0xff]
    %v2545 = vld [vmem:[#allocation10 + $0x14] sm:$0xf]
    %v2546 = vld [vmem:[#allocation10 + $0x18] sm:$0xff]
    %v2547 = vld [vmem:[#allocation10 + $0x20] sm:$0xf]
    %v2548 = vld [vmem:[#allocation10 + $0x24] sm:$0xff]
    %v2549 = vld [vmem:[#allocation10 + $0x2c] sm:$0xf]
    %v2550 = vld [vmem:[#allocation10 + $0x30] sm:$0xff]
    %v2551 = vld [vmem:[#allocation10 + $0x38] sm:$0xf]
    %v2552 = vld [vmem:[#allocation10 + $0x3c] sm:$0xff]
    %v2553 = vld [vmem:[#allocation10 + $0x44] sm:$0xf]
    %v2554 = vld [vmem:[#allocation10 + $0x48] sm:$0xff]
    %v2555 = vld [vmem:[#allocation10 + $0x50] sm:$0xf]
    %v2556 = vld [vmem:[#allocation10 + $0x54] sm:$0xff]
    %v2557 = vld [vmem:[#allocation10 + $0x5c] sm:$0xf]
    %v2558 = vld [vmem:[#allocation10 + $0x60] sm:$0xff]
    %v2559 = vld [vmem:[#allocation10 + $0x68] sm:$0xf]
    %v2560 = vld [vmem:[#allocation10 + $0x6c] sm:$0xff]
    %v2561 = vld [vmem:[#allocation10 + $0x74] sm:$0xf]
    %v2562 = vld [vmem:[#allocation10 + $0x78] sm:$0xff]
    %v2563 = vld [vmem:[#allocation10 + $0x80] sm:$0xf]
    %v2564 = vld [vmem:[#allocation10 + $0x84] sm:$0xff]
    %v2565 = vld [vmem:[#allocation10 + $0x8c] sm:$0xf]
    %v2566 = vld [vmem:[#allocation10 + $0x90] sm:$0xff]
    %v2567 = vld [vmem:[#allocation10 + $0x98] sm:$0xf]
    %v2568 = vld [vmem:[#allocation10 + $0x9c] sm:$0xff]
    %v2569 = vld [vmem:[#allocation10 + $0xa4] sm:$0xf]
    %v2570 = vld [vmem:[#allocation10 + $0xa8] sm:$0xff]
    %v2571 = vld [vmem:[#allocation10 + $0xb0] sm:$0xf]
    %v2572 = vld [vmem:[#allocation10 + $0xb4] sm:$0xff]
    %v2573 = vld [vmem:[#allocation10 + $0xbc] sm:$0xf]
    %v2606 = vunpack.c.l.b16 %v2542
    %v2607 = vunpack.c.h.b16 %v2542
    %v2608 = vunpack.c.l.b16 %v2543
    %v2609 = vunpack.c.l.b16 %v2544
    %v2610 = vunpack.c.h.b16 %v2544
    %v2611 = vunpack.c.l.b16 %v2545
    %v2612 = vunpack.c.l.b16 %v2546
    %v2613 = vunpack.c.h.b16 %v2546
    %v2614 = vunpack.c.l.b16 %v2547
    %v2615 = vunpack.c.l.b16 %v2548
    %v2616 = vunpack.c.h.b16 %v2548
    %v2617 = vunpack.c.l.b16 %v2549
    %v2618 = vunpack.c.l.b16 %v2550
    %v2619 = vunpack.c.h.b16 %v2550
    %v2620 = vunpack.c.l.b16 %v2551
    %v2621 = vunpack.c.l.b16 %v2552
    %v2622 = vunpack.c.h.b16 %v2552
    %v2623 = vunpack.c.l.b16 %v2553
    %v2624 = vunpack.c.l.b16 %v2554
    %v2625 = vunpack.c.h.b16 %v2554
    %v2626 = vunpack.c.l.b16 %v2555
    %v2627 = vunpack.c.l.b16 %v2556
    %v2628 = vunpack.c.h.b16 %v2556
    %v2629 = vunpack.c.l.b16 %v2557
    %v2630 = vunpack.c.l.b16 %v2558
    %v2631 = vunpack.c.h.b16 %v2558
    %v2632 = vunpack.c.l.b16 %v2559
    %v2633 = vunpack.c.l.b16 %v2560
    %v2634 = vunpack.c.h.b16 %v2560
    %v2635 = vunpack.c.l.b16 %v2561
    %v2636 = vunpack.c.l.b16 %v2562
    %v2637 = vunpack.c.h.b16 %v2562
    %v2638 = vunpack.c.l.b16 %v2563
    %v2639 = vunpack.c.l.b16 %v2564
    %v2640 = vunpack.c.h.b16 %v2564
    %v2641 = vunpack.c.l.b16 %v2565
    %v2642 = vunpack.c.l.b16 %v2566
    %v2643 = vunpack.c.h.b16 %v2566
    %v2644 = vunpack.c.l.b16 %v2567
    %v2645 = vunpack.c.l.b16 %v2568
    %v2646 = vunpack.c.h.b16 %v2568
    %v2647 = vunpack.c.l.b16 %v2569
    %v2648 = vunpack.c.l.b16 %v2570
    %v2649 = vunpack.c.h.b16 %v2570
    %v2650 = vunpack.c.l.b16 %v2571
    %v2651 = vunpack.c.l.b16 %v2572
    %v2652 = vunpack.c.h.b16 %v2572
    %v2653 = vunpack.c.l.b16 %v2573
    %v2654 = vpack.c.b16 %v2609, %v2606
    %v2655 = vpack.c.b16 %v2610, %v2607
    %v2656 = vpack.c.b16 %v2611, %v2608
    %v2657 = vpack.c.b16 %v2615, %v2612
    %v2658 = vpack.c.b16 %v2616, %v2613
    %v2659 = vpack.c.b16 %v2617, %v2614
    %v2660 = vpack.c.b16 %v2621, %v2618
    %v2661 = vpack.c.b16 %v2622, %v2619
    %v2662 = vpack.c.b16 %v2623, %v2620
    %v2663 = vpack.c.b16 %v2627, %v2624
    %v2664 = vpack.c.b16 %v2628, %v2625
    %v2665 = vpack.c.b16 %v2629, %v2626
    %v2666 = vpack.c.b16 %v2633, %v2630
    %v2667 = vpack.c.b16 %v2634, %v2631
    %v2668 = vpack.c.b16 %v2635, %v2632
    %v2669 = vpack.c.b16 %v2639, %v2636
    %v2670 = vpack.c.b16 %v2640, %v2637
    %v2671 = vpack.c.b16 %v2641, %v2638
    %v2672 = vpack.c.b16 %v2645, %v2642
    %v2673 = vpack.c.b16 %v2646, %v2643
    %v2674 = vpack.c.b16 %v2647, %v2644
    %v2675 = vpack.c.b16 %v2651, %v2648
    %v2676 = vpack.c.b16 %v2652, %v2649
    %v2677 = vpack.c.b16 %v2653, %v2650
    %2702 = vmatprep.subr.bf16.mxu0 %v2676
    %2703 = vmatpush1.bf16.msra.mxu0 %v2675
    %2704 = vmatprep.subr.bf16.mxu0 %v2673
    %2705 = vmatpush1.bf16.msra.mxu0 %v2672
    %2706 = vmatprep.subr.bf16.mxu0 %v2670
    %2707 = vmatpush1.bf16.msra.mxu0 %v2669
    %2708 = vmatprep.subr.bf16.mxu0 %v2667
    %2709 = vmatpush1.bf16.msra.mxu0 %v2666
    %2710 = vmatprep.subr.bf16.mxu0 %v2664
    %2711 = vmatpush1.bf16.msra.mxu0 %v2663
    %2712 = vmatprep.subr.bf16.mxu0 %v2661
    %2713 = vmatpush1.bf16.msra.mxu0 %v2660
    %2714 = vmatprep.subr.bf16.mxu0 %v2658
    %2715 = vmatpush1.bf16.msra.mxu0 %v2657
    %2716 = vmatprep.subr.bf16.mxu0 %v2655
    %2717 = vmatpush1.bf16.msra.mxu0 %v2654
    %2718 = vmatprep.subr.bf16.mxu0 0
    %2719 = vmatpush2.bf16.msra.mxu0 0
    %2720 = vmatprep.subr.bf16.mxu0 0
    %2721 = vmatpush2.bf16.msra.mxu0 0
    %2722 = vmatprep.subr.bf16.mxu0 0
    %2723 = vmatpush2.bf16.msra.mxu0 0
    %2724 = vmatprep.subr.bf16.mxu0 0
    %2725 = vmatpush2.bf16.msra.mxu0 0
    %2726 = vmatprep.subr.bf16.mxu0 0
    %2727 = vmatpush2.bf16.msra.mxu0 0
    %2728 = vmatprep.subr.bf16.mxu0 0
    %2729 = vmatpush2.bf16.msra.mxu0 0
    %2730 = vmatprep.subr.bf16.mxu0 0
    %2731 = vmatpush2.bf16.msra.mxu0 0
    %2732 = vmatprep.subr.bf16.mxu0 0
    %2733 = vmatpush2.bf16.msra.mxu0 0
    %2734 = vmatprep.mubr.bf16.mxu0 0
    %2735 = vmatmul.mubr.bf16.gmra.mxu0 %v2541
    %v2736 = vpop.f32.mrf.mxu0
    %v2737 = vadd.f32 0.0, %v2736
    %v2738 = vpop.f32.mrf.mxu0
    %v2739 = vadd.f32 0.0, %v2738
    %v2740 = vpop.f32.mrf.mxu0
    %v2741 = vpop.f32.mrf.mxu0
    %2742 = vdwg.mxu0
    %2743 = vmatprep.subr.bf16.mxu0 0
    %2744 = vmatpush1.bf16.msra.mxu0 %v2677
    %2745 = vmatprep.subr.bf16.mxu0 0
    %2746 = vmatpush1.bf16.msra.mxu0 %v2674
    %2747 = vmatprep.subr.bf16.mxu0 0
    %2748 = vmatpush1.bf16.msra.mxu0 %v2671
    %2749 = vmatprep.subr.bf16.mxu0 0
    %2750 = vmatpush1.bf16.msra.mxu0 %v2668
    %2751 = vmatprep.subr.bf16.mxu0 0
    %2752 = vmatpush1.bf16.msra.mxu0 %v2665
    %2753 = vmatprep.subr.bf16.mxu0 0
    %2754 = vmatpush1.bf16.msra.mxu0 %v2662
    %2755 = vmatprep.subr.bf16.mxu0 0
    %2756 = vmatpush1.bf16.msra.mxu0 %v2659
    %2757 = vmatprep.subr.bf16.mxu0 0
    %2758 = vmatpush1.bf16.msra.mxu0 %v2656
    %2759 = vmatprep.subr.bf16.mxu0 0
    %2760 = vmatpush2.bf16.msra.mxu0 0
    %2761 = vmatprep.subr.bf16.mxu0 0
    %2762 = vmatpush2.bf16.msra.mxu0 0
    %2763 = vmatprep.subr.bf16.mxu0 0
    %2764 = vmatpush2.bf16.msra.mxu0 0
    %2765 = vmatprep.subr.bf16.mxu0 0
    %2766 = vmatpush2.bf16.msra.mxu0 0
    %2767 = vmatprep.subr.bf16.mxu0 0
    %2768 = vmatpush2.bf16.msra.mxu0 0
    %2769 = vmatprep.subr.bf16.mxu0 0
    %2770 = vmatpush2.bf16.msra.mxu0 0
    %2771 = vmatprep.subr.bf16.mxu0 0
    %2772 = vmatpush2.bf16.msra.mxu0 0
    %2773 = vmatprep.subr.bf16.mxu0 0
    %2774 = vmatpush2.bf16.msra.mxu0 0
    %2775 = vmatprep.mubr.bf16.mxu0 0
    %2776 = vmatmul.mubr.bf16.gmra.mxu0 %v2541
    %v2777 = vpop.f32.mrf.mxu0
    %v2778 = vadd.f32 0.0, %v2777
    %v2779 = vpop.f32.mrf.mxu0
    %v2780 = vpop.f32.mrf.mxu0
    %v2781 = vpop.f32.mrf.mxu0
    %2782 = vdwg.mxu0
    %v2783 = vadd.f32 %v2538, %v2737
    %v2784 = vxor.u32 %v2783, 2147483648
    %v2785 = vmul.f32 %v2784, 1.442695
    %v2786 = vpow.pop %v2785
    %v2787 = vadd.f32 %v2786, 1.0
    %v2788 = vrcp.pop %v2787
    %v2789 = vmul.f32 1.0, %v2788
    %v2790 = vadd.f32 %v2539, %v2739
    %v2791 = vxor.u32 %v2790, 2147483648
    %v2792 = vmul.f32 %v2791, 1.442695
    %v2793 = vpow.pop %v2792
    %v2794 = vadd.f32 %v2793, 1.0
    %v2795 = vrcp.pop %v2794
    %v2796 = vmul.f32 1.0, %v2795
    %v2797 = vadd.f32 %v2778, %v107
    %v2798 = vmul.f32 %v2789, %v2797
    %v2799 = vadd.f32 %v2540, %v2798
    %v2800 = vtanh.pop %v2799
    %v2801 = vsub.f32 1.0, %v2796
    %v2802 = vmul.f32 %v2801, %v2800
    %v2803 = vmul.f32 %v2796, %v2264
    %v2804 = vadd.f32 %v2802, %v2803
    %s2805 = scalar_lea.vmem [#allocation12], 32
    %2806 = vst [vmem:[%s2805] sm:$0xff] %v2536
    %s2807 = scalar_lea.vmem [#allocation13], 24
    %2808 = vst [vmem:[%s2807] sm:$0xff] %v2804
    %s2809 = scalar_lea.vmem [#allocation4], 120
    %v2810 = vld [vmem:[%s2809] sm:$0xff]
    %v2811 = vld [vmem:[%s2809 + $0x8] sm:$0xff]
    %v2812 = vld [vmem:[%s2809 + $0x10] sm:$0xff]
    %v2813 = vpack.c.bf16 %v2536, %v2536
    %v2814 = vld [vmem:[#allocation9] sm:$0xff]
    %v2815 = vld [vmem:[#allocation9 + $0x8] sm:$0xf]
    %v2816 = vld [vmem:[#allocation9 + $0xc] sm:$0xff]
    %v2817 = vld [vmem:[#allocation9 + $0x14] sm:$0xf]
    %v2818 = vld [vmem:[#allocation9 + $0x18] sm:$0xff]
    %v2819 = vld [vmem:[#allocation9 + $0x20] sm:$0xf]
    %v2820 = vld [vmem:[#allocation9 + $0x24] sm:$0xff]
    %v2821 = vld [vmem:[#allocation9 + $0x2c] sm:$0xf]
    %v2822 = vld [vmem:[#allocation9 + $0x30] sm:$0xff]
    %v2823 = vld [vmem:[#allocation9 + $0x38] sm:$0xf]
    %v2824 = vld [vmem:[#allocation9 + $0x3c] sm:$0xff]
    %v2825 = vld [vmem:[#allocation9 + $0x44] sm:$0xf]
    %v2826 = vld [vmem:[#allocation9 + $0x48] sm:$0xff]
    %v2827 = vld [vmem:[#allocation9 + $0x50] sm:$0xf]
    %v2828 = vld [vmem:[#allocation9 + $0x54] sm:$0xff]
    %v2829 = vld [vmem:[#allocation9 + $0x5c] sm:$0xf]
    %v2830 = vld [vmem:[#allocation9 + $0x60] sm:$0xff]
    %v2831 = vld [vmem:[#allocation9 + $0x68] sm:$0xf]
    %v2832 = vld [vmem:[#allocation9 + $0x6c] sm:$0xff]
    %v2833 = vld [vmem:[#allocation9 + $0x74] sm:$0xf]
    %v2834 = vld [vmem:[#allocation9 + $0x78] sm:$0xff]
    %v2835 = vld [vmem:[#allocation9 + $0x80] sm:$0xf]
    %v2836 = vld [vmem:[#allocation9 + $0x84] sm:$0xff]
    %v2837 = vld [vmem:[#allocation9 + $0x8c] sm:$0xf]
    %v2838 = vld [vmem:[#allocation9 + $0x90] sm:$0xff]
    %v2839 = vld [vmem:[#allocation9 + $0x98] sm:$0xf]
    %v2840 = vld [vmem:[#allocation9 + $0x9c] sm:$0xff]
    %v2841 = vld [vmem:[#allocation9 + $0xa4] sm:$0xf]
    %v2842 = vld [vmem:[#allocation9 + $0xa8] sm:$0xff]
    %v2843 = vld [vmem:[#allocation9 + $0xb0] sm:$0xf]
    %v2844 = vld [vmem:[#allocation9 + $0xb4] sm:$0xff]
    %v2845 = vld [vmem:[#allocation9 + $0xbc] sm:$0xf]
    %v2878 = vunpack.c.l.b16 %v2814
    %v2879 = vunpack.c.h.b16 %v2814
    %v2880 = vunpack.c.l.b16 %v2815
    %v2881 = vunpack.c.l.b16 %v2816
    %v2882 = vunpack.c.h.b16 %v2816
    %v2883 = vunpack.c.l.b16 %v2817
    %v2884 = vunpack.c.l.b16 %v2818
    %v2885 = vunpack.c.h.b16 %v2818
    %v2886 = vunpack.c.l.b16 %v2819
    %v2887 = vunpack.c.l.b16 %v2820
    %v2888 = vunpack.c.h.b16 %v2820
    %v2889 = vunpack.c.l.b16 %v2821
    %v2890 = vunpack.c.l.b16 %v2822
    %v2891 = vunpack.c.h.b16 %v2822
    %v2892 = vunpack.c.l.b16 %v2823
    %v2893 = vunpack.c.l.b16 %v2824
    %v2894 = vunpack.c.h.b16 %v2824
    %v2895 = vunpack.c.l.b16 %v2825
    %v2896 = vunpack.c.l.b16 %v2826
    %v2897 = vunpack.c.h.b16 %v2826
    %v2898 = vunpack.c.l.b16 %v2827
    %v2899 = vunpack.c.l.b16 %v2828
    %v2900 = vunpack.c.h.b16 %v2828
    %v2901 = vunpack.c.l.b16 %v2829
    %v2902 = vunpack.c.l.b16 %v2830
    %v2903 = vunpack.c.h.b16 %v2830
    %v2904 = vunpack.c.l.b16 %v2831
    %v2905 = vunpack.c.l.b16 %v2832
    %v2906 = vunpack.c.h.b16 %v2832
    %v2907 = vunpack.c.l.b16 %v2833
    %v2908 = vunpack.c.l.b16 %v2834
    %v2909 = vunpack.c.h.b16 %v2834
    %v2910 = vunpack.c.l.b16 %v2835
    %v2911 = vunpack.c.l.b16 %v2836
    %v2912 = vunpack.c.h.b16 %v2836
    %v2913 = vunpack.c.l.b16 %v2837
    %v2914 = vunpack.c.l.b16 %v2838
    %v2915 = vunpack.c.h.b16 %v2838
    %v2916 = vunpack.c.l.b16 %v2839
    %v2917 = vunpack.c.l.b16 %v2840
    %v2918 = vunpack.c.h.b16 %v2840
    %v2919 = vunpack.c.l.b16 %v2841
    %v2920 = vunpack.c.l.b16 %v2842
    %v2921 = vunpack.c.h.b16 %v2842
    %v2922 = vunpack.c.l.b16 %v2843
    %v2923 = vunpack.c.l.b16 %v2844
    %v2924 = vunpack.c.h.b16 %v2844
    %v2925 = vunpack.c.l.b16 %v2845
    %v2926 = vpack.c.b16 %v2881, %v2878
    %v2927 = vpack.c.b16 %v2882, %v2879
    %v2928 = vpack.c.b16 %v2883, %v2880
    %v2929 = vpack.c.b16 %v2887, %v2884
    %v2930 = vpack.c.b16 %v2888, %v2885
    %v2931 = vpack.c.b16 %v2889, %v2886
    %v2932 = vpack.c.b16 %v2893, %v2890
    %v2933 = vpack.c.b16 %v2894, %v2891
    %v2934 = vpack.c.b16 %v2895, %v2892
    %v2935 = vpack.c.b16 %v2899, %v2896
    %v2936 = vpack.c.b16 %v2900, %v2897
    %v2937 = vpack.c.b16 %v2901, %v2898
    %v2938 = vpack.c.b16 %v2905, %v2902
    %v2939 = vpack.c.b16 %v2906, %v2903
    %v2940 = vpack.c.b16 %v2907, %v2904
    %v2941 = vpack.c.b16 %v2911, %v2908
    %v2942 = vpack.c.b16 %v2912, %v2909
    %v2943 = vpack.c.b16 %v2913, %v2910
    %v2944 = vpack.c.b16 %v2917, %v2914
    %v2945 = vpack.c.b16 %v2918, %v2915
    %v2946 = vpack.c.b16 %v2919, %v2916
    %v2947 = vpack.c.b16 %v2923, %v2920
    %v2948 = vpack.c.b16 %v2924, %v2921
    %v2949 = vpack.c.b16 %v2925, %v2922
    %2974 = vmatprep.subr.bf16.mxu0 %v2948
    %2975 = vmatpush1.bf16.msra.mxu0 %v2947
    %2976 = vmatprep.subr.bf16.mxu0 %v2945
    %2977 = vmatpush1.bf16.msra.mxu0 %v2944
    %2978 = vmatprep.subr.bf16.mxu0 %v2942
    %2979 = vmatpush1.bf16.msra.mxu0 %v2941
    %2980 = vmatprep.subr.bf16.mxu0 %v2939
    %2981 = vmatpush1.bf16.msra.mxu0 %v2938
    %2982 = vmatprep.subr.bf16.mxu0 %v2936
    %2983 = vmatpush1.bf16.msra.mxu0 %v2935
    %2984 = vmatprep.subr.bf16.mxu0 %v2933
    %2985 = vmatpush1.bf16.msra.mxu0 %v2932
    %2986 = vmatprep.subr.bf16.mxu0 %v2930
    %2987 = vmatpush1.bf16.msra.mxu0 %v2929
    %2988 = vmatprep.subr.bf16.mxu0 %v2927
    %2989 = vmatpush1.bf16.msra.mxu0 %v2926
    %2990 = vmatprep.subr.bf16.mxu0 0
    %2991 = vmatpush2.bf16.msra.mxu0 0
    %2992 = vmatprep.subr.bf16.mxu0 0
    %2993 = vmatpush2.bf16.msra.mxu0 0
    %2994 = vmatprep.subr.bf16.mxu0 0
    %2995 = vmatpush2.bf16.msra.mxu0 0
    %2996 = vmatprep.subr.bf16.mxu0 0
    %2997 = vmatpush2.bf16.msra.mxu0 0
    %2998 = vmatprep.subr.bf16.mxu0 0
    %2999 = vmatpush2.bf16.msra.mxu0 0
    %3000 = vmatprep.subr.bf16.mxu0 0
    %3001 = vmatpush2.bf16.msra.mxu0 0
    %3002 = vmatprep.subr.bf16.mxu0 0
    %3003 = vmatpush2.bf16.msra.mxu0 0
    %3004 = vmatprep.subr.bf16.mxu0 0
    %3005 = vmatpush2.bf16.msra.mxu0 0
    %3006 = vmatprep.mubr.bf16.mxu0 0
    %3007 = vmatmul.mubr.bf16.gmra.mxu0 %v2813
    %v3008 = vpop.f32.mrf.mxu0
    %v3009 = vadd.f32 0.0, %v3008
    %v3010 = vpop.f32.mrf.mxu0
    %v3011 = vadd.f32 0.0, %v3010
    %v3012 = vpop.f32.mrf.mxu0
    %v3013 = vpop.f32.mrf.mxu0
    %3014 = vdwg.mxu0
    %3015 = vmatprep.subr.bf16.mxu0 0
    %3016 = vmatpush1.bf16.msra.mxu0 %v2949
    %3017 = vmatprep.subr.bf16.mxu0 0
    %3018 = vmatpush1.bf16.msra.mxu0 %v2946
    %3019 = vmatprep.subr.bf16.mxu0 0
    %3020 = vmatpush1.bf16.msra.mxu0 %v2943
    %3021 = vmatprep.subr.bf16.mxu0 0
    %3022 = vmatpush1.bf16.msra.mxu0 %v2940
    %3023 = vmatprep.subr.bf16.mxu0 0
    %3024 = vmatpush1.bf16.msra.mxu0 %v2937
    %3025 = vmatprep.subr.bf16.mxu0 0
    %3026 = vmatpush1.bf16.msra.mxu0 %v2934
    %3027 = vmatprep.subr.bf16.mxu0 0
    %3028 = vmatpush1.bf16.msra.mxu0 %v2931
    %3029 = vmatprep.subr.bf16.mxu0 0
    %3030 = vmatpush1.bf16.msra.mxu0 %v2928
    %3031 = vmatprep.subr.bf16.mxu0 0
    %3032 = vmatpush2.bf16.msra.mxu0 0
    %3033 = vmatprep.subr.bf16.mxu0 0
    %3034 = vmatpush2.bf16.msra.mxu0 0
    %3035 = vmatprep.subr.bf16.mxu0 0
    %3036 = vmatpush2.bf16.msra.mxu0 0
    %3037 = vmatprep.subr.bf16.mxu0 0
    %3038 = vmatpush2.bf16.msra.mxu0 0
    %3039 = vmatprep.subr.bf16.mxu0 0
    %3040 = vmatpush2.bf16.msra.mxu0 0
    %3041 = vmatprep.subr.bf16.mxu0 0
    %3042 = vmatpush2.bf16.msra.mxu0 0
    %3043 = vmatprep.subr.bf16.mxu0 0
    %3044 = vmatpush2.bf16.msra.mxu0 0
    %3045 = vmatprep.subr.bf16.mxu0 0
    %3046 = vmatpush2.bf16.msra.mxu0 0
    %3047 = vmatprep.mubr.bf16.mxu0 0
    %3048 = vmatmul.mubr.bf16.gmra.mxu0 %v2813
    %v3049 = vpop.f32.mrf.mxu0
    %v3050 = vadd.f32 0.0, %v3049
    %v3051 = vpop.f32.mrf.mxu0
    %v3052 = vpop.f32.mrf.mxu0
    %v3053 = vpop.f32.mrf.mxu0
    %3054 = vdwg.mxu0
    %v3055 = vadd.f32 %v2810, %v3009
    %v3056 = vxor.u32 %v3055, 2147483648
    %v3057 = vmul.f32 %v3056, 1.442695
    %v3058 = vpow.pop %v3057
    %v3059 = vadd.f32 %v3058, 1.0
    %v3060 = vrcp.pop %v3059
    %v3061 = vmul.f32 1.0, %v3060
    %v3062 = vadd.f32 %v2811, %v3011
    %v3063 = vxor.u32 %v3062, 2147483648
    %v3064 = vmul.f32 %v3063, 1.442695
    %v3065 = vpow.pop %v3064
    %v3066 = vadd.f32 %v3065, 1.0
    %v3067 = vrcp.pop %v3066
    %v3068 = vmul.f32 1.0, %v3067
    %v3069 = vadd.f32 %v3050, %v100
    %v3070 = vmul.f32 %v3061, %v3069
    %v3071 = vadd.f32 %v2812, %v3070
    %v3072 = vtanh.pop %v3071
    %v3073 = vsub.f32 1.0, %v3068
    %v3074 = vmul.f32 %v3073, %v3072
    %v3075 = vmul.f32 %v3068, %v2536
    %v3076 = vadd.f32 %v3074, %v3075
    %s3077 = scalar_lea.vmem [#allocation7], 48
    %v3078 = vld [vmem:[%s3077] sm:$0xff]
    %v3079 = vld [vmem:[%s3077 + $0x8] sm:$0xff]
    %v3080 = vld [vmem:[%s3077 + $0x10] sm:$0xff]
    %v3081 = vpack.c.bf16 %v2804, %v2804
    %v3082 = vld [vmem:[#allocation10] sm:$0xff]
    %v3083 = vld [vmem:[#allocation10 + $0x8] sm:$0xf]
    %v3084 = vld [vmem:[#allocation10 + $0xc] sm:$0xff]
    %v3085 = vld [vmem:[#allocation10 + $0x14] sm:$0xf]
    %v3086 = vld [vmem:[#allocation10 + $0x18] sm:$0xff]
    %v3087 = vld [vmem:[#allocation10 + $0x20] sm:$0xf]
    %v3088 = vld [vmem:[#allocation10 + $0x24] sm:$0xff]
    %v3089 = vld [vmem:[#allocation10 + $0x2c] sm:$0xf]
    %v3090 = vld [vmem:[#allocation10 + $0x30] sm:$0xff]
    %v3091 = vld [vmem:[#allocation10 + $0x38] sm:$0xf]
    %v3092 = vld [vmem:[#allocation10 + $0x3c] sm:$0xff]
    %v3093 = vld [vmem:[#allocation10 + $0x44] sm:$0xf]
    %v3094 = vld [vmem:[#allocation10 + $0x48] sm:$0xff]
    %v3095 = vld [vmem:[#allocation10 + $0x50] sm:$0xf]
    %v3096 = vld [vmem:[#allocation10 + $0x54] sm:$0xff]
    %v3097 = vld [vmem:[#allocation10 + $0x5c] sm:$0xf]
    %v3098 = vld [vmem:[#allocation10 + $0x60] sm:$0xff]
    %v3099 = vld [vmem:[#allocation10 + $0x68] sm:$0xf]
    %v3100 = vld [vmem:[#allocation10 + $0x6c] sm:$0xff]
    %v3101 = vld [vmem:[#allocation10 + $0x74] sm:$0xf]
    %v3102 = vld [vmem:[#allocation10 + $0x78] sm:$0xff]
    %v3103 = vld [vmem:[#allocation10 + $0x80] sm:$0xf]
    %v3104 = vld [vmem:[#allocation10 + $0x84] sm:$0xff]
    %v3105 = vld [vmem:[#allocation10 + $0x8c] sm:$0xf]
    %v3106 = vld [vmem:[#allocation10 + $0x90] sm:$0xff]
    %v3107 = vld [vmem:[#allocation10 + $0x98] sm:$0xf]
    %v3108 = vld [vmem:[#allocation10 + $0x9c] sm:$0xff]
    %v3109 = vld [vmem:[#allocation10 + $0xa4] sm:$0xf]
    %v3110 = vld [vmem:[#allocation10 + $0xa8] sm:$0xff]
    %v3111 = vld [vmem:[#allocation10 + $0xb0] sm:$0xf]
    %v3112 = vld [vmem:[#allocation10 + $0xb4] sm:$0xff]
    %v3113 = vld [vmem:[#allocation10 + $0xbc] sm:$0xf]
    %v3146 = vunpack.c.l.b16 %v3082
    %v3147 = vunpack.c.h.b16 %v3082
    %v3148 = vunpack.c.l.b16 %v3083
    %v3149 = vunpack.c.l.b16 %v3084
    %v3150 = vunpack.c.h.b16 %v3084
    %v3151 = vunpack.c.l.b16 %v3085
    %v3152 = vunpack.c.l.b16 %v3086
    %v3153 = vunpack.c.h.b16 %v3086
    %v3154 = vunpack.c.l.b16 %v3087
    %v3155 = vunpack.c.l.b16 %v3088
    %v3156 = vunpack.c.h.b16 %v3088
    %v3157 = vunpack.c.l.b16 %v3089
    %v3158 = vunpack.c.l.b16 %v3090
    %v3159 = vunpack.c.h.b16 %v3090
    %v3160 = vunpack.c.l.b16 %v3091
    %v3161 = vunpack.c.l.b16 %v3092
    %v3162 = vunpack.c.h.b16 %v3092
    %v3163 = vunpack.c.l.b16 %v3093
    %v3164 = vunpack.c.l.b16 %v3094
    %v3165 = vunpack.c.h.b16 %v3094
    %v3166 = vunpack.c.l.b16 %v3095
    %v3167 = vunpack.c.l.b16 %v3096
    %v3168 = vunpack.c.h.b16 %v3096
    %v3169 = vunpack.c.l.b16 %v3097
    %v3170 = vunpack.c.l.b16 %v3098
    %v3171 = vunpack.c.h.b16 %v3098
    %v3172 = vunpack.c.l.b16 %v3099
    %v3173 = vunpack.c.l.b16 %v3100
    %v3174 = vunpack.c.h.b16 %v3100
    %v3175 = vunpack.c.l.b16 %v3101
    %v3176 = vunpack.c.l.b16 %v3102
    %v3177 = vunpack.c.h.b16 %v3102
    %v3178 = vunpack.c.l.b16 %v3103
    %v3179 = vunpack.c.l.b16 %v3104
    %v3180 = vunpack.c.h.b16 %v3104
    %v3181 = vunpack.c.l.b16 %v3105
    %v3182 = vunpack.c.l.b16 %v3106
    %v3183 = vunpack.c.h.b16 %v3106
    %v3184 = vunpack.c.l.b16 %v3107
    %v3185 = vunpack.c.l.b16 %v3108
    %v3186 = vunpack.c.h.b16 %v3108
    %v3187 = vunpack.c.l.b16 %v3109
    %v3188 = vunpack.c.l.b16 %v3110
    %v3189 = vunpack.c.h.b16 %v3110
    %v3190 = vunpack.c.l.b16 %v3111
    %v3191 = vunpack.c.l.b16 %v3112
    %v3192 = vunpack.c.h.b16 %v3112
    %v3193 = vunpack.c.l.b16 %v3113
    %v3194 = vpack.c.b16 %v3149, %v3146
    %v3195 = vpack.c.b16 %v3150, %v3147
    %v3196 = vpack.c.b16 %v3151, %v3148
    %v3197 = vpack.c.b16 %v3155, %v3152
    %v3198 = vpack.c.b16 %v3156, %v3153
    %v3199 = vpack.c.b16 %v3157, %v3154
    %v3200 = vpack.c.b16 %v3161, %v3158
    %v3201 = vpack.c.b16 %v3162, %v3159
    %v3202 = vpack.c.b16 %v3163, %v3160
    %v3203 = vpack.c.b16 %v3167, %v3164
    %v3204 = vpack.c.b16 %v3168, %v3165
    %v3205 = vpack.c.b16 %v3169, %v3166
    %v3206 = vpack.c.b16 %v3173, %v3170
    %v3207 = vpack.c.b16 %v3174, %v3171
    %v3208 = vpack.c.b16 %v3175, %v3172
    %v3209 = vpack.c.b16 %v3179, %v3176
    %v3210 = vpack.c.b16 %v3180, %v3177
    %v3211 = vpack.c.b16 %v3181, %v3178
    %v3212 = vpack.c.b16 %v3185, %v3182
    %v3213 = vpack.c.b16 %v3186, %v3183
    %v3214 = vpack.c.b16 %v3187, %v3184
    %v3215 = vpack.c.b16 %v3191, %v3188
    %v3216 = vpack.c.b16 %v3192, %v3189
    %v3217 = vpack.c.b16 %v3193, %v3190
    %3242 = vmatprep.subr.bf16.mxu0 %v3216
    %3243 = vmatpush1.bf16.msra.mxu0 %v3215
    %3244 = vmatprep.subr.bf16.mxu0 %v3213
    %3245 = vmatpush1.bf16.msra.mxu0 %v3212
    %3246 = vmatprep.subr.bf16.mxu0 %v3210
    %3247 = vmatpush1.bf16.msra.mxu0 %v3209
    %3248 = vmatprep.subr.bf16.mxu0 %v3207
    %3249 = vmatpush1.bf16.msra.mxu0 %v3206
    %3250 = vmatprep.subr.bf16.mxu0 %v3204
    %3251 = vmatpush1.bf16.msra.mxu0 %v3203
    %3252 = vmatprep.subr.bf16.mxu0 %v3201
    %3253 = vmatpush1.bf16.msra.mxu0 %v3200
    %3254 = vmatprep.subr.bf16.mxu0 %v3198
    %3255 = vmatpush1.bf16.msra.mxu0 %v3197
    %3256 = vmatprep.subr.bf16.mxu0 %v3195
    %3257 = vmatpush1.bf16.msra.mxu0 %v3194
    %3258 = vmatprep.subr.bf16.mxu0 0
    %3259 = vmatpush2.bf16.msra.mxu0 0
    %3260 = vmatprep.subr.bf16.mxu0 0
    %3261 = vmatpush2.bf16.msra.mxu0 0
    %3262 = vmatprep.subr.bf16.mxu0 0
    %3263 = vmatpush2.bf16.msra.mxu0 0
    %3264 = vmatprep.subr.bf16.mxu0 0
    %3265 = vmatpush2.bf16.msra.mxu0 0
    %3266 = vmatprep.subr.bf16.mxu0 0
    %3267 = vmatpush2.bf16.msra.mxu0 0
    %3268 = vmatprep.subr.bf16.mxu0 0
    %3269 = vmatpush2.bf16.msra.mxu0 0
    %3270 = vmatprep.subr.bf16.mxu0 0
    %3271 = vmatpush2.bf16.msra.mxu0 0
    %3272 = vmatprep.subr.bf16.mxu0 0
    %3273 = vmatpush2.bf16.msra.mxu0 0
    %3274 = vmatprep.mubr.bf16.mxu0 0
    %3275 = vmatmul.mubr.bf16.gmra.mxu0 %v3081
    %v3276 = vpop.f32.mrf.mxu0
    %v3277 = vadd.f32 0.0, %v3276
    %v3278 = vpop.f32.mrf.mxu0
    %v3279 = vadd.f32 0.0, %v3278
    %v3280 = vpop.f32.mrf.mxu0
    %v3281 = vpop.f32.mrf.mxu0
    %3282 = vdwg.mxu0
    %3283 = vmatprep.subr.bf16.mxu0 0
    %3284 = vmatpush1.bf16.msra.mxu0 %v3217
    %3285 = vmatprep.subr.bf16.mxu0 0
    %3286 = vmatpush1.bf16.msra.mxu0 %v3214
    %3287 = vmatprep.subr.bf16.mxu0 0
    %3288 = vmatpush1.bf16.msra.mxu0 %v3211
    %3289 = vmatprep.subr.bf16.mxu0 0
    %3290 = vmatpush1.bf16.msra.mxu0 %v3208
    %3291 = vmatprep.subr.bf16.mxu0 0
    %3292 = vmatpush1.bf16.msra.mxu0 %v3205
    %3293 = vmatprep.subr.bf16.mxu0 0
    %3294 = vmatpush1.bf16.msra.mxu0 %v3202
    %3295 = vmatprep.subr.bf16.mxu0 0
    %3296 = vmatpush1.bf16.msra.mxu0 %v3199
    %3297 = vmatprep.subr.bf16.mxu0 0
    %3298 = vmatpush1.bf16.msra.mxu0 %v3196
    %3299 = vmatprep.subr.bf16.mxu0 0
    %3300 = vmatpush2.bf16.msra.mxu0 0
    %3301 = vmatprep.subr.bf16.mxu0 0
    %3302 = vmatpush2.bf16.msra.mxu0 0
    %3303 = vmatprep.subr.bf16.mxu0 0
    %3304 = vmatpush2.bf16.msra.mxu0 0
    %3305 = vmatprep.subr.bf16.mxu0 0
    %3306 = vmatpush2.bf16.msra.mxu0 0
    %3307 = vmatprep.subr.bf16.mxu0 0
    %3308 = vmatpush2.bf16.msra.mxu0 0
    %3309 = vmatprep.subr.bf16.mxu0 0
    %3310 = vmatpush2.bf16.msra.mxu0 0
    %3311 = vmatprep.subr.bf16.mxu0 0
    %3312 = vmatpush2.bf16.msra.mxu0 0
    %3313 = vmatprep.subr.bf16.mxu0 0
    %3314 = vmatpush2.bf16.msra.mxu0 0
    %3315 = vmatprep.mubr.bf16.mxu0 0
    %3316 = vmatmul.mubr.bf16.gmra.mxu0 %v3081
    %v3317 = vpop.f32.mrf.mxu0
    %v3318 = vadd.f32 0.0, %v3317
    %v3319 = vpop.f32.mrf.mxu0
    %v3320 = vpop.f32.mrf.mxu0
    %v3321 = vpop.f32.mrf.mxu0
    %3322 = vdwg.mxu0
    %v3323 = vadd.f32 %v3078, %v3277
    %v3324 = vxor.u32 %v3323, 2147483648
    %v3325 = vmul.f32 %v3324, 1.442695
    %v3326 = vpow.pop %v3325
    %v3327 = vadd.f32 %v3326, 1.0
    %v3328 = vrcp.pop %v3327
    %v3329 = vmul.f32 1.0, %v3328
    %v3330 = vadd.f32 %v3079, %v3279
    %v3331 = vxor.u32 %v3330, 2147483648
    %v3332 = vmul.f32 %v3331, 1.442695
    %v3333 = vpow.pop %v3332
    %v3334 = vadd.f32 %v3333, 1.0
    %v3335 = vrcp.pop %v3334
    %v3336 = vmul.f32 1.0, %v3335
    %v3337 = vadd.f32 %v3318, %v107
    %v3338 = vmul.f32 %v3329, %v3337
    %v3339 = vadd.f32 %v3080, %v3338
    %v3340 = vtanh.pop %v3339
    %v3341 = vsub.f32 1.0, %v3336
    %v3342 = vmul.f32 %v3341, %v3340
    %v3343 = vmul.f32 %v3336, %v2804
    %v3344 = vadd.f32 %v3342, %v3343
    %s3345 = scalar_lea.vmem [#allocation12], 40
    %3346 = vst [vmem:[%s3345] sm:$0xff] %v3076
    %s3347 = scalar_lea.vmem [#allocation13], 16
    %3348 = vst [vmem:[%s3347] sm:$0xff] %v3344
    %s3349 = scalar_lea.vmem [#allocation4], 144
    %v3350 = vld [vmem:[%s3349] sm:$0xff]
    %v3351 = vld [vmem:[%s3349 + $0x8] sm:$0xff]
    %v3352 = vld [vmem:[%s3349 + $0x10] sm:$0xff]
    %v3353 = vpack.c.bf16 %v3076, %v3076
    %v3354 = vld [vmem:[#allocation9] sm:$0xff]
    %v3355 = vld [vmem:[#allocation9 + $0x8] sm:$0xf]
    %v3356 = vld [vmem:[#allocation9 + $0xc] sm:$0xff]
    %v3357 = vld [vmem:[#allocation9 + $0x14] sm:$0xf]
    %v3358 = vld [vmem:[#allocation9 + $0x18] sm:$0xff]
    %v3359 = vld [vmem:[#allocation9 + $0x20] sm:$0xf]
    %v3360 = vld [vmem:[#allocation9 + $0x24] sm:$0xff]
    %v3361 = vld [vmem:[#allocation9 + $0x2c] sm:$0xf]
    %v3362 = vld [vmem:[#allocation9 + $0x30] sm:$0xff]
    %v3363 = vld [vmem:[#allocation9 + $0x38] sm:$0xf]
    %v3364 = vld [vmem:[#allocation9 + $0x3c] sm:$0xff]
    %v3365 = vld [vmem:[#allocation9 + $0x44] sm:$0xf]
    %v3366 = vld [vmem:[#allocation9 + $0x48] sm:$0xff]
    %v3367 = vld [vmem:[#allocation9 + $0x50] sm:$0xf]
    %v3368 = vld [vmem:[#allocation9 + $0x54] sm:$0xff]
    %v3369 = vld [vmem:[#allocation9 + $0x5c] sm:$0xf]
    %v3370 = vld [vmem:[#allocation9 + $0x60] sm:$0xff]
    %v3371 = vld [vmem:[#allocation9 + $0x68] sm:$0xf]
    %v3372 = vld [vmem:[#allocation9 + $0x6c] sm:$0xff]
    %v3373 = vld [vmem:[#allocation9 + $0x74] sm:$0xf]
    %v3374 = vld [vmem:[#allocation9 + $0x78] sm:$0xff]
    %v3375 = vld [vmem:[#allocation9 + $0x80] sm:$0xf]
    %v3376 = vld [vmem:[#allocation9 + $0x84] sm:$0xff]
    %v3377 = vld [vmem:[#allocation9 + $0x8c] sm:$0xf]
    %v3378 = vld [vmem:[#allocation9 + $0x90] sm:$0xff]
    %v3379 = vld [vmem:[#allocation9 + $0x98] sm:$0xf]
    %v3380 = vld [vmem:[#allocation9 + $0x9c] sm:$0xff]
    %v3381 = vld [vmem:[#allocation9 + $0xa4] sm:$0xf]
    %v3382 = vld [vmem:[#allocation9 + $0xa8] sm:$0xff]
    %v3383 = vld [vmem:[#allocation9 + $0xb0] sm:$0xf]
    %v3384 = vld [vmem:[#allocation9 + $0xb4] sm:$0xff]
    %v3385 = vld [vmem:[#allocation9 + $0xbc] sm:$0xf]
    %v3418 = vunpack.c.l.b16 %v3354
    %v3419 = vunpack.c.h.b16 %v3354
    %v3420 = vunpack.c.l.b16 %v3355
    %v3421 = vunpack.c.l.b16 %v3356
    %v3422 = vunpack.c.h.b16 %v3356
    %v3423 = vunpack.c.l.b16 %v3357
    %v3424 = vunpack.c.l.b16 %v3358
    %v3425 = vunpack.c.h.b16 %v3358
    %v3426 = vunpack.c.l.b16 %v3359
    %v3427 = vunpack.c.l.b16 %v3360
    %v3428 = vunpack.c.h.b16 %v3360
    %v3429 = vunpack.c.l.b16 %v3361
    %v3430 = vunpack.c.l.b16 %v3362
    %v3431 = vunpack.c.h.b16 %v3362
    %v3432 = vunpack.c.l.b16 %v3363
    %v3433 = vunpack.c.l.b16 %v3364
    %v3434 = vunpack.c.h.b16 %v3364
    %v3435 = vunpack.c.l.b16 %v3365
    %v3436 = vunpack.c.l.b16 %v3366
    %v3437 = vunpack.c.h.b16 %v3366
    %v3438 = vunpack.c.l.b16 %v3367
    %v3439 = vunpack.c.l.b16 %v3368
    %v3440 = vunpack.c.h.b16 %v3368
    %v3441 = vunpack.c.l.b16 %v3369
    %v3442 = vunpack.c.l.b16 %v3370
    %v3443 = vunpack.c.h.b16 %v3370
    %v3444 = vunpack.c.l.b16 %v3371
    %v3445 = vunpack.c.l.b16 %v3372
    %v3446 = vunpack.c.h.b16 %v3372
    %v3447 = vunpack.c.l.b16 %v3373
    %v3448 = vunpack.c.l.b16 %v3374
    %v3449 = vunpack.c.h.b16 %v3374
    %v3450 = vunpack.c.l.b16 %v3375
    %v3451 = vunpack.c.l.b16 %v3376
    %v3452 = vunpack.c.h.b16 %v3376
    %v3453 = vunpack.c.l.b16 %v3377
    %v3454 = vunpack.c.l.b16 %v3378
    %v3455 = vunpack.c.h.b16 %v3378
    %v3456 = vunpack.c.l.b16 %v3379
    %v3457 = vunpack.c.l.b16 %v3380
    %v3458 = vunpack.c.h.b16 %v3380
    %v3459 = vunpack.c.l.b16 %v3381
    %v3460 = vunpack.c.l.b16 %v3382
    %v3461 = vunpack.c.h.b16 %v3382
    %v3462 = vunpack.c.l.b16 %v3383
    %v3463 = vunpack.c.l.b16 %v3384
    %v3464 = vunpack.c.h.b16 %v3384
    %v3465 = vunpack.c.l.b16 %v3385
    %v3466 = vpack.c.b16 %v3421, %v3418
    %v3467 = vpack.c.b16 %v3422, %v3419
    %v3468 = vpack.c.b16 %v3423, %v3420
    %v3469 = vpack.c.b16 %v3427, %v3424
    %v3470 = vpack.c.b16 %v3428, %v3425
    %v3471 = vpack.c.b16 %v3429, %v3426
    %v3472 = vpack.c.b16 %v3433, %v3430
    %v3473 = vpack.c.b16 %v3434, %v3431
    %v3474 = vpack.c.b16 %v3435, %v3432
    %v3475 = vpack.c.b16 %v3439, %v3436
    %v3476 = vpack.c.b16 %v3440, %v3437
    %v3477 = vpack.c.b16 %v3441, %v3438
    %v3478 = vpack.c.b16 %v3445, %v3442
    %v3479 = vpack.c.b16 %v3446, %v3443
    %v3480 = vpack.c.b16 %v3447, %v3444
    %v3481 = vpack.c.b16 %v3451, %v3448
    %v3482 = vpack.c.b16 %v3452, %v3449
    %v3483 = vpack.c.b16 %v3453, %v3450
    %v3484 = vpack.c.b16 %v3457, %v3454
    %v3485 = vpack.c.b16 %v3458, %v3455
    %v3486 = vpack.c.b16 %v3459, %v3456
    %v3487 = vpack.c.b16 %v3463, %v3460
    %v3488 = vpack.c.b16 %v3464, %v3461
    %v3489 = vpack.c.b16 %v3465, %v3462
    %3514 = vmatprep.subr.bf16.mxu0 %v3488
    %3515 = vmatpush1.bf16.msra.mxu0 %v3487
    %3516 = vmatprep.subr.bf16.mxu0 %v3485
    %3517 = vmatpush1.bf16.msra.mxu0 %v3484
    %3518 = vmatprep.subr.bf16.mxu0 %v3482
    %3519 = vmatpush1.bf16.msra.mxu0 %v3481
    %3520 = vmatprep.subr.bf16.mxu0 %v3479
    %3521 = vmatpush1.bf16.msra.mxu0 %v3478
    %3522 = vmatprep.subr.bf16.mxu0 %v3476
    %3523 = vmatpush1.bf16.msra.mxu0 %v3475
    %3524 = vmatprep.subr.bf16.mxu0 %v3473
    %3525 = vmatpush1.bf16.msra.mxu0 %v3472
    %3526 = vmatprep.subr.bf16.mxu0 %v3470
    %3527 = vmatpush1.bf16.msra.mxu0 %v3469
    %3528 = vmatprep.subr.bf16.mxu0 %v3467
    %3529 = vmatpush1.bf16.msra.mxu0 %v3466
    %3530 = vmatprep.subr.bf16.mxu0 0
    %3531 = vmatpush2.bf16.msra.mxu0 0
    %3532 = vmatprep.subr.bf16.mxu0 0
    %3533 = vmatpush2.bf16.msra.mxu0 0
    %3534 = vmatprep.subr.bf16.mxu0 0
    %3535 = vmatpush2.bf16.msra.mxu0 0
    %3536 = vmatprep.subr.bf16.mxu0 0
    %3537 = vmatpush2.bf16.msra.mxu0 0
    %3538 = vmatprep.subr.bf16.mxu0 0
    %3539 = vmatpush2.bf16.msra.mxu0 0
    %3540 = vmatprep.subr.bf16.mxu0 0
    %3541 = vmatpush2.bf16.msra.mxu0 0
    %3542 = vmatprep.subr.bf16.mxu0 0
    %3543 = vmatpush2.bf16.msra.mxu0 0
    %3544 = vmatprep.subr.bf16.mxu0 0
    %3545 = vmatpush2.bf16.msra.mxu0 0
    %3546 = vmatprep.mubr.bf16.mxu0 0
    %3547 = vmatmul.mubr.bf16.gmra.mxu0 %v3353
    %v3548 = vpop.f32.mrf.mxu0
    %v3549 = vadd.f32 0.0, %v3548
    %v3550 = vpop.f32.mrf.mxu0
    %v3551 = vadd.f32 0.0, %v3550
    %v3552 = vpop.f32.mrf.mxu0
    %v3553 = vpop.f32.mrf.mxu0
    %3554 = vdwg.mxu0
    %3555 = vmatprep.subr.bf16.mxu0 0
    %3556 = vmatpush1.bf16.msra.mxu0 %v3489
    %3557 = vmatprep.subr.bf16.mxu0 0
    %3558 = vmatpush1.bf16.msra.mxu0 %v3486
    %3559 = vmatprep.subr.bf16.mxu0 0
    %3560 = vmatpush1.bf16.msra.mxu0 %v3483
    %3561 = vmatprep.subr.bf16.mxu0 0
    %3562 = vmatpush1.bf16.msra.mxu0 %v3480
    %3563 = vmatprep.subr.bf16.mxu0 0
    %3564 = vmatpush1.bf16.msra.mxu0 %v3477
    %3565 = vmatprep.subr.bf16.mxu0 0
    %3566 = vmatpush1.bf16.msra.mxu0 %v3474
    %3567 = vmatprep.subr.bf16.mxu0 0
    %3568 = vmatpush1.bf16.msra.mxu0 %v3471
    %3569 = vmatprep.subr.bf16.mxu0 0
    %3570 = vmatpush1.bf16.msra.mxu0 %v3468
    %3571 = vmatprep.subr.bf16.mxu0 0
    %3572 = vmatpush2.bf16.msra.mxu0 0
    %3573 = vmatprep.subr.bf16.mxu0 0
    %3574 = vmatpush2.bf16.msra.mxu0 0
    %3575 = vmatprep.subr.bf16.mxu0 0
    %3576 = vmatpush2.bf16.msra.mxu0 0
    %3577 = vmatprep.subr.bf16.mxu0 0
    %3578 = vmatpush2.bf16.msra.mxu0 0
    %3579 = vmatprep.subr.bf16.mxu0 0
    %3580 = vmatpush2.bf16.msra.mxu0 0
    %3581 = vmatprep.subr.bf16.mxu0 0
    %3582 = vmatpush2.bf16.msra.mxu0 0
    %3583 = vmatprep.subr.bf16.mxu0 0
    %3584 = vmatpush2.bf16.msra.mxu0 0
    %3585 = vmatprep.subr.bf16.mxu0 0
    %3586 = vmatpush2.bf16.msra.mxu0 0
    %3587 = vmatprep.mubr.bf16.mxu0 0
    %3588 = vmatmul.mubr.bf16.gmra.mxu0 %v3353
    %v3589 = vpop.f32.mrf.mxu0
    %v3590 = vadd.f32 0.0, %v3589
    %v3591 = vpop.f32.mrf.mxu0
    %v3592 = vpop.f32.mrf.mxu0
    %v3593 = vpop.f32.mrf.mxu0
    %3594 = vdwg.mxu0
    %v3595 = vadd.f32 %v3350, %v3549
    %v3596 = vxor.u32 %v3595, 2147483648
    %v3597 = vmul.f32 %v3596, 1.442695
    %v3598 = vpow.pop %v3597
    %v3599 = vadd.f32 %v3598, 1.0
    %v3600 = vrcp.pop %v3599
    %v3601 = vmul.f32 1.0, %v3600
    %v3602 = vadd.f32 %v3351, %v3551
    %v3603 = vxor.u32 %v3602, 2147483648
    %v3604 = vmul.f32 %v3603, 1.442695
    %v3605 = vpow.pop %v3604
    %v3606 = vadd.f32 %v3605, 1.0
    %v3607 = vrcp.pop %v3606
    %v3608 = vmul.f32 1.0, %v3607
    %v3609 = vadd.f32 %v3590, %v100
    %v3610 = vmul.f32 %v3601, %v3609
    %v3611 = vadd.f32 %v3352, %v3610
    %v3612 = vtanh.pop %v3611
    %v3613 = vsub.f32 1.0, %v3608
    %v3614 = vmul.f32 %v3613, %v3612
    %v3615 = vmul.f32 %v3608, %v3076
    %v3616 = vadd.f32 %v3614, %v3615
    %s3617 = scalar_lea.vmem [#allocation7], 24
    %v3618 = vld [vmem:[%s3617] sm:$0xff]
    %v3619 = vld [vmem:[%s3617 + $0x8] sm:$0xff]
    %v3620 = vld [vmem:[%s3617 + $0x10] sm:$0xff]
    %v3621 = vpack.c.bf16 %v3344, %v3344
    %v3622 = vld [vmem:[#allocation10] sm:$0xff]
    %v3623 = vld [vmem:[#allocation10 + $0x8] sm:$0xf]
    %v3624 = vld [vmem:[#allocation10 + $0xc] sm:$0xff]
    %v3625 = vld [vmem:[#allocation10 + $0x14] sm:$0xf]
    %v3626 = vld [vmem:[#allocation10 + $0x18] sm:$0xff]
    %v3627 = vld [vmem:[#allocation10 + $0x20] sm:$0xf]
    %v3628 = vld [vmem:[#allocation10 + $0x24] sm:$0xff]
    %v3629 = vld [vmem:[#allocation10 + $0x2c] sm:$0xf]
    %v3630 = vld [vmem:[#allocation10 + $0x30] sm:$0xff]
    %v3631 = vld [vmem:[#allocation10 + $0x38] sm:$0xf]
    %v3632 = vld [vmem:[#allocation10 + $0x3c] sm:$0xff]
    %v3633 = vld [vmem:[#allocation10 + $0x44] sm:$0xf]
    %v3634 = vld [vmem:[#allocation10 + $0x48] sm:$0xff]
    %v3635 = vld [vmem:[#allocation10 + $0x50] sm:$0xf]
    %v3636 = vld [vmem:[#allocation10 + $0x54] sm:$0xff]
    %v3637 = vld [vmem:[#allocation10 + $0x5c] sm:$0xf]
    %v3638 = vld [vmem:[#allocation10 + $0x60] sm:$0xff]
    %v3639 = vld [vmem:[#allocation10 + $0x68] sm:$0xf]
    %v3640 = vld [vmem:[#allocation10 + $0x6c] sm:$0xff]
    %v3641 = vld [vmem:[#allocation10 + $0x74] sm:$0xf]
    %v3642 = vld [vmem:[#allocation10 + $0x78] sm:$0xff]
    %v3643 = vld [vmem:[#allocation10 + $0x80] sm:$0xf]
    %v3644 = vld [vmem:[#allocation10 + $0x84] sm:$0xff]
    %v3645 = vld [vmem:[#allocation10 + $0x8c] sm:$0xf]
    %v3646 = vld [vmem:[#allocation10 + $0x90] sm:$0xff]
    %v3647 = vld [vmem:[#allocation10 + $0x98] sm:$0xf]
    %v3648 = vld [vmem:[#allocation10 + $0x9c] sm:$0xff]
    %v3649 = vld [vmem:[#allocation10 + $0xa4] sm:$0xf]
    %v3650 = vld [vmem:[#allocation10 + $0xa8] sm:$0xff]
    %v3651 = vld [vmem:[#allocation10 + $0xb0] sm:$0xf]
    %v3652 = vld [vmem:[#allocation10 + $0xb4] sm:$0xff]
    %v3653 = vld [vmem:[#allocation10 + $0xbc] sm:$0xf]
    %v3686 = vunpack.c.l.b16 %v3622
    %v3687 = vunpack.c.h.b16 %v3622
    %v3688 = vunpack.c.l.b16 %v3623
    %v3689 = vunpack.c.l.b16 %v3624
    %v3690 = vunpack.c.h.b16 %v3624
    %v3691 = vunpack.c.l.b16 %v3625
    %v3692 = vunpack.c.l.b16 %v3626
    %v3693 = vunpack.c.h.b16 %v3626
    %v3694 = vunpack.c.l.b16 %v3627
    %v3695 = vunpack.c.l.b16 %v3628
    %v3696 = vunpack.c.h.b16 %v3628
    %v3697 = vunpack.c.l.b16 %v3629
    %v3698 = vunpack.c.l.b16 %v3630
    %v3699 = vunpack.c.h.b16 %v3630
    %v3700 = vunpack.c.l.b16 %v3631
    %v3701 = vunpack.c.l.b16 %v3632
    %v3702 = vunpack.c.h.b16 %v3632
    %v3703 = vunpack.c.l.b16 %v3633
    %v3704 = vunpack.c.l.b16 %v3634
    %v3705 = vunpack.c.h.b16 %v3634
    %v3706 = vunpack.c.l.b16 %v3635
    %v3707 = vunpack.c.l.b16 %v3636
    %v3708 = vunpack.c.h.b16 %v3636
    %v3709 = vunpack.c.l.b16 %v3637
    %v3710 = vunpack.c.l.b16 %v3638
    %v3711 = vunpack.c.h.b16 %v3638
    %v3712 = vunpack.c.l.b16 %v3639
    %v3713 = vunpack.c.l.b16 %v3640
    %v3714 = vunpack.c.h.b16 %v3640
    %v3715 = vunpack.c.l.b16 %v3641
    %v3716 = vunpack.c.l.b16 %v3642
    %v3717 = vunpack.c.h.b16 %v3642
    %v3718 = vunpack.c.l.b16 %v3643
    %v3719 = vunpack.c.l.b16 %v3644
    %v3720 = vunpack.c.h.b16 %v3644
    %v3721 = vunpack.c.l.b16 %v3645
    %v3722 = vunpack.c.l.b16 %v3646
    %v3723 = vunpack.c.h.b16 %v3646
    %v3724 = vunpack.c.l.b16 %v3647
    %v3725 = vunpack.c.l.b16 %v3648
    %v3726 = vunpack.c.h.b16 %v3648
    %v3727 = vunpack.c.l.b16 %v3649
    %v3728 = vunpack.c.l.b16 %v3650
    %v3729 = vunpack.c.h.b16 %v3650
    %v3730 = vunpack.c.l.b16 %v3651
    %v3731 = vunpack.c.l.b16 %v3652
    %v3732 = vunpack.c.h.b16 %v3652
    %v3733 = vunpack.c.l.b16 %v3653
    %v3734 = vpack.c.b16 %v3689, %v3686
    %v3735 = vpack.c.b16 %v3690, %v3687
    %v3736 = vpack.c.b16 %v3691, %v3688
    %v3737 = vpack.c.b16 %v3695, %v3692
    %v3738 = vpack.c.b16 %v3696, %v3693
    %v3739 = vpack.c.b16 %v3697, %v3694
    %v3740 = vpack.c.b16 %v3701, %v3698
    %v3741 = vpack.c.b16 %v3702, %v3699
    %v3742 = vpack.c.b16 %v3703, %v3700
    %v3743 = vpack.c.b16 %v3707, %v3704
    %v3744 = vpack.c.b16 %v3708, %v3705
    %v3745 = vpack.c.b16 %v3709, %v3706
    %v3746 = vpack.c.b16 %v3713, %v3710
    %v3747 = vpack.c.b16 %v3714, %v3711
    %v3748 = vpack.c.b16 %v3715, %v3712
    %v3749 = vpack.c.b16 %v3719, %v3716
    %v3750 = vpack.c.b16 %v3720, %v3717
    %v3751 = vpack.c.b16 %v3721, %v3718
    %v3752 = vpack.c.b16 %v3725, %v3722
    %v3753 = vpack.c.b16 %v3726, %v3723
    %v3754 = vpack.c.b16 %v3727, %v3724
    %v3755 = vpack.c.b16 %v3731, %v3728
    %v3756 = vpack.c.b16 %v3732, %v3729
    %v3757 = vpack.c.b16 %v3733, %v3730
    %3782 = vmatprep.subr.bf16.mxu0 %v3756
    %3783 = vmatpush1.bf16.msra.mxu0 %v3755
    %3784 = vmatprep.subr.bf16.mxu0 %v3753
    %3785 = vmatpush1.bf16.msra.mxu0 %v3752
    %3786 = vmatprep.subr.bf16.mxu0 %v3750
    %3787 = vmatpush1.bf16.msra.mxu0 %v3749
    %3788 = vmatprep.subr.bf16.mxu0 %v3747
    %3789 = vmatpush1.bf16.msra.mxu0 %v3746
    %3790 = vmatprep.subr.bf16.mxu0 %v3744
    %3791 = vmatpush1.bf16.msra.mxu0 %v3743
    %3792 = vmatprep.subr.bf16.mxu0 %v3741
    %3793 = vmatpush1.bf16.msra.mxu0 %v3740
    %3794 = vmatprep.subr.bf16.mxu0 %v3738
    %3795 = vmatpush1.bf16.msra.mxu0 %v3737
    %3796 = vmatprep.subr.bf16.mxu0 %v3735
    %3797 = vmatpush1.bf16.msra.mxu0 %v3734
    %3798 = vmatprep.subr.bf16.mxu0 0
    %3799 = vmatpush2.bf16.msra.mxu0 0
    %3800 = vmatprep.subr.bf16.mxu0 0
    %3801 = vmatpush2.bf16.msra.mxu0 0
    %3802 = vmatprep.subr.bf16.mxu0 0
    %3803 = vmatpush2.bf16.msra.mxu0 0
    %3804 = vmatprep.subr.bf16.mxu0 0
    %3805 = vmatpush2.bf16.msra.mxu0 0
    %3806 = vmatprep.subr.bf16.mxu0 0
    %3807 = vmatpush2.bf16.msra.mxu0 0
    %3808 = vmatprep.subr.bf16.mxu0 0
    %3809 = vmatpush2.bf16.msra.mxu0 0
    %3810 = vmatprep.subr.bf16.mxu0 0
    %3811 = vmatpush2.bf16.msra.mxu0 0
    %3812 = vmatprep.subr.bf16.mxu0 0
    %3813 = vmatpush2.bf16.msra.mxu0 0
    %3814 = vmatprep.mubr.bf16.mxu0 0
    %3815 = vmatmul.mubr.bf16.gmra.mxu0 %v3621
    %v3816 = vpop.f32.mrf.mxu0
    %v3817 = vadd.f32 0.0, %v3816
    %v3818 = vpop.f32.mrf.mxu0
    %v3819 = vadd.f32 0.0, %v3818
    %v3820 = vpop.f32.mrf.mxu0
    %v3821 = vpop.f32.mrf.mxu0
    %3822 = vdwg.mxu0
    %3823 = vmatprep.subr.bf16.mxu0 0
    %3824 = vmatpush1.bf16.msra.mxu0 %v3757
    %3825 = vmatprep.subr.bf16.mxu0 0
    %3826 = vmatpush1.bf16.msra.mxu0 %v3754
    %3827 = vmatprep.subr.bf16.mxu0 0
    %3828 = vmatpush1.bf16.msra.mxu0 %v3751
    %3829 = vmatprep.subr.bf16.mxu0 0
    %3830 = vmatpush1.bf16.msra.mxu0 %v3748
    %3831 = vmatprep.subr.bf16.mxu0 0
    %3832 = vmatpush1.bf16.msra.mxu0 %v3745
    %3833 = vmatprep.subr.bf16.mxu0 0
    %3834 = vmatpush1.bf16.msra.mxu0 %v3742
    %3835 = vmatprep.subr.bf16.mxu0 0
    %3836 = vmatpush1.bf16.msra.mxu0 %v3739
    %3837 = vmatprep.subr.bf16.mxu0 0
    %3838 = vmatpush1.bf16.msra.mxu0 %v3736
    %3839 = vmatprep.subr.bf16.mxu0 0
    %3840 = vmatpush2.bf16.msra.mxu0 0
    %3841 = vmatprep.subr.bf16.mxu0 0
    %3842 = vmatpush2.bf16.msra.mxu0 0
    %3843 = vmatprep.subr.bf16.mxu0 0
    %3844 = vmatpush2.bf16.msra.mxu0 0
    %3845 = vmatprep.subr.bf16.mxu0 0
    %3846 = vmatpush2.bf16.msra.mxu0 0
    %3847 = vmatprep.subr.bf16.mxu0 0
    %3848 = vmatpush2.bf16.msra.mxu0 0
    %3849 = vmatprep.subr.bf16.mxu0 0
    %3850 = vmatpush2.bf16.msra.mxu0 0
    %3851 = vmatprep.subr.bf16.mxu0 0
    %3852 = vmatpush2.bf16.msra.mxu0 0
    %3853 = vmatprep.subr.bf16.mxu0 0
    %3854 = vmatpush2.bf16.msra.mxu0 0
    %3855 = vmatprep.mubr.bf16.mxu0 0
    %3856 = vmatmul.mubr.bf16.gmra.mxu0 %v3621
    %v3857 = vpop.f32.mrf.mxu0
    %v3858 = vadd.f32 0.0, %v3857
    %v3859 = vpop.f32.mrf.mxu0
    %v3860 = vpop.f32.mrf.mxu0
    %v3861 = vpop.f32.mrf.mxu0
    %3862 = vdwg.mxu0
    %v3863 = vadd.f32 %v3618, %v3817
    %v3864 = vxor.u32 %v3863, 2147483648
    %v3865 = vmul.f32 %v3864, 1.442695
    %v3866 = vpow.pop %v3865
    %v3867 = vadd.f32 %v3866, 1.0
    %v3868 = vrcp.pop %v3867
    %v3869 = vmul.f32 1.0, %v3868
    %v3870 = vadd.f32 %v3619, %v3819
    %v3871 = vxor.u32 %v3870, 2147483648
    %v3872 = vmul.f32 %v3871, 1.442695
    %v3873 = vpow.pop %v3872
    %v3874 = vadd.f32 %v3873, 1.0
    %v3875 = vrcp.pop %v3874
    %v3876 = vmul.f32 1.0, %v3875
    %v3877 = vadd.f32 %v3858, %v107
    %v3878 = vmul.f32 %v3869, %v3877
    %v3879 = vadd.f32 %v3620, %v3878
    %v3880 = vtanh.pop %v3879
    %v3881 = vsub.f32 1.0, %v3876
    %v3882 = vmul.f32 %v3881, %v3880
    %v3883 = vmul.f32 %v3876, %v3344
    %v3884 = vadd.f32 %v3882, %v3883
    %s3885 = scalar_lea.vmem [#allocation12], 48
    %3886 = vst [vmem:[%s3885] sm:$0xff] %v3616
    %s3887 = scalar_lea.vmem [#allocation13], 8
    %3888 = vst [vmem:[%s3887] sm:$0xff] %v3884
    %s3889 = scalar_lea.vmem [#allocation4], 168
    %v3890 = vld [vmem:[%s3889] sm:$0xff]
    %v3891 = vld [vmem:[%s3889 + $0x8] sm:$0xff]
    %v3892 = vld [vmem:[%s3889 + $0x10] sm:$0xff]
    %v3893 = vpack.c.bf16 %v3616, %v3616
    %v3894 = vld [vmem:[#allocation9] sm:$0xff]
    %v3895 = vld [vmem:[#allocation9 + $0x8] sm:$0xf]
    %v3896 = vld [vmem:[#allocation9 + $0xc] sm:$0xff]
    %v3897 = vld [vmem:[#allocation9 + $0x14] sm:$0xf]
    %v3898 = vld [vmem:[#allocation9 + $0x18] sm:$0xff]
    %v3899 = vld [vmem:[#allocation9 + $0x20] sm:$0xf]
    %v3900 = vld [vmem:[#allocation9 + $0x24] sm:$0xff]
    %v3901 = vld [vmem:[#allocation9 + $0x2c] sm:$0xf]
    %v3902 = vld [vmem:[#allocation9 + $0x30] sm:$0xff]
    %v3903 = vld [vmem:[#allocation9 + $0x38] sm:$0xf]
    %v3904 = vld [vmem:[#allocation9 + $0x3c] sm:$0xff]
    %v3905 = vld [vmem:[#allocation9 + $0x44] sm:$0xf]
    %v3906 = vld [vmem:[#allocation9 + $0x48] sm:$0xff]
    %v3907 = vld [vmem:[#allocation9 + $0x50] sm:$0xf]
    %v3908 = vld [vmem:[#allocation9 + $0x54] sm:$0xff]
    %v3909 = vld [vmem:[#allocation9 + $0x5c] sm:$0xf]
    %v3910 = vld [vmem:[#allocation9 + $0x60] sm:$0xff]
    %v3911 = vld [vmem:[#allocation9 + $0x68] sm:$0xf]
    %v3912 = vld [vmem:[#allocation9 + $0x6c] sm:$0xff]
    %v3913 = vld [vmem:[#allocation9 + $0x74] sm:$0xf]
    %v3914 = vld [vmem:[#allocation9 + $0x78] sm:$0xff]
    %v3915 = vld [vmem:[#allocation9 + $0x80] sm:$0xf]
    %v3916 = vld [vmem:[#allocation9 + $0x84] sm:$0xff]
    %v3917 = vld [vmem:[#allocation9 + $0x8c] sm:$0xf]
    %v3918 = vld [vmem:[#allocation9 + $0x90] sm:$0xff]
    %v3919 = vld [vmem:[#allocation9 + $0x98] sm:$0xf]
    %v3920 = vld [vmem:[#allocation9 + $0x9c] sm:$0xff]
    %v3921 = vld [vmem:[#allocation9 + $0xa4] sm:$0xf]
    %v3922 = vld [vmem:[#allocation9 + $0xa8] sm:$0xff]
    %v3923 = vld [vmem:[#allocation9 + $0xb0] sm:$0xf]
    %v3924 = vld [vmem:[#allocation9 + $0xb4] sm:$0xff]
    %v3925 = vld [vmem:[#allocation9 + $0xbc] sm:$0xf]
    %v3958 = vunpack.c.l.b16 %v3894
    %v3959 = vunpack.c.h.b16 %v3894
    %v3960 = vunpack.c.l.b16 %v3895
    %v3961 = vunpack.c.l.b16 %v3896
    %v3962 = vunpack.c.h.b16 %v3896
    %v3963 = vunpack.c.l.b16 %v3897
    %v3964 = vunpack.c.l.b16 %v3898
    %v3965 = vunpack.c.h.b16 %v3898
    %v3966 = vunpack.c.l.b16 %v3899
    %v3967 = vunpack.c.l.b16 %v3900
    %v3968 = vunpack.c.h.b16 %v3900
    %v3969 = vunpack.c.l.b16 %v3901
    %v3970 = vunpack.c.l.b16 %v3902
    %v3971 = vunpack.c.h.b16 %v3902
    %v3972 = vunpack.c.l.b16 %v3903
    %v3973 = vunpack.c.l.b16 %v3904
    %v3974 = vunpack.c.h.b16 %v3904
    %v3975 = vunpack.c.l.b16 %v3905
    %v3976 = vunpack.c.l.b16 %v3906
    %v3977 = vunpack.c.h.b16 %v3906
    %v3978 = vunpack.c.l.b16 %v3907
    %v3979 = vunpack.c.l.b16 %v3908
    %v3980 = vunpack.c.h.b16 %v3908
    %v3981 = vunpack.c.l.b16 %v3909
    %v3982 = vunpack.c.l.b16 %v3910
    %v3983 = vunpack.c.h.b16 %v3910
    %v3984 = vunpack.c.l.b16 %v3911
    %v3985 = vunpack.c.l.b16 %v3912
    %v3986 = vunpack.c.h.b16 %v3912
    %v3987 = vunpack.c.l.b16 %v3913
    %v3988 = vunpack.c.l.b16 %v3914
    %v3989 = vunpack.c.h.b16 %v3914
    %v3990 = vunpack.c.l.b16 %v3915
    %v3991 = vunpack.c.l.b16 %v3916
    %v3992 = vunpack.c.h.b16 %v3916
    %v3993 = vunpack.c.l.b16 %v3917
    %v3994 = vunpack.c.l.b16 %v3918
    %v3995 = vunpack.c.h.b16 %v3918
    %v3996 = vunpack.c.l.b16 %v3919
    %v3997 = vunpack.c.l.b16 %v3920
    %v3998 = vunpack.c.h.b16 %v3920
    %v3999 = vunpack.c.l.b16 %v3921
    %v4000 = vunpack.c.l.b16 %v3922
    %v4001 = vunpack.c.h.b16 %v3922
    %v4002 = vunpack.c.l.b16 %v3923
    %v4003 = vunpack.c.l.b16 %v3924
    %v4004 = vunpack.c.h.b16 %v3924
    %v4005 = vunpack.c.l.b16 %v3925
    %v4006 = vpack.c.b16 %v3961, %v3958
    %v4007 = vpack.c.b16 %v3962, %v3959
    %v4008 = vpack.c.b16 %v3963, %v3960
    %v4009 = vpack.c.b16 %v3967, %v3964
    %v4010 = vpack.c.b16 %v3968, %v3965
    %v4011 = vpack.c.b16 %v3969, %v3966
    %v4012 = vpack.c.b16 %v3973, %v3970
    %v4013 = vpack.c.b16 %v3974, %v3971
    %v4014 = vpack.c.b16 %v3975, %v3972
    %v4015 = vpack.c.b16 %v3979, %v3976
    %v4016 = vpack.c.b16 %v3980, %v3977
    %v4017 = vpack.c.b16 %v3981, %v3978
    %v4018 = vpack.c.b16 %v3985, %v3982
    %v4019 = vpack.c.b16 %v3986, %v3983
    %v4020 = vpack.c.b16 %v3987, %v3984
    %v4021 = vpack.c.b16 %v3991, %v3988
    %v4022 = vpack.c.b16 %v3992, %v3989
    %v4023 = vpack.c.b16 %v3993, %v3990
    %v4024 = vpack.c.b16 %v3997, %v3994
    %v4025 = vpack.c.b16 %v3998, %v3995
    %v4026 = vpack.c.b16 %v3999, %v3996
    %v4027 = vpack.c.b16 %v4003, %v4000
    %v4028 = vpack.c.b16 %v4004, %v4001
    %v4029 = vpack.c.b16 %v4005, %v4002
    %4054 = vmatprep.subr.bf16.mxu0 %v4028
    %4055 = vmatpush1.bf16.msra.mxu0 %v4027
    %4056 = vmatprep.subr.bf16.mxu0 %v4025
    %4057 = vmatpush1.bf16.msra.mxu0 %v4024
    %4058 = vmatprep.subr.bf16.mxu0 %v4022
    %4059 = vmatpush1.bf16.msra.mxu0 %v4021
    %4060 = vmatprep.subr.bf16.mxu0 %v4019
    %4061 = vmatpush1.bf16.msra.mxu0 %v4018
    %4062 = vmatprep.subr.bf16.mxu0 %v4016
    %4063 = vmatpush1.bf16.msra.mxu0 %v4015
    %4064 = vmatprep.subr.bf16.mxu0 %v4013
    %4065 = vmatpush1.bf16.msra.mxu0 %v4012
    %4066 = vmatprep.subr.bf16.mxu0 %v4010
    %4067 = vmatpush1.bf16.msra.mxu0 %v4009
    %4068 = vmatprep.subr.bf16.mxu0 %v4007
    %4069 = vmatpush1.bf16.msra.mxu0 %v4006
    %4070 = vmatprep.subr.bf16.mxu0 0
    %4071 = vmatpush2.bf16.msra.mxu0 0
    %4072 = vmatprep.subr.bf16.mxu0 0
    %4073 = vmatpush2.bf16.msra.mxu0 0
    %4074 = vmatprep.subr.bf16.mxu0 0
    %4075 = vmatpush2.bf16.msra.mxu0 0
    %4076 = vmatprep.subr.bf16.mxu0 0
    %4077 = vmatpush2.bf16.msra.mxu0 0
    %4078 = vmatprep.subr.bf16.mxu0 0
    %4079 = vmatpush2.bf16.msra.mxu0 0
    %4080 = vmatprep.subr.bf16.mxu0 0
    %4081 = vmatpush2.bf16.msra.mxu0 0
    %4082 = vmatprep.subr.bf16.mxu0 0
    %4083 = vmatpush2.bf16.msra.mxu0 0
    %4084 = vmatprep.subr.bf16.mxu0 0
    %4085 = vmatpush2.bf16.msra.mxu0 0
    %4086 = vmatprep.mubr.bf16.mxu0 0
    %4087 = vmatmul.mubr.bf16.gmra.mxu0 %v3893
    %v4088 = vpop.f32.mrf.mxu0
    %v4089 = vadd.f32 0.0, %v4088
    %v4090 = vpop.f32.mrf.mxu0
    %v4091 = vadd.f32 0.0, %v4090
    %v4092 = vpop.f32.mrf.mxu0
    %v4093 = vpop.f32.mrf.mxu0
    %4094 = vdwg.mxu0
    %4095 = vmatprep.subr.bf16.mxu0 0
    %4096 = vmatpush1.bf16.msra.mxu0 %v4029
    %4097 = vmatprep.subr.bf16.mxu0 0
    %4098 = vmatpush1.bf16.msra.mxu0 %v4026
    %4099 = vmatprep.subr.bf16.mxu0 0
    %4100 = vmatpush1.bf16.msra.mxu0 %v4023
    %4101 = vmatprep.subr.bf16.mxu0 0
    %4102 = vmatpush1.bf16.msra.mxu0 %v4020
    %4103 = vmatprep.subr.bf16.mxu0 0
    %4104 = vmatpush1.bf16.msra.mxu0 %v4017
    %4105 = vmatprep.subr.bf16.mxu0 0
    %4106 = vmatpush1.bf16.msra.mxu0 %v4014
    %4107 = vmatprep.subr.bf16.mxu0 0
    %4108 = vmatpush1.bf16.msra.mxu0 %v4011
    %4109 = vmatprep.subr.bf16.mxu0 0
    %4110 = vmatpush1.bf16.msra.mxu0 %v4008
    %4111 = vmatprep.subr.bf16.mxu0 0
    %4112 = vmatpush2.bf16.msra.mxu0 0
    %4113 = vmatprep.subr.bf16.mxu0 0
    %4114 = vmatpush2.bf16.msra.mxu0 0
    %4115 = vmatprep.subr.bf16.mxu0 0
    %4116 = vmatpush2.bf16.msra.mxu0 0
    %4117 = vmatprep.subr.bf16.mxu0 0
    %4118 = vmatpush2.bf16.msra.mxu0 0
    %4119 = vmatprep.subr.bf16.mxu0 0
    %4120 = vmatpush2.bf16.msra.mxu0 0
    %4121 = vmatprep.subr.bf16.mxu0 0
    %4122 = vmatpush2.bf16.msra.mxu0 0
    %4123 = vmatprep.subr.bf16.mxu0 0
    %4124 = vmatpush2.bf16.msra.mxu0 0
    %4125 = vmatprep.subr.bf16.mxu0 0
    %4126 = vmatpush2.bf16.msra.mxu0 0
    %4127 = vmatprep.mubr.bf16.mxu0 0
    %4128 = vmatmul.mubr.bf16.gmra.mxu0 %v3893
    %v4129 = vpop.f32.mrf.mxu0
    %v4130 = vadd.f32 0.0, %v4129
    %v4131 = vpop.f32.mrf.mxu0
    %v4132 = vpop.f32.mrf.mxu0
    %v4133 = vpop.f32.mrf.mxu0
    %4134 = vdwg.mxu0
    %v4135 = vadd.f32 %v3890, %v4089
    %v4136 = vxor.u32 %v4135, 2147483648
    %v4137 = vmul.f32 %v4136, 1.442695
    %v4138 = vpow.pop %v4137
    %v4139 = vadd.f32 %v4138, 1.0
    %v4140 = vrcp.pop %v4139
    %v4141 = vmul.f32 1.0, %v4140
    %v4142 = vadd.f32 %v3891, %v4091
    %v4143 = vxor.u32 %v4142, 2147483648
    %v4144 = vmul.f32 %v4143, 1.442695
    %v4145 = vpow.pop %v4144
    %v4146 = vadd.f32 %v4145, 1.0
    %v4147 = vrcp.pop %v4146
    %v4148 = vmul.f32 1.0, %v4147
    %v4149 = vadd.f32 %v4130, %v100
    %v4150 = vmul.f32 %v4141, %v4149
    %v4151 = vadd.f32 %v3892, %v4150
    %v4152 = vtanh.pop %v4151
    %v4153 = vsub.f32 1.0, %v4148
    %v4154 = vmul.f32 %v4153, %v4152
    %v4155 = vmul.f32 %v4148, %v3616
    %v4156 = vadd.f32 %v4154, %v4155
    %v4157 = vld [vmem:[#allocation7] sm:$0xff]
    %v4158 = vld [vmem:[#allocation7 + $0x8] sm:$0xff]
    %v4159 = vld [vmem:[#allocation7 + $0x10] sm:$0xff]
    %v4160 = vpack.c.bf16 %v3884, %v3884
    %v4161 = vld [vmem:[#allocation10] sm:$0xff]
    %v4162 = vld [vmem:[#allocation10 + $0x8] sm:$0xf]
    %v4163 = vld [vmem:[#allocation10 + $0xc] sm:$0xff]
    %v4164 = vld [vmem:[#allocation10 + $0x14] sm:$0xf]
    %v4165 = vld [vmem:[#allocation10 + $0x18] sm:$0xff]
    %v4166 = vld [vmem:[#allocation10 + $0x20] sm:$0xf]
    %v4167 = vld [vmem:[#allocation10 + $0x24] sm:$0xff]
    %v4168 = vld [vmem:[#allocation10 + $0x2c] sm:$0xf]
    %v4169 = vld [vmem:[#allocation10 + $0x30] sm:$0xff]
    %v4170 = vld [vmem:[#allocation10 + $0x38] sm:$0xf]
    %v4171 = vld [vmem:[#allocation10 + $0x3c] sm:$0xff]
    %v4172 = vld [vmem:[#allocation10 + $0x44] sm:$0xf]
    %v4173 = vld [vmem:[#allocation10 + $0x48] sm:$0xff]
    %v4174 = vld [vmem:[#allocation10 + $0x50] sm:$0xf]
    %v4175 = vld [vmem:[#allocation10 + $0x54] sm:$0xff]
    %v4176 = vld [vmem:[#allocation10 + $0x5c] sm:$0xf]
    %v4177 = vld [vmem:[#allocation10 + $0x60] sm:$0xff]
    %v4178 = vld [vmem:[#allocation10 + $0x68] sm:$0xf]
    %v4179 = vld [vmem:[#allocation10 + $0x6c] sm:$0xff]
    %v4180 = vld [vmem:[#allocation10 + $0x74] sm:$0xf]
    %v4181 = vld [vmem:[#allocation10 + $0x78] sm:$0xff]
    %v4182 = vld [vmem:[#allocation10 + $0x80] sm:$0xf]
    %v4183 = vld [vmem:[#allocation10 + $0x84] sm:$0xff]
    %v4184 = vld [vmem:[#allocation10 + $0x8c] sm:$0xf]
    %v4185 = vld [vmem:[#allocation10 + $0x90] sm:$0xff]
    %v4186 = vld [vmem:[#allocation10 + $0x98] sm:$0xf]
    %v4187 = vld [vmem:[#allocation10 + $0x9c] sm:$0xff]
    %v4188 = vld [vmem:[#allocation10 + $0xa4] sm:$0xf]
    %v4189 = vld [vmem:[#allocation10 + $0xa8] sm:$0xff]
    %v4190 = vld [vmem:[#allocation10 + $0xb0] sm:$0xf]
    %v4191 = vld [vmem:[#allocation10 + $0xb4] sm:$0xff]
    %v4192 = vld [vmem:[#allocation10 + $0xbc] sm:$0xf]
    %v4225 = vunpack.c.l.b16 %v4161
    %v4226 = vunpack.c.h.b16 %v4161
    %v4227 = vunpack.c.l.b16 %v4162
    %v4228 = vunpack.c.l.b16 %v4163
    %v4229 = vunpack.c.h.b16 %v4163
    %v4230 = vunpack.c.l.b16 %v4164
    %v4231 = vunpack.c.l.b16 %v4165
    %v4232 = vunpack.c.h.b16 %v4165
    %v4233 = vunpack.c.l.b16 %v4166
    %v4234 = vunpack.c.l.b16 %v4167
    %v4235 = vunpack.c.h.b16 %v4167
    %v4236 = vunpack.c.l.b16 %v4168
    %v4237 = vunpack.c.l.b16 %v4169
    %v4238 = vunpack.c.h.b16 %v4169
    %v4239 = vunpack.c.l.b16 %v4170
    %v4240 = vunpack.c.l.b16 %v4171
    %v4241 = vunpack.c.h.b16 %v4171
    %v4242 = vunpack.c.l.b16 %v4172
    %v4243 = vunpack.c.l.b16 %v4173
    %v4244 = vunpack.c.h.b16 %v4173
    %v4245 = vunpack.c.l.b16 %v4174
    %v4246 = vunpack.c.l.b16 %v4175
    %v4247 = vunpack.c.h.b16 %v4175
    %v4248 = vunpack.c.l.b16 %v4176
    %v4249 = vunpack.c.l.b16 %v4177
    %v4250 = vunpack.c.h.b16 %v4177
    %v4251 = vunpack.c.l.b16 %v4178
    %v4252 = vunpack.c.l.b16 %v4179
    %v4253 = vunpack.c.h.b16 %v4179
    %v4254 = vunpack.c.l.b16 %v4180
    %v4255 = vunpack.c.l.b16 %v4181
    %v4256 = vunpack.c.h.b16 %v4181
    %v4257 = vunpack.c.l.b16 %v4182
    %v4258 = vunpack.c.l.b16 %v4183
    %v4259 = vunpack.c.h.b16 %v4183
    %v4260 = vunpack.c.l.b16 %v4184
    %v4261 = vunpack.c.l.b16 %v4185
    %v4262 = vunpack.c.h.b16 %v4185
    %v4263 = vunpack.c.l.b16 %v4186
    %v4264 = vunpack.c.l.b16 %v4187
    %v4265 = vunpack.c.h.b16 %v4187
    %v4266 = vunpack.c.l.b16 %v4188
    %v4267 = vunpack.c.l.b16 %v4189
    %v4268 = vunpack.c.h.b16 %v4189
    %v4269 = vunpack.c.l.b16 %v4190
    %v4270 = vunpack.c.l.b16 %v4191
    %v4271 = vunpack.c.h.b16 %v4191
    %v4272 = vunpack.c.l.b16 %v4192
    %v4273 = vpack.c.b16 %v4228, %v4225
    %v4274 = vpack.c.b16 %v4229, %v4226
    %v4275 = vpack.c.b16 %v4230, %v4227
    %v4276 = vpack.c.b16 %v4234, %v4231
    %v4277 = vpack.c.b16 %v4235, %v4232
    %v4278 = vpack.c.b16 %v4236, %v4233
    %v4279 = vpack.c.b16 %v4240, %v4237
    %v4280 = vpack.c.b16 %v4241, %v4238
    %v4281 = vpack.c.b16 %v4242, %v4239
    %v4282 = vpack.c.b16 %v4246, %v4243
    %v4283 = vpack.c.b16 %v4247, %v4244
    %v4284 = vpack.c.b16 %v4248, %v4245
    %v4285 = vpack.c.b16 %v4252, %v4249
    %v4286 = vpack.c.b16 %v4253, %v4250
    %v4287 = vpack.c.b16 %v4254, %v4251
    %v4288 = vpack.c.b16 %v4258, %v4255
    %v4289 = vpack.c.b16 %v4259, %v4256
    %v4290 = vpack.c.b16 %v4260, %v4257
    %v4291 = vpack.c.b16 %v4264, %v4261
    %v4292 = vpack.c.b16 %v4265, %v4262
    %v4293 = vpack.c.b16 %v4266, %v4263
    %v4294 = vpack.c.b16 %v4270, %v4267
    %v4295 = vpack.c.b16 %v4271, %v4268
    %v4296 = vpack.c.b16 %v4272, %v4269
    %4321 = vmatprep.subr.bf16.mxu0 %v4295
    %4322 = vmatpush1.bf16.msra.mxu0 %v4294
    %4323 = vmatprep.subr.bf16.mxu0 %v4292
    %4324 = vmatpush1.bf16.msra.mxu0 %v4291
    %4325 = vmatprep.subr.bf16.mxu0 %v4289
    %4326 = vmatpush1.bf16.msra.mxu0 %v4288
    %4327 = vmatprep.subr.bf16.mxu0 %v4286
    %4328 = vmatpush1.bf16.msra.mxu0 %v4285
    %4329 = vmatprep.subr.bf16.mxu0 %v4283
    %4330 = vmatpush1.bf16.msra.mxu0 %v4282
    %4331 = vmatprep.subr.bf16.mxu0 %v4280
    %4332 = vmatpush1.bf16.msra.mxu0 %v4279
    %4333 = vmatprep.subr.bf16.mxu0 %v4277
    %4334 = vmatpush1.bf16.msra.mxu0 %v4276
    %4335 = vmatprep.subr.bf16.mxu0 %v4274
    %4336 = vmatpush1.bf16.msra.mxu0 %v4273
    %4337 = vmatprep.subr.bf16.mxu0 0
    %4338 = vmatpush2.bf16.msra.mxu0 0
    %4339 = vmatprep.subr.bf16.mxu0 0
    %4340 = vmatpush2.bf16.msra.mxu0 0
    %4341 = vmatprep.subr.bf16.mxu0 0
    %4342 = vmatpush2.bf16.msra.mxu0 0
    %4343 = vmatprep.subr.bf16.mxu0 0
    %4344 = vmatpush2.bf16.msra.mxu0 0
    %4345 = vmatprep.subr.bf16.mxu0 0
    %4346 = vmatpush2.bf16.msra.mxu0 0
    %4347 = vmatprep.subr.bf16.mxu0 0
    %4348 = vmatpush2.bf16.msra.mxu0 0
    %4349 = vmatprep.subr.bf16.mxu0 0
    %4350 = vmatpush2.bf16.msra.mxu0 0
    %4351 = vmatprep.subr.bf16.mxu0 0
    %4352 = vmatpush2.bf16.msra.mxu0 0
    %4353 = vmatprep.mubr.bf16.mxu0 0
    %4354 = vmatmul.mubr.bf16.gmra.mxu0 %v4160
    %v4355 = vpop.f32.mrf.mxu0
    %v4356 = vadd.f32 0.0, %v4355
    %v4357 = vpop.f32.mrf.mxu0
    %v4358 = vadd.f32 0.0, %v4357
    %v4359 = vpop.f32.mrf.mxu0
    %v4360 = vpop.f32.mrf.mxu0
    %4361 = vdwg.mxu0
    %4362 = vmatprep.subr.bf16.mxu0 0
    %4363 = vmatpush1.bf16.msra.mxu0 %v4296
    %4364 = vmatprep.subr.bf16.mxu0 0
    %4365 = vmatpush1.bf16.msra.mxu0 %v4293
    %4366 = vmatprep.subr.bf16.mxu0 0
    %4367 = vmatpush1.bf16.msra.mxu0 %v4290
    %4368 = vmatprep.subr.bf16.mxu0 0
    %4369 = vmatpush1.bf16.msra.mxu0 %v4287
    %4370 = vmatprep.subr.bf16.mxu0 0
    %4371 = vmatpush1.bf16.msra.mxu0 %v4284
    %4372 = vmatprep.subr.bf16.mxu0 0
    %4373 = vmatpush1.bf16.msra.mxu0 %v4281
    %4374 = vmatprep.subr.bf16.mxu0 0
    %4375 = vmatpush1.bf16.msra.mxu0 %v4278
    %4376 = vmatprep.subr.bf16.mxu0 0
    %4377 = vmatpush1.bf16.msra.mxu0 %v4275
    %4378 = vmatprep.subr.bf16.mxu0 0
    %4379 = vmatpush2.bf16.msra.mxu0 0
    %4380 = vmatprep.subr.bf16.mxu0 0
    %4381 = vmatpush2.bf16.msra.mxu0 0
    %4382 = vmatprep.subr.bf16.mxu0 0
    %4383 = vmatpush2.bf16.msra.mxu0 0
    %4384 = vmatprep.subr.bf16.mxu0 0
    %4385 = vmatpush2.bf16.msra.mxu0 0
    %4386 = vmatprep.subr.bf16.mxu0 0
    %4387 = vmatpush2.bf16.msra.mxu0 0
    %4388 = vmatprep.subr.bf16.mxu0 0
    %4389 = vmatpush2.bf16.msra.mxu0 0
    %4390 = vmatprep.subr.bf16.mxu0 0
    %4391 = vmatpush2.bf16.msra.mxu0 0
    %4392 = vmatprep.subr.bf16.mxu0 0
    %4393 = vmatpush2.bf16.msra.mxu0 0
    %4394 = vmatprep.mubr.bf16.mxu0 0
    %4395 = vmatmul.mubr.bf16.gmra.mxu0 %v4160
    %v4396 = vpop.f32.mrf.mxu0
    %v4397 = vadd.f32 0.0, %v4396
    %v4398 = vpop.f32.mrf.mxu0
    %v4399 = vpop.f32.mrf.mxu0
    %v4400 = vpop.f32.mrf.mxu0
    %4401 = vdwg.mxu0
    %v4402 = vadd.f32 %v4157, %v4356
    %v4403 = vxor.u32 %v4402, 2147483648
    %v4404 = vmul.f32 %v4403, 1.442695
    %v4405 = vpow.pop %v4404
    %v4406 = vadd.f32 %v4405, 1.0
    %v4407 = vrcp.pop %v4406
    %v4408 = vmul.f32 1.0, %v4407
    %v4409 = vadd.f32 %v4158, %v4358
    %v4410 = vxor.u32 %v4409, 2147483648
    %v4411 = vmul.f32 %v4410, 1.442695
    %v4412 = vpow.pop %v4411
    %v4413 = vadd.f32 %v4412, 1.0
    %v4414 = vrcp.pop %v4413
    %v4415 = vmul.f32 1.0, %v4414
    %v4416 = vadd.f32 %v4397, %v107
    %v4417 = vmul.f32 %v4408, %v4416
    %v4418 = vadd.f32 %v4159, %v4417
    %v4419 = vtanh.pop %v4418
    %v4420 = vsub.f32 1.0, %v4415
    %v4421 = vmul.f32 %v4420, %v4419
    %v4422 = vmul.f32 %v4415, %v3884
    %v4423 = vadd.f32 %v4421, %v4422
    %s4424 = scalar_lea.vmem [#allocation12], 56
    %4425 = vst [vmem:[%s4424] sm:$0xff] %v4156
    %4426 = vst [vmem:[#allocation13] sm:$0xff] %v4423
    %4427 = vst [vmem:[#allocation2] sm:$0xff] %v4156
    %4428 = vst [vmem:[#allocation3] sm:$0xff] %v4423
    // Predicated region
    $region42: #{tpu_custom_call.1} parent=1 // pred_check
      _
    $region43: #{tpu_custom_call.1} parent=1 // pred_check_branch
      %4430 = sbr.rel (0) target = $region45
    $region44: #{tpu_custom_call.1} parent=1 // pred_region
      %s4432 = ssub.s32 1024, 1024
      %4433 = vsyncadd [#allocation6], %s4432
      %s4434 = sshll.u32 [#allocation12], 4
      %s4435 = int_to_ptr.vmem [resolvable:$true] %s4434
      %4440 = dma.vmem_to_hbm [thread:$0]  %s4435, 1024, %s5, [#allocation6], 128, 128, 8
    $region45: #{tpu_custom_call.1} parent=1 // pred_fallthru
      _
    // Predicated region
    $region46: #{tpu_custom_call.1} parent=1 // pred_check
      _
    $region47: #{tpu_custom_call.1} parent=1 // pred_check_branch
      %4442 = sbr.rel (0) target = $region49
    $region48: #{tpu_custom_call.1} parent=1 // pred_region
      %s4443 = ssub.s32 0, 0
      %s4444 = smul.u32 8, %s4443
      %s4446 = ssub.s32 1024, 1024
      %4447 = vsyncadd [#allocation14], %s4446
      %s4448 = smul.addr %s4444, 128
      %s4449 = scalar_lea.hbm %s6, %s4448
      %s4450 = sshll.u32 [#allocation13], 4
      %s4451 = int_to_ptr.vmem [resolvable:$true] %s4450
      %4456 = dma.vmem_to_hbm [thread:$0]  %s4451, 1024, %s4449, [#allocation14], 128, 128, 8
    $region49: #{tpu_custom_call.1} parent=1 // pred_fallthru
      _
    // Predicated region
    $region50: #{tpu_custom_call.1} parent=1 // pred_check
      _
    $region51: #{tpu_custom_call.1} parent=1 // pred_check_branch
      %4458 = sbr.rel (0) target = $region53
    $region52: #{tpu_custom_call.1} parent=1 // pred_region
      %4459 = dma.done [#allocation6], 1024
    $region53: #{tpu_custom_call.1} parent=1 // pred_fallthru
      _
    // Predicated region
    $region54: #{tpu_custom_call.1} parent=1 // pred_check
      _
    $region55: #{tpu_custom_call.1} parent=1 // pred_check_branch
      %4461 = sbr.rel (0) target = $region57
    $region56: #{tpu_custom_call.1} parent=1 // pred_region
      %4462 = dma.done [#allocation14], 1024
    $region57: #{tpu_custom_call.1} parent=1 // pred_fallthru
      _
    %4463 = vsyncpa [#allocation5], 1
    %4464 = vsyncpa [#allocation8], 1
    %4465 = vsyncpa [#allocation11], 1
    %4466 = vsyncpa [#allocation6], 1
    %4467 = vsyncpa [#allocation14], 1

</llo_original>
